<compile_context>
chip_gen: v7x
topology: tpu7x:2x2x1
jax: 0.10.0
libtpu: 0.0.40
codegen_flags: <defaults>
</compile_context>

<pallas_src>
import jax
import jax.numpy as jnp
import numpy as np
from jax.experimental import pallas as pl
from jax.experimental.pallas import tpu as pltpu

# Keep the plain-JAX reference matmuls at full f32 precision so the comparison
# against the kernel is apples-to-apples.
jax.config.update("jax_default_matmul_precision", "highest")

LANE = 128
NUM_CELLS = 3


def ftm_kernel(s_ref, t_ref, wp_ref, wt_ref, b_ref, g_ref, o_ref):
    """All FaceTransferBlocks at once, lane-packed.

    Shapes (NFp = round_up(N*F, 128)):
      s_ref, t_ref : [B, NFp]          block b lives at lanes [b*F, (b+1)*F)
      wp_ref       : [3, NFp, 2*NFp]   block-diagonal p-side weights, cols = [K1 | K2]
      wt_ref       : [NFp, 6*NFp]      block-diagonal t-side weights, cell-major cols
      b_ref        : [1, 6*NFp]        biases, same column order as wt
      g_ref        : [1, NFp]          per-block gate parameters
      o_ref        : [B, NFp]
    """
    nfp = s_ref.shape[1]
    s = s_ref[...]
    t = t_ref[...]

    # Hoisted t-side contribution + biases for all 3 cells: [B, 6*NFp].
    tz = jnp.dot(t, wt_ref[...], preferred_element_type=jnp.float32) + b_ref[...]

    p = s                                           # running "processed_features"
    for c in range(NUM_CELLS):                      # static unroll, 1 matmul per cell
        z = jnp.dot(p, wp_ref[c], preferred_element_type=jnp.float32) \
            + tz[:, 2 * c * nfp:(2 * c + 2) * nfp]  # 128-aligned whole-vreg slice
        z1 = z[:, :nfp]                             # K1 outputs (lane offset 0)
        z2 = z[:, nfp:]                             # K2 outputs (next 128 boundary)
        p = jnp.tanh(z2) + jax.nn.sigmoid(z1) * p

    gate = jax.nn.sigmoid(g_ref[...])               # [1, NFp], broadcasts over B
    o_ref[...] = (gate * p + (1.0 - gate) * s).astype(o_ref.dtype)


def pack_params(weights, biases, gates, lane=LANE):
    """One-time (model-load) repacking into lane-packed, block-diagonal layout.

    weights: [N, 6, 2F, F] in x@W form (index 2c = K1, 2c+1 = K2); rows [0:F] are
             the p-half, rows [F:2F] the t-half (cc = concat([p, t], axis=1)).
    biases : [N, 6, F]
    gates  : [N, F]
    """
    weights = np.asarray(weights, np.float32)
    biases = np.asarray(biases, np.float32)
    gates = np.asarray(gates, np.float32)
    N, six, twoF, F = weights.shape
    assert six == 2 * NUM_CELLS and twoF == 2 * F
    nf = N * F
    nfp = ((nf + lane - 1) // lane) * lane

    wp = np.zeros((NUM_CELLS, nfp, 2 * nfp), np.float32)
    wt = np.zeros((nfp, 6 * nfp), np.float32)
    bb = np.zeros((1, 6 * nfp), np.float32)
    gg = np.zeros((1, nfp), np.float32)

    for c in range(NUM_CELLS):
        base = 2 * c * nfp
        for b in range(N):
            rows = slice(b * F, (b + 1) * F)
            cols = slice(b * F, (b + 1) * F)
            cols2 = slice(nfp + b * F, nfp + (b + 1) * F)
            # p-side halves (block-diagonal), fused [K1 | K2] with 128-lane alignment.
            wp[c, rows, cols] = weights[b, 2 * c, :F, :]
            wp[c, rows, cols2] = weights[b, 2 * c + 1, :F, :]
            # t-side halves, cell-major columns, same [K1 | K2] alignment per cell.
            wt[rows, base + b * F:base + (b + 1) * F] = weights[b, 2 * c, F:, :]
            wt[rows, base + nfp + b * F:base + nfp + (b + 1) * F] = \
                weights[b, 2 * c + 1, F:, :]
            bb[0, base + b * F:base + (b + 1) * F] = biases[b, 2 * c]
            bb[0, base + nfp + b * F:base + nfp + (b + 1) * F] = biases[b, 2 * c + 1]
    for b in range(N):
        gg[0, b * F:(b + 1) * F] = gates[b]

    return (jnp.asarray(wp), jnp.asarray(wt), jnp.asarray(bb), jnp.asarray(gg))


@jax.jit
def face_transfer_forward(source, target, wp, wt, bb, gg):
    """source/target: [N, B, F]; packed params from pack_params(). Returns [N, B, F]."""
    N, B, F = source.shape
    nfp = gg.shape[1]
    nf = N * F

    # Pack activations into the lane dimension: [N,B,F] -> [B, N*F] -> pad to [B, NFp].
    s = jnp.transpose(source, (1, 0, 2)).reshape(B, nf)
    t = jnp.transpose(target, (1, 0, 2)).reshape(B, nf)
    if nfp > nf:
        s = jnp.pad(s, ((0, 0), (0, nfp - nf)))
        t = jnp.pad(t, ((0, 0), (0, nfp - nf)))

    out = pl.pallas_call(
        ftm_kernel,
        out_shape=jax.ShapeDtypeStruct((B, nfp), source.dtype),
        in_specs=[pl.BlockSpec(memory_space=pltpu.MemorySpace.VMEM)] * 6,
        out_specs=pl.BlockSpec(memory_space=pltpu.MemorySpace.VMEM),
    )(s, t, wp, wt, bb, gg)

    # Undo the lane packing: [B, NFp] -> [N, B, F].
    return out[:, :nf].reshape(B, N, F).transpose(1, 0, 2)


def reference_forward(source, target, weights, biases, gates):
    """Plain-JAX re-statement of the PyTorch forward, for verification."""
    outs = []
    for i in range(source.shape[0]):
        s = source[i]
        t = target[i]
        p = s
        for c in range(NUM_CELLS):
            cc = jnp.concatenate([p, t], axis=1)
            z1 = cc @ weights[i, 2 * c] + biases[i, 2 * c]
            z2 = cc @ weights[i, 2 * c + 1] + biases[i, 2 * c + 1]
            p = jnp.tanh(z2) + jax.nn.sigmoid(z1) * p
        g = jax.nn.sigmoid(gates[i])
        outs.append(g * p + (1.0 - g) * s)
    return jnp.stack(outs)


if __name__ == "__main__":
    # Small shapes consistent with the module.
    N = 3          # num_blocks (== len(source_features) == len(target_features))
    B = 4          # batch per block
    F = 32         # feature_size

    key = jax.random.PRNGKey(0)
    ks = jax.random.split(key, 5)

    source = jax.random.normal(ks[0], (N, B, F), dtype=jnp.float32)
    target = jax.random.normal(ks[1], (N, B, F), dtype=jnp.float32)

    # Synthetic parameters: 6 x Linear(2F, F) per block stored in x@W form
    # (transpose upstream if loading from PyTorch's [F, 2F] nn.Linear weights),
    # plus the per-block nn.Parameter(torch.rand(F)) gate weight.
    weights = jax.random.normal(ks[2], (N, 6, 2 * F, F), dtype=jnp.float32) * 0.1
    biases = jax.random.normal(ks[3], (N, 6, F), dtype=jnp.float32) * 0.1
    gates = jax.random.uniform(ks[4], (N, F), dtype=jnp.float32)

    # One-time (model-load) parameter repacking, hoisted out of the forward path.
    wp, wt, bb, gg = pack_params(weights, biases, gates)

    out = jax.block_until_ready(
        face_transfer_forward(source, target, wp, wt, bb, gg))

    ref = jax.block_until_ready(
        reference_forward(source, target, weights, biases, gates))

    # Tolerance allows for MXU summation-order / precision-path differences between
    # the packed block-diagonal matmuls and the reference; packing bugs would be O(1).
    np.testing.assert_allclose(np.asarray(out), np.asarray(ref), rtol=5e-3, atol=5e-3)
    print("KERNEL_OK")
</pallas_src>

<mosaic_0001>
module attributes {stable_mosaic.version = 11 : i64} {
  func.func @ftm_kernel(%arg0: memref<4x128xf32, #tpu.memory_space<vmem>>, %arg1: memref<4x128xf32, #tpu.memory_space<vmem>>, %arg2: memref<3x128x256xf32, #tpu.memory_space<vmem>>, %arg3: memref<128x768xf32, #tpu.memory_space<vmem>>, %arg4: memref<1x768xf32, #tpu.memory_space<vmem>>, %arg5: memref<1x128xf32, #tpu.memory_space<vmem>>, %arg6: memref<4x128xf32, #tpu.memory_space<vmem>>) attributes {dimension_semantics = [], scalar_prefetch = 0 : i64, scratch_operands = 0 : i64, tpu.core_type = #tpu.core_type<tc>} {
    %c0 = arith.constant 0 : index
    %c0_0 = arith.constant 0 : index
    %0 = vector.load %arg0[%c0, %c0_0] : memref<4x128xf32, #tpu.memory_space<vmem>>, vector<4x128xf32>
    %c0_1 = arith.constant 0 : index
    %c0_2 = arith.constant 0 : index
    %1 = vector.load %arg1[%c0_1, %c0_2] : memref<4x128xf32, #tpu.memory_space<vmem>>, vector<4x128xf32>
    %c0_3 = arith.constant 0 : index
    %c0_4 = arith.constant 0 : index
    %2 = vector.load %arg3[%c0_3, %c0_4] : memref<128x768xf32, #tpu.memory_space<vmem>>, vector<128x768xf32>
    %cst = arith.constant dense<0.000000e+00> : vector<4x768xf32>
    %3 = tpu.matmul %1, %2, %cst {dimension_numbers = #tpu.dot_dimension_numbers<[1], [0], [0], [1], [0, 0, 1, 1], [], []>, precision = #tpu.contract_precision<fp32>} : vector<4x128xf32>, vector<128x768xf32>, vector<4x768xf32> -> vector<4x768xf32>
    %c0_5 = arith.constant 0 : index
    %c0_6 = arith.constant 0 : index
    %4 = vector.load %arg4[%c0_5, %c0_6] : memref<1x768xf32, #tpu.memory_space<vmem>>, vector<1x768xf32>
    %5 = vector.broadcast %4 : vector<1x768xf32> to vector<4x768xf32>
    %6 = arith.addf %3, %5 : vector<4x768xf32>
    %c0_7 = arith.constant 0 : index
    %c0_8 = arith.constant 0 : index
    %c0_9 = arith.constant 0 : index
    %7 = vector.load %arg2[%c0_7, %c0_8, %c0_9] : memref<3x128x256xf32, #tpu.memory_space<vmem>>, vector<1x128x256xf32>
    %8 = vector.shape_cast %7 : vector<1x128x256xf32> to vector<128x256xf32>
    %cst_10 = arith.constant dense<0.000000e+00> : vector<4x256xf32>
    %9 = tpu.matmul %0, %8, %cst_10 {dimension_numbers = #tpu.dot_dimension_numbers<[1], [0], [0], [1], [0, 0, 1, 1], [], []>, precision = #tpu.contract_precision<fp32>} : vector<4x128xf32>, vector<128x256xf32>, vector<4x256xf32> -> vector<4x256xf32>
    %10 = vector.extract_strided_slice %6 {offsets = [0, 0], sizes = [4, 256], strides = [1, 1]} : vector<4x768xf32> to vector<4x256xf32>
    %11 = arith.addf %9, %10 : vector<4x256xf32>
    %12 = vector.extract_strided_slice %11 {offsets = [0, 0], sizes = [4, 128], strides = [1, 1]} : vector<4x256xf32> to vector<4x128xf32>
    %13 = vector.extract_strided_slice %11 {offsets = [0, 128], sizes = [4, 128], strides = [1, 1]} : vector<4x256xf32> to vector<4x128xf32>
    %14 = math.tanh %13 : vector<4x128xf32>
    %15 = arith.negf %12 : vector<4x128xf32>
    %16 = math.exp %15 : vector<4x128xf32>
    %cst_11 = arith.constant 1.000000e+00 : f32
    %17 = vector.broadcast %cst_11 : f32 to vector<4x128xf32>
    %18 = arith.addf %17, %16 : vector<4x128xf32>
    %19 = arith.divf %17, %18 : vector<4x128xf32>
    %20 = arith.mulf %19, %0 : vector<4x128xf32>
    %21 = arith.addf %14, %20 : vector<4x128xf32>
    %c1 = arith.constant 1 : index
    %c0_12 = arith.constant 0 : index
    %c0_13 = arith.constant 0 : index
    %22 = vector.load %arg2[%c1, %c0_12, %c0_13] : memref<3x128x256xf32, #tpu.memory_space<vmem>>, vector<1x128x256xf32>
    %23 = vector.shape_cast %22 : vector<1x128x256xf32> to vector<128x256xf32>
    %cst_14 = arith.constant dense<0.000000e+00> : vector<4x256xf32>
    %24 = tpu.matmul %21, %23, %cst_14 {dimension_numbers = #tpu.dot_dimension_numbers<[1], [0], [0], [1], [0, 0, 1, 1], [], []>, precision = #tpu.contract_precision<fp32>} : vector<4x128xf32>, vector<128x256xf32>, vector<4x256xf32> -> vector<4x256xf32>
    %25 = vector.extract_strided_slice %6 {offsets = [0, 256], sizes = [4, 256], strides = [1, 1]} : vector<4x768xf32> to vector<4x256xf32>
    %26 = arith.addf %24, %25 : vector<4x256xf32>
    %27 = vector.extract_strided_slice %26 {offsets = [0, 0], sizes = [4, 128], strides = [1, 1]} : vector<4x256xf32> to vector<4x128xf32>
    %28 = vector.extract_strided_slice %26 {offsets = [0, 128], sizes = [4, 128], strides = [1, 1]} : vector<4x256xf32> to vector<4x128xf32>
    %29 = math.tanh %28 : vector<4x128xf32>
    %30 = arith.negf %27 : vector<4x128xf32>
    %31 = math.exp %30 : vector<4x128xf32>
    %cst_15 = arith.constant 1.000000e+00 : f32
    %32 = vector.broadcast %cst_15 : f32 to vector<4x128xf32>
    %33 = arith.addf %32, %31 : vector<4x128xf32>
    %34 = arith.divf %32, %33 : vector<4x128xf32>
    %35 = arith.mulf %34, %21 : vector<4x128xf32>
    %36 = arith.addf %29, %35 : vector<4x128xf32>
    %c2 = arith.constant 2 : index
    %c0_16 = arith.constant 0 : index
    %c0_17 = arith.constant 0 : index
    %37 = vector.load %arg2[%c2, %c0_16, %c0_17] : memref<3x128x256xf32, #tpu.memory_space<vmem>>, vector<1x128x256xf32>
    %38 = vector.shape_cast %37 : vector<1x128x256xf32> to vector<128x256xf32>
    %cst_18 = arith.constant dense<0.000000e+00> : vector<4x256xf32>
    %39 = tpu.matmul %36, %38, %cst_18 {dimension_numbers = #tpu.dot_dimension_numbers<[1], [0], [0], [1], [0, 0, 1, 1], [], []>, precision = #tpu.contract_precision<fp32>} : vector<4x128xf32>, vector<128x256xf32>, vector<4x256xf32> -> vector<4x256xf32>
    %40 = vector.extract_strided_slice %6 {offsets = [0, 512], sizes = [4, 256], strides = [1, 1]} : vector<4x768xf32> to vector<4x256xf32>
    %41 = arith.addf %39, %40 : vector<4x256xf32>
    %42 = vector.extract_strided_slice %41 {offsets = [0, 0], sizes = [4, 128], strides = [1, 1]} : vector<4x256xf32> to vector<4x128xf32>
    %43 = vector.extract_strided_slice %41 {offsets = [0, 128], sizes = [4, 128], strides = [1, 1]} : vector<4x256xf32> to vector<4x128xf32>
    %44 = math.tanh %43 : vector<4x128xf32>
    %45 = arith.negf %42 : vector<4x128xf32>
    %46 = math.exp %45 : vector<4x128xf32>
    %cst_19 = arith.constant 1.000000e+00 : f32
    %47 = vector.broadcast %cst_19 : f32 to vector<4x128xf32>
    %48 = arith.addf %47, %46 : vector<4x128xf32>
    %49 = arith.divf %47, %48 : vector<4x128xf32>
    %50 = arith.mulf %49, %36 : vector<4x128xf32>
    %51 = arith.addf %44, %50 : vector<4x128xf32>
    %c0_20 = arith.constant 0 : index
    %c0_21 = arith.constant 0 : index
    %52 = vector.load %arg5[%c0_20, %c0_21] : memref<1x128xf32, #tpu.memory_space<vmem>>, vector<1x128xf32>
    %53 = arith.negf %52 : vector<1x128xf32>
    %54 = math.exp %53 : vector<1x128xf32>
    %cst_22 = arith.constant 1.000000e+00 : f32
    %55 = vector.broadcast %cst_22 : f32 to vector<1x128xf32>
    %56 = arith.addf %55, %54 : vector<1x128xf32>
    %57 = arith.divf %55, %56 : vector<1x128xf32>
    %58 = vector.broadcast %57 : vector<1x128xf32> to vector<4x128xf32>
    %59 = arith.mulf %58, %51 : vector<4x128xf32>
    %cst_23 = arith.constant 1.000000e+00 : f32
    %60 = vector.broadcast %cst_23 : f32 to vector<1x128xf32>
    %61 = arith.subf %60, %57 : vector<1x128xf32>
    %62 = vector.broadcast %61 : vector<1x128xf32> to vector<4x128xf32>
    %63 = arith.mulf %62, %0 : vector<4x128xf32>
    %64 = arith.addf %59, %63 : vector<4x128xf32>
    %c0_24 = arith.constant 0 : index
    %c0_25 = arith.constant 0 : index
    %65 = vector.load %arg6[%c0_24, %c0_25] : memref<4x128xf32, #tpu.memory_space<vmem>>, vector<4x128xf32>
    tpu.vector_store %arg6[%c0_24, %c0_25], %64 {strides = array<i32>} : memref<4x128xf32, #tpu.memory_space<vmem>>, vector<4x128xf32>,
    return
  }
}

</mosaic_0001>

<llo_original>
// kernel: face_transfer_forward.1
$region0: #{face_transfer_forward.1}
  #allocation0 [shape = 'u32[]', space=smem, size = 0x4, offset = 0x4, fixed_abs, tag = 'smem constant byte address 0x4 - core index']
  #allocation1 [shape = 'u32[144,128]{1,0:T(1,128)}', space=vmem, size = 0x12000, scoped, tag = 'internal scratch']
  %s0 = inlined_call_operand.vmem [shape: f32[4,128], index: 0, kind: input, shape index: {}]
  %s1 = inlined_call_operand.vmem [shape: f32[4,128], index: 1, kind: input, shape index: {}]
  %s2 = inlined_call_operand.hbm [shape: f32[3,128,256], index: 2, kind: input, shape index: {}]
  %s3 = inlined_call_operand.hbm [shape: f32[128,768], index: 3, kind: input, shape index: {}]
  %s4 = inlined_call_operand.vmem [shape: f32[1,768], index: 4, kind: input, shape index: {}]
  %s5 = inlined_call_operand.vmem [shape: f32[1,128], index: 5, kind: input, shape index: {}]
  %s6 = inlined_call_operand.vmem [shape: f32[4,128], index: 6, kind: output, shape index: {}]
  %s7 = sld [smem:[#allocation0]]
  $region42: #{face_transfer_forward.1} parent=0
    _
  %s9 = ssub.s32 1, %s7
  %s10 = scalar_select 0, %s9, %s7
  $region1: #{face_transfer_forward.1} parent=0
    #allocation2 [shape = 'u8[393216]{0}', space=vmem, size = 0x60000, scoped, tag = 'input window, operand 2, single buffered']
    #allocation3 [shape = 's32[1]{0}', space=sflag, size = 0x4, scoped, tag = 'scoped memory for face_transfer_forward.1']
    #allocation4 [shape = 'u8[393216]{0}', space=vmem, size = 0x60000, scoped, tag = 'input window, operand 3, single buffered']
    #allocation5 [shape = 's32[1]{0}', space=sflag, size = 0x4, scoped, tag = 'scoped memory for face_transfer_forward.1']
    %11 = vsyncpa [#allocation3], 0
    %12 = vsyncpa [#allocation5], 0
    // Predicated region
    $region2: #{face_transfer_forward.1} parent=1 // pred_check
      _
    $region3: #{face_transfer_forward.1} parent=1 // pred_check_branch
      %14 = sbr.rel (0) target = $region5
    $region4: #{face_transfer_forward.1} parent=1 // pred_region
      _
    $region5: #{face_transfer_forward.1} parent=1 // pred_fallthru
      _
    // Predicated region
    $region6: #{face_transfer_forward.1} parent=1 // pred_check
      _
    $region7: #{face_transfer_forward.1} parent=1 // pred_check_branch
      %16 = sbr.rel (0) target = $region9
    $region8: #{face_transfer_forward.1} parent=1 // pred_region
      _
    $region9: #{face_transfer_forward.1} parent=1 // pred_fallthru
      _
    // Predicated region
    $region10: #{face_transfer_forward.1} parent=1 // pred_check
      _
    $region11: #{face_transfer_forward.1} parent=1 // pred_check_branch
      %18 = sbr.rel (0) target = $region13
    $region12: #{face_transfer_forward.1} parent=1 // pred_region
      %s20 = ssub.s32 12288, 12288
      %21 = vsyncadd [#allocation3], %s20
      %s22 = sshll.u32 [#allocation2], 4
      %s23 = int_to_ptr.vmem [resolvable:$true] %s22
      %28 = dma.hbm_to_vmem [thread:$0]  %s2, 12288, %s23, [#allocation3], 256, 256, 16
    $region13: #{face_transfer_forward.1} parent=1 // pred_fallthru
      _
    // Predicated region
    $region14: #{face_transfer_forward.1} parent=1 // pred_check
      _
    $region15: #{face_transfer_forward.1} parent=1 // pred_check_branch
      %30 = sbr.rel (0) target = $region17
    $region16: #{face_transfer_forward.1} parent=1 // pred_region
      %s32 = ssub.s32 12288, 12288
      %33 = vsyncadd [#allocation5], %s32
      %s34 = sshll.u32 [#allocation4], 4
      %s35 = int_to_ptr.vmem [resolvable:$true] %s34
      %40 = dma.hbm_to_vmem [thread:$0]  %s3, 12288, %s35, [#allocation5], 768, 768, 48
    $region17: #{face_transfer_forward.1} parent=1 // pred_fallthru
      _
    // Predicated region
    $region18: #{face_transfer_forward.1} parent=1 // pred_check
      _
    $region19: #{face_transfer_forward.1} parent=1 // pred_check_branch
      %42 = sbr.rel (0) target = $region21
    $region20: #{face_transfer_forward.1} parent=1 // pred_region
      _
    $region21: #{face_transfer_forward.1} parent=1 // pred_fallthru
      _
    // Predicated region
    $region22: #{face_transfer_forward.1} parent=1 // pred_check
      _
    $region23: #{face_transfer_forward.1} parent=1 // pred_check_branch
      %44 = sbr.rel (0) target = $region25
    $region24: #{face_transfer_forward.1} parent=1 // pred_region
      _
    $region25: #{face_transfer_forward.1} parent=1 // pred_fallthru
      _
    // Predicated region
    $region26: #{face_transfer_forward.1} parent=1 // pred_check
      _
    $region27: #{face_transfer_forward.1} parent=1 // pred_check_branch
      %46 = sbr.rel (0) target = $region29
    $region28: #{face_transfer_forward.1} parent=1 // pred_region
      %47 = dma.done [#allocation3], 12288
    $region29: #{face_transfer_forward.1} parent=1 // pred_fallthru
      _
    // Predicated region
    $region30: #{face_transfer_forward.1} parent=1 // pred_check
      _
    $region31: #{face_transfer_forward.1} parent=1 // pred_check_branch
      %49 = sbr.rel (0) target = $region33
    $region32: #{face_transfer_forward.1} parent=1 // pred_region
      %50 = dma.done [#allocation5], 12288
    $region33: #{face_transfer_forward.1} parent=1 // pred_fallthru
      _
    %v51 = vld [vmem:[%s0] sm:$0xf]
    %v52 = vld [vmem:[%s1] sm:$0xf]
    %v53 = vld [vmem:[#allocation4] sm:$0xff]
    %v54 = vld [vmem:[#allocation4 + $0x8] sm:$0xff]
    %v55 = vld [vmem:[#allocation4 + $0x10] sm:$0xff]
    %v56 = vld [vmem:[#allocation4 + $0x18] sm:$0xff]
    %v57 = vld [vmem:[#allocation4 + $0x20] sm:$0xff]
    %v58 = vld [vmem:[#allocation4 + $0x28] sm:$0xff]
    %v59 = vld [vmem:[#allocation4 + $0x30] sm:$0xff]
    %v60 = vld [vmem:[#allocation4 + $0x38] sm:$0xff]
    %v61 = vld [vmem:[#allocation4 + $0x40] sm:$0xff]
    %v62 = vld [vmem:[#allocation4 + $0x48] sm:$0xff]
    %v63 = vld [vmem:[#allocation4 + $0x50] sm:$0xff]
    %v64 = vld [vmem:[#allocation4 + $0x58] sm:$0xff]
    %v65 = vld [vmem:[#allocation4 + $0x60] sm:$0xff]
    %v66 = vld [vmem:[#allocation4 + $0x68] sm:$0xff]
    %v67 = vld [vmem:[#allocation4 + $0x70] sm:$0xff]
    %v68 = vld [vmem:[#allocation4 + $0x78] sm:$0xff]
    %v69 = vld [vmem:[#allocation4 + $0x80] sm:$0xff]
    %v70 = vld [vmem:[#allocation4 + $0x88] sm:$0xff]
    %v71 = vld [vmem:[#allocation4 + $0x90] sm:$0xff]
    %v72 = vld [vmem:[#allocation4 + $0x98] sm:$0xff]
    %v73 = vld [vmem:[#allocation4 + $0xa0] sm:$0xff]
    %v74 = vld [vmem:[#allocation4 + $0xa8] sm:$0xff]
    %v75 = vld [vmem:[#allocation4 + $0xb0] sm:$0xff]
    %v76 = vld [vmem:[#allocation4 + $0xb8] sm:$0xff]
    %v77 = vld [vmem:[#allocation4 + $0xc0] sm:$0xff]
    %v78 = vld [vmem:[#allocation4 + $0xc8] sm:$0xff]
    %v79 = vld [vmem:[#allocation4 + $0xd0] sm:$0xff]
    %v80 = vld [vmem:[#allocation4 + $0xd8] sm:$0xff]
    %v81 = vld [vmem:[#allocation4 + $0xe0] sm:$0xff]
    %v82 = vld [vmem:[#allocation4 + $0xe8] sm:$0xff]
    %v83 = vld [vmem:[#allocation4 + $0xf0] sm:$0xff]
    %v84 = vld [vmem:[#allocation4 + $0xf8] sm:$0xff]
    %v85 = vld [vmem:[#allocation4 + $0x100] sm:$0xff]
    %v86 = vld [vmem:[#allocation4 + $0x108] sm:$0xff]
    %v87 = vld [vmem:[#allocation4 + $0x110] sm:$0xff]
    %v88 = vld [vmem:[#allocation4 + $0x118] sm:$0xff]
    %v89 = vld [vmem:[#allocation4 + $0x120] sm:$0xff]
    %v90 = vld [vmem:[#allocation4 + $0x128] sm:$0xff]
    %v91 = vld [vmem:[#allocation4 + $0x130] sm:$0xff]
    %v92 = vld [vmem:[#allocation4 + $0x138] sm:$0xff]
    %v93 = vld [vmem:[#allocation4 + $0x140] sm:$0xff]
    %v94 = vld [vmem:[#allocation4 + $0x148] sm:$0xff]
    %v95 = vld [vmem:[#allocation4 + $0x150] sm:$0xff]
    %v96 = vld [vmem:[#allocation4 + $0x158] sm:$0xff]
    %v97 = vld [vmem:[#allocation4 + $0x160] sm:$0xff]
    %v98 = vld [vmem:[#allocation4 + $0x168] sm:$0xff]
    %v99 = vld [vmem:[#allocation4 + $0x170] sm:$0xff]
    %v100 = vld [vmem:[#allocation4 + $0x178] sm:$0xff]
    %v101 = vld [vmem:[#allocation4 + $0x180] sm:$0xff]
    %v102 = vld [vmem:[#allocation4 + $0x188] sm:$0xff]
    %v103 = vld [vmem:[#allocation4 + $0x190] sm:$0xff]
    %v104 = vld [vmem:[#allocation4 + $0x198] sm:$0xff]
    %v105 = vld [vmem:[#allocation4 + $0x1a0] sm:$0xff]
    %v106 = vld [vmem:[#allocation4 + $0x1a8] sm:$0xff]
    %v107 = vld [vmem:[#allocation4 + $0x1b0] sm:$0xff]
    %v108 = vld [vmem:[#allocation4 + $0x1b8] sm:$0xff]
    %v109 = vld [vmem:[#allocation4 + $0x1c0] sm:$0xff]
    %v110 = vld [vmem:[#allocation4 + $0x1c8] sm:$0xff]
    %v111 = vld [vmem:[#allocation4 + $0x1d0] sm:$0xff]
    %v112 = vld [vmem:[#allocation4 + $0x1d8] sm:$0xff]
    %v113 = vld [vmem:[#allocation4 + $0x1e0] sm:$0xff]
    %v114 = vld [vmem:[#allocation4 + $0x1e8] sm:$0xff]
    %v115 = vld [vmem:[#allocation4 + $0x1f0] sm:$0xff]
    %v116 = vld [vmem:[#allocation4 + $0x1f8] sm:$0xff]
    %v117 = vld [vmem:[#allocation4 + $0x200] sm:$0xff]
    %v118 = vld [vmem:[#allocation4 + $0x208] sm:$0xff]
    %v119 = vld [vmem:[#allocation4 + $0x210] sm:$0xff]
    %v120 = vld [vmem:[#allocation4 + $0x218] sm:$0xff]
    %v121 = vld [vmem:[#allocation4 + $0x220] sm:$0xff]
    %v122 = vld [vmem:[#allocation4 + $0x228] sm:$0xff]
    %v123 = vld [vmem:[#allocation4 + $0x230] sm:$0xff]
    %v124 = vld [vmem:[#allocation4 + $0x238] sm:$0xff]
    %v125 = vld [vmem:[#allocation4 + $0x240] sm:$0xff]
    %v126 = vld [vmem:[#allocation4 + $0x248] sm:$0xff]
    %v127 = vld [vmem:[#allocation4 + $0x250] sm:$0xff]
    %v128 = vld [vmem:[#allocation4 + $0x258] sm:$0xff]
    %v129 = vld [vmem:[#allocation4 + $0x260] sm:$0xff]
    %v130 = vld [vmem:[#allocation4 + $0x268] sm:$0xff]
    %v131 = vld [vmem:[#allocation4 + $0x270] sm:$0xff]
    %v132 = vld [vmem:[#allocation4 + $0x278] sm:$0xff]
    %v133 = vld [vmem:[#allocation4 + $0x280] sm:$0xff]
    %v134 = vld [vmem:[#allocation4 + $0x288] sm:$0xff]
    %v135 = vld [vmem:[#allocation4 + $0x290] sm:$0xff]
    %v136 = vld [vmem:[#allocation4 + $0x298] sm:$0xff]
    %v137 = vld [vmem:[#allocation4 + $0x2a0] sm:$0xff]
    %v138 = vld [vmem:[#allocation4 + $0x2a8] sm:$0xff]
    %v139 = vld [vmem:[#allocation4 + $0x2b0] sm:$0xff]
    %v140 = vld [vmem:[#allocation4 + $0x2b8] sm:$0xff]
    %v141 = vld [vmem:[#allocation4 + $0x2c0] sm:$0xff]
    %v142 = vld [vmem:[#allocation4 + $0x2c8] sm:$0xff]
    %v143 = vld [vmem:[#allocation4 + $0x2d0] sm:$0xff]
    %v144 = vld [vmem:[#allocation4 + $0x2d8] sm:$0xff]
    %v145 = vld [vmem:[#allocation4 + $0x2e0] sm:$0xff]
    %v146 = vld [vmem:[#allocation4 + $0x2e8] sm:$0xff]
    %v147 = vld [vmem:[#allocation4 + $0x2f0] sm:$0xff]
    %v148 = vld [vmem:[#allocation4 + $0x2f8] sm:$0xff]
    %v149 = vld [vmem:[%s4] sm:$0x3f]
    %v151 = vlaneseq
    %v152 = vshrl.u32 %v151, 7
    %v153 = vsub.s32 0, %v152
    %v154 = vrot.slane %v149, %v153
    %v155 = vlaneseq
    %v156 = vshrl.u32 %v155, 7
    %v157 = vsub.s32 1, %v156
    %v158 = vrot.slane %v149, %v157
    %v159 = vlaneseq
    %v160 = vshrl.u32 %v159, 7
    %v161 = vsub.s32 2, %v160
    %v162 = vrot.slane %v149, %v161
    %v163 = vlaneseq
    %v164 = vshrl.u32 %v163, 7
    %v165 = vsub.s32 3, %v164
    %v166 = vrot.slane %v149, %v165
    %v167 = vlaneseq
    %v168 = vshrl.u32 %v167, 7
    %v169 = vsub.s32 4, %v168
    %v170 = vrot.slane %v149, %v169
    %v171 = vlaneseq
    %v172 = vshrl.u32 %v171, 7
    %v173 = vsub.s32 5, %v172
    %v174 = vrot.slane %v149, %v173
    %v181 = vand.u32 %v54, 4294901760
    %182 = vmatprep.subr.mxu0 %v181
    %v183 = vand.u32 %v53, 4294901760
    %184 = vmatpush1.msra.mxu0 %v183
    %v185 = vand.u32 %v60, 4294901760
    %186 = vmatprep.subr.mxu0 %v185
    %v187 = vand.u32 %v59, 4294901760
    %188 = vmatpush1.msra.mxu0 %v187
    %v189 = vand.u32 %v66, 4294901760
    %190 = vmatprep.subr.mxu0 %v189
    %v191 = vand.u32 %v65, 4294901760
    %192 = vmatpush1.msra.mxu0 %v191
    %v193 = vand.u32 %v72, 4294901760
    %194 = vmatprep.subr.mxu0 %v193
    %v195 = vand.u32 %v71, 4294901760
    %196 = vmatpush1.msra.mxu0 %v195
    %v197 = vand.u32 %v78, 4294901760
    %198 = vmatprep.subr.mxu0 %v197
    %v199 = vand.u32 %v77, 4294901760
    %200 = vmatpush1.msra.mxu0 %v199
    %v201 = vand.u32 %v84, 4294901760
    %202 = vmatprep.subr.mxu0 %v201
    %v203 = vand.u32 %v83, 4294901760
    %204 = vmatpush1.msra.mxu0 %v203
    %v205 = vand.u32 %v90, 4294901760
    %206 = vmatprep.subr.mxu0 %v205
    %v207 = vand.u32 %v89, 4294901760
    %208 = vmatpush1.msra.mxu0 %v207
    %v209 = vand.u32 %v96, 4294901760
    %210 = vmatprep.subr.mxu0 %v209
    %v211 = vand.u32 %v95, 4294901760
    %212 = vmatpush1.msra.mxu0 %v211
    %v213 = vand.u32 %v102, 4294901760
    %214 = vmatprep.subr.mxu0 %v213
    %v215 = vand.u32 %v101, 4294901760
    %216 = vmatpush1.msra.mxu0 %v215
    %v217 = vand.u32 %v108, 4294901760
    %218 = vmatprep.subr.mxu0 %v217
    %v219 = vand.u32 %v107, 4294901760
    %220 = vmatpush1.msra.mxu0 %v219
    %v221 = vand.u32 %v114, 4294901760
    %222 = vmatprep.subr.mxu0 %v221
    %v223 = vand.u32 %v113, 4294901760
    %224 = vmatpush1.msra.mxu0 %v223
    %v225 = vand.u32 %v120, 4294901760
    %226 = vmatprep.subr.mxu0 %v225
    %v227 = vand.u32 %v119, 4294901760
    %228 = vmatpush1.msra.mxu0 %v227
    %v229 = vand.u32 %v126, 4294901760
    %230 = vmatprep.subr.mxu0 %v229
    %v231 = vand.u32 %v125, 4294901760
    %232 = vmatpush1.msra.mxu0 %v231
    %v233 = vand.u32 %v132, 4294901760
    %234 = vmatprep.subr.mxu0 %v233
    %v235 = vand.u32 %v131, 4294901760
    %236 = vmatpush1.msra.mxu0 %v235
    %v237 = vand.u32 %v138, 4294901760
    %238 = vmatprep.subr.mxu0 %v237
    %v239 = vand.u32 %v137, 4294901760
    %240 = vmatpush1.msra.mxu0 %v239
    %v241 = vand.u32 %v144, 4294901760
    %242 = vmatprep.subr.mxu0 %v241
    %v243 = vand.u32 %v143, 4294901760
    %244 = vmatpush1.msra.mxu0 %v243
    %245 = vmatprep.subr.mxu0 0.0
    %246 = vmatpush1.msra.mxu0 0.0
    %247 = vmatprep.subr.mxu0 0.0
    %248 = vmatpush1.msra.mxu0 0.0
    %249 = vmatprep.subr.mxu0 0.0
    %250 = vmatpush1.msra.mxu0 0.0
    %251 = vmatprep.subr.mxu0 0.0
    %252 = vmatpush1.msra.mxu0 0.0
    %253 = vmatprep.subr.mxu0 0.0
    %254 = vmatpush1.msra.mxu0 0.0
    %255 = vmatprep.subr.mxu0 0.0
    %256 = vmatpush1.msra.mxu0 0.0
    %257 = vmatprep.subr.mxu0 0.0
    %258 = vmatpush1.msra.mxu0 0.0
    %259 = vmatprep.subr.mxu0 0.0
    %260 = vmatpush1.msra.mxu0 0.0
    %261 = vmatprep.subr.mxu0 0.0
    %262 = vmatpush1.msra.mxu0 0.0
    %263 = vmatprep.subr.mxu0 0.0
    %264 = vmatpush1.msra.mxu0 0.0
    %265 = vmatprep.subr.mxu0 0.0
    %266 = vmatpush1.msra.mxu0 0.0
    %267 = vmatprep.subr.mxu0 0.0
    %268 = vmatpush1.msra.mxu0 0.0
    %269 = vmatprep.subr.mxu0 0.0
    %270 = vmatpush1.msra.mxu0 0.0
    %271 = vmatprep.subr.mxu0 0.0
    %272 = vmatpush1.msra.mxu0 0.0
    %273 = vmatprep.subr.mxu0 0.0
    %274 = vmatpush1.msra.mxu0 0.0
    %275 = vmatprep.subr.mxu0 0.0
    %276 = vmatpush1.msra.mxu0 0.0
    %277 = vmatprep.mubr.f32.mxu0 0.0
    %v278 = vand.u32 %v52, 4294901760
    %v279 = vsub.f32 %v52, %v278
    %v280 = vand.u32 %v279, 4294901760
    %v281 = vsub.f32 %v279, %v280
    %v282 = vand.u32 %v281, 4294901760
    %283 = vmatmul.mubr.f32.gmra.mrb[0].mxu0 %v282
    %v284 = vpop.f32.mrb[0].mxu0
    %v285 = vadd.f32 %v154, %v284
    %v286 = vpop.f32.mrb[0].mxu0
    %v287 = vadd.f32 %v158, %v286
    %288 = vdwg.mxu0
    %v289 = vand.u32 %v54, 4294901760
    %v290 = vsub.f32 %v54, %v289
    %v291 = vand.u32 %v290, 4294901760
    %v292 = vsub.f32 %v290, %v291
    %v293 = vand.u32 %v292, 4294901760
    %294 = vmatprep.subr.mxu0 %v293
    %v295 = vand.u32 %v53, 4294901760
    %v296 = vsub.f32 %v53, %v295
    %v297 = vand.u32 %v296, 4294901760
    %v298 = vsub.f32 %v296, %v297
    %v299 = vand.u32 %v298, 4294901760
    %300 = vmatpush1.msra.mxu0 %v299
    %v301 = vand.u32 %v60, 4294901760
    %v302 = vsub.f32 %v60, %v301
    %v303 = vand.u32 %v302, 4294901760
    %v304 = vsub.f32 %v302, %v303
    %v305 = vand.u32 %v304, 4294901760
    %306 = vmatprep.subr.mxu0 %v305
    %v307 = vand.u32 %v59, 4294901760
    %v308 = vsub.f32 %v59, %v307
    %v309 = vand.u32 %v308, 4294901760
    %v310 = vsub.f32 %v308, %v309
    %v311 = vand.u32 %v310, 4294901760
    %312 = vmatpush1.msra.mxu0 %v311
    %v313 = vand.u32 %v66, 4294901760
    %v314 = vsub.f32 %v66, %v313
    %v315 = vand.u32 %v314, 4294901760
    %v316 = vsub.f32 %v314, %v315
    %v317 = vand.u32 %v316, 4294901760
    %318 = vmatprep.subr.mxu0 %v317
    %v319 = vand.u32 %v65, 4294901760
    %v320 = vsub.f32 %v65, %v319
    %v321 = vand.u32 %v320, 4294901760
    %v322 = vsub.f32 %v320, %v321
    %v323 = vand.u32 %v322, 4294901760
    %324 = vmatpush1.msra.mxu0 %v323
    %v325 = vand.u32 %v72, 4294901760
    %v326 = vsub.f32 %v72, %v325
    %v327 = vand.u32 %v326, 4294901760
    %v328 = vsub.f32 %v326, %v327
    %v329 = vand.u32 %v328, 4294901760
    %330 = vmatprep.subr.mxu0 %v329
    %v331 = vand.u32 %v71, 4294901760
    %v332 = vsub.f32 %v71, %v331
    %v333 = vand.u32 %v332, 4294901760
    %v334 = vsub.f32 %v332, %v333
    %v335 = vand.u32 %v334, 4294901760
    %336 = vmatpush1.msra.mxu0 %v335
    %v337 = vand.u32 %v78, 4294901760
    %v338 = vsub.f32 %v78, %v337
    %v339 = vand.u32 %v338, 4294901760
    %v340 = vsub.f32 %v338, %v339
    %v341 = vand.u32 %v340, 4294901760
    %342 = vmatprep.subr.mxu0 %v341
    %v343 = vand.u32 %v77, 4294901760
    %v344 = vsub.f32 %v77, %v343
    %v345 = vand.u32 %v344, 4294901760
    %v346 = vsub.f32 %v344, %v345
    %v347 = vand.u32 %v346, 4294901760
    %348 = vmatpush1.msra.mxu0 %v347
    %v349 = vand.u32 %v84, 4294901760
    %v350 = vsub.f32 %v84, %v349
    %v351 = vand.u32 %v350, 4294901760
    %v352 = vsub.f32 %v350, %v351
    %v353 = vand.u32 %v352, 4294901760
    %354 = vmatprep.subr.mxu0 %v353
    %v355 = vand.u32 %v83, 4294901760
    %v356 = vsub.f32 %v83, %v355
    %v357 = vand.u32 %v356, 4294901760
    %v358 = vsub.f32 %v356, %v357
    %v359 = vand.u32 %v358, 4294901760
    %360 = vmatpush1.msra.mxu0 %v359
    %v361 = vand.u32 %v90, 4294901760
    %v362 = vsub.f32 %v90, %v361
    %v363 = vand.u32 %v362, 4294901760
    %v364 = vsub.f32 %v362, %v363
    %v365 = vand.u32 %v364, 4294901760
    %366 = vmatprep.subr.mxu0 %v365
    %v367 = vand.u32 %v89, 4294901760
    %v368 = vsub.f32 %v89, %v367
    %v369 = vand.u32 %v368, 4294901760
    %v370 = vsub.f32 %v368, %v369
    %v371 = vand.u32 %v370, 4294901760
    %372 = vmatpush1.msra.mxu0 %v371
    %v373 = vand.u32 %v96, 4294901760
    %v374 = vsub.f32 %v96, %v373
    %v375 = vand.u32 %v374, 4294901760
    %v376 = vsub.f32 %v374, %v375
    %v377 = vand.u32 %v376, 4294901760
    %378 = vmatprep.subr.mxu0 %v377
    %v379 = vand.u32 %v95, 4294901760
    %v380 = vsub.f32 %v95, %v379
    %v381 = vand.u32 %v380, 4294901760
    %v382 = vsub.f32 %v380, %v381
    %v383 = vand.u32 %v382, 4294901760
    %384 = vmatpush1.msra.mxu0 %v383
    %v385 = vand.u32 %v102, 4294901760
    %v386 = vsub.f32 %v102, %v385
    %v387 = vand.u32 %v386, 4294901760
    %v388 = vsub.f32 %v386, %v387
    %v389 = vand.u32 %v388, 4294901760
    %390 = vmatprep.subr.mxu0 %v389
    %v391 = vand.u32 %v101, 4294901760
    %v392 = vsub.f32 %v101, %v391
    %v393 = vand.u32 %v392, 4294901760
    %v394 = vsub.f32 %v392, %v393
    %v395 = vand.u32 %v394, 4294901760
    %396 = vmatpush1.msra.mxu0 %v395
    %v397 = vand.u32 %v108, 4294901760
    %v398 = vsub.f32 %v108, %v397
    %v399 = vand.u32 %v398, 4294901760
    %v400 = vsub.f32 %v398, %v399
    %v401 = vand.u32 %v400, 4294901760
    %402 = vmatprep.subr.mxu0 %v401
    %v403 = vand.u32 %v107, 4294901760
    %v404 = vsub.f32 %v107, %v403
    %v405 = vand.u32 %v404, 4294901760
    %v406 = vsub.f32 %v404, %v405
    %v407 = vand.u32 %v406, 4294901760
    %408 = vmatpush1.msra.mxu0 %v407
    %v409 = vand.u32 %v114, 4294901760
    %v410 = vsub.f32 %v114, %v409
    %v411 = vand.u32 %v410, 4294901760
    %v412 = vsub.f32 %v410, %v411
    %v413 = vand.u32 %v412, 4294901760
    %414 = vmatprep.subr.mxu0 %v413
    %v415 = vand.u32 %v113, 4294901760
    %v416 = vsub.f32 %v113, %v415
    %v417 = vand.u32 %v416, 4294901760
    %v418 = vsub.f32 %v416, %v417
    %v419 = vand.u32 %v418, 4294901760
    %420 = vmatpush1.msra.mxu0 %v419
    %v421 = vand.u32 %v120, 4294901760
    %v422 = vsub.f32 %v120, %v421
    %v423 = vand.u32 %v422, 4294901760
    %v424 = vsub.f32 %v422, %v423
    %v425 = vand.u32 %v424, 4294901760
    %426 = vmatprep.subr.mxu0 %v425
    %v427 = vand.u32 %v119, 4294901760
    %v428 = vsub.f32 %v119, %v427
    %v429 = vand.u32 %v428, 4294901760
    %v430 = vsub.f32 %v428, %v429
    %v431 = vand.u32 %v430, 4294901760
    %432 = vmatpush1.msra.mxu0 %v431
    %v433 = vand.u32 %v126, 4294901760
    %v434 = vsub.f32 %v126, %v433
    %v435 = vand.u32 %v434, 4294901760
    %v436 = vsub.f32 %v434, %v435
    %v437 = vand.u32 %v436, 4294901760
    %438 = vmatprep.subr.mxu0 %v437
    %v439 = vand.u32 %v125, 4294901760
    %v440 = vsub.f32 %v125, %v439
    %v441 = vand.u32 %v440, 4294901760
    %v442 = vsub.f32 %v440, %v441
    %v443 = vand.u32 %v442, 4294901760
    %444 = vmatpush1.msra.mxu0 %v443
    %v445 = vand.u32 %v132, 4294901760
    %v446 = vsub.f32 %v132, %v445
    %v447 = vand.u32 %v446, 4294901760
    %v448 = vsub.f32 %v446, %v447
    %v449 = vand.u32 %v448, 4294901760
    %450 = vmatprep.subr.mxu0 %v449
    %v451 = vand.u32 %v131, 4294901760
    %v452 = vsub.f32 %v131, %v451
    %v453 = vand.u32 %v452, 4294901760
    %v454 = vsub.f32 %v452, %v453
    %v455 = vand.u32 %v454, 4294901760
    %456 = vmatpush1.msra.mxu0 %v455
    %v457 = vand.u32 %v138, 4294901760
    %v458 = vsub.f32 %v138, %v457
    %v459 = vand.u32 %v458, 4294901760
    %v460 = vsub.f32 %v458, %v459
    %v461 = vand.u32 %v460, 4294901760
    %462 = vmatprep.subr.mxu0 %v461
    %v463 = vand.u32 %v137, 4294901760
    %v464 = vsub.f32 %v137, %v463
    %v465 = vand.u32 %v464, 4294901760
    %v466 = vsub.f32 %v464, %v465
    %v467 = vand.u32 %v466, 4294901760
    %468 = vmatpush1.msra.mxu0 %v467
    %v469 = vand.u32 %v144, 4294901760
    %v470 = vsub.f32 %v144, %v469
    %v471 = vand.u32 %v470, 4294901760
    %v472 = vsub.f32 %v470, %v471
    %v473 = vand.u32 %v472, 4294901760
    %474 = vmatprep.subr.mxu0 %v473
    %v475 = vand.u32 %v143, 4294901760
    %v476 = vsub.f32 %v143, %v475
    %v477 = vand.u32 %v476, 4294901760
    %v478 = vsub.f32 %v476, %v477
    %v479 = vand.u32 %v478, 4294901760
    %480 = vmatpush1.msra.mxu0 %v479
    %481 = vmatprep.subr.mxu0 0.0
    %482 = vmatpush1.msra.mxu0 0.0
    %483 = vmatprep.subr.mxu0 0.0
    %484 = vmatpush1.msra.mxu0 0.0
    %485 = vmatprep.subr.mxu0 0.0
    %486 = vmatpush1.msra.mxu0 0.0
    %487 = vmatprep.subr.mxu0 0.0
    %488 = vmatpush1.msra.mxu0 0.0
    %489 = vmatprep.subr.mxu0 0.0
    %490 = vmatpush1.msra.mxu0 0.0
    %491 = vmatprep.subr.mxu0 0.0
    %492 = vmatpush1.msra.mxu0 0.0
    %493 = vmatprep.subr.mxu0 0.0
    %494 = vmatpush1.msra.mxu0 0.0
    %495 = vmatprep.subr.mxu0 0.0
    %496 = vmatpush1.msra.mxu0 0.0
    %497 = vmatprep.subr.mxu0 0.0
    %498 = vmatpush1.msra.mxu0 0.0
    %499 = vmatprep.subr.mxu0 0.0
    %500 = vmatpush1.msra.mxu0 0.0
    %501 = vmatprep.subr.mxu0 0.0
    %502 = vmatpush1.msra.mxu0 0.0
    %503 = vmatprep.subr.mxu0 0.0
    %504 = vmatpush1.msra.mxu0 0.0
    %505 = vmatprep.subr.mxu0 0.0
    %506 = vmatpush1.msra.mxu0 0.0
    %507 = vmatprep.subr.mxu0 0.0
    %508 = vmatpush1.msra.mxu0 0.0
    %509 = vmatprep.subr.mxu0 0.0
    %510 = vmatpush1.msra.mxu0 0.0
    %511 = vmatprep.subr.mxu0 0.0
    %512 = vmatpush1.msra.mxu0 0.0
    %513 = vmatprep.mubr.f32.mxu0 0.0
    %v514 = vand.u32 %v52, 4294901760
    %515 = vmatmul.mubr.f32.gmra.mrb[0].mxu0 %v514
    %v516 = vpop.f32.mrb[0].mxu0
    %v517 = vadd.f32 %v285, %v516
    %v518 = vpop.f32.mrb[0].mxu0
    %v519 = vadd.f32 %v287, %v518
    %520 = vdwg.mxu0
    %v521 = vand.u32 %v54, 4294901760
    %v522 = vsub.f32 %v54, %v521
    %523 = vmatprep.subr.mxu0 %v522
    %v524 = vand.u32 %v53, 4294901760
    %v525 = vsub.f32 %v53, %v524
    %526 = vmatpush1.msra.mxu0 %v525
    %v527 = vand.u32 %v60, 4294901760
    %v528 = vsub.f32 %v60, %v527
    %529 = vmatprep.subr.mxu0 %v528
    %v530 = vand.u32 %v59, 4294901760
    %v531 = vsub.f32 %v59, %v530
    %532 = vmatpush1.msra.mxu0 %v531
    %v533 = vand.u32 %v66, 4294901760
    %v534 = vsub.f32 %v66, %v533
    %535 = vmatprep.subr.mxu0 %v534
    %v536 = vand.u32 %v65, 4294901760
    %v537 = vsub.f32 %v65, %v536
    %538 = vmatpush1.msra.mxu0 %v537
    %v539 = vand.u32 %v72, 4294901760
    %v540 = vsub.f32 %v72, %v539
    %541 = vmatprep.subr.mxu0 %v540
    %v542 = vand.u32 %v71, 4294901760
    %v543 = vsub.f32 %v71, %v542
    %544 = vmatpush1.msra.mxu0 %v543
    %v545 = vand.u32 %v78, 4294901760
    %v546 = vsub.f32 %v78, %v545
    %547 = vmatprep.subr.mxu0 %v546
    %v548 = vand.u32 %v77, 4294901760
    %v549 = vsub.f32 %v77, %v548
    %550 = vmatpush1.msra.mxu0 %v549
    %v551 = vand.u32 %v84, 4294901760
    %v552 = vsub.f32 %v84, %v551
    %553 = vmatprep.subr.mxu0 %v552
    %v554 = vand.u32 %v83, 4294901760
    %v555 = vsub.f32 %v83, %v554
    %556 = vmatpush1.msra.mxu0 %v555
    %v557 = vand.u32 %v90, 4294901760
    %v558 = vsub.f32 %v90, %v557
    %559 = vmatprep.subr.mxu0 %v558
    %v560 = vand.u32 %v89, 4294901760
    %v561 = vsub.f32 %v89, %v560
    %562 = vmatpush1.msra.mxu0 %v561
    %v563 = vand.u32 %v96, 4294901760
    %v564 = vsub.f32 %v96, %v563
    %565 = vmatprep.subr.mxu0 %v564
    %v566 = vand.u32 %v95, 4294901760
    %v567 = vsub.f32 %v95, %v566
    %568 = vmatpush1.msra.mxu0 %v567
    %v569 = vand.u32 %v102, 4294901760
    %v570 = vsub.f32 %v102, %v569
    %571 = vmatprep.subr.mxu0 %v570
    %v572 = vand.u32 %v101, 4294901760
    %v573 = vsub.f32 %v101, %v572
    %574 = vmatpush1.msra.mxu0 %v573
    %v575 = vand.u32 %v108, 4294901760
    %v576 = vsub.f32 %v108, %v575
    %577 = vmatprep.subr.mxu0 %v576
    %v578 = vand.u32 %v107, 4294901760
    %v579 = vsub.f32 %v107, %v578
    %580 = vmatpush1.msra.mxu0 %v579
    %v581 = vand.u32 %v114, 4294901760
    %v582 = vsub.f32 %v114, %v581
    %583 = vmatprep.subr.mxu0 %v582
    %v584 = vand.u32 %v113, 4294901760
    %v585 = vsub.f32 %v113, %v584
    %586 = vmatpush1.msra.mxu0 %v585
    %v587 = vand.u32 %v120, 4294901760
    %v588 = vsub.f32 %v120, %v587
    %589 = vmatprep.subr.mxu0 %v588
    %v590 = vand.u32 %v119, 4294901760
    %v591 = vsub.f32 %v119, %v590
    %592 = vmatpush1.msra.mxu0 %v591
    %v593 = vand.u32 %v126, 4294901760
    %v594 = vsub.f32 %v126, %v593
    %595 = vmatprep.subr.mxu0 %v594
    %v596 = vand.u32 %v125, 4294901760
    %v597 = vsub.f32 %v125, %v596
    %598 = vmatpush1.msra.mxu0 %v597
    %v599 = vand.u32 %v132, 4294901760
    %v600 = vsub.f32 %v132, %v599
    %601 = vmatprep.subr.mxu0 %v600
    %v602 = vand.u32 %v131, 4294901760
    %v603 = vsub.f32 %v131, %v602
    %604 = vmatpush1.msra.mxu0 %v603
    %v605 = vand.u32 %v138, 4294901760
    %v606 = vsub.f32 %v138, %v605
    %607 = vmatprep.subr.mxu0 %v606
    %v608 = vand.u32 %v137, 4294901760
    %v609 = vsub.f32 %v137, %v608
    %610 = vmatpush1.msra.mxu0 %v609
    %v611 = vand.u32 %v144, 4294901760
    %v612 = vsub.f32 %v144, %v611
    %613 = vmatprep.subr.mxu0 %v612
    %v614 = vand.u32 %v143, 4294901760
    %v615 = vsub.f32 %v143, %v614
    %616 = vmatpush1.msra.mxu0 %v615
    %617 = vmatprep.subr.mxu0 0.0
    %618 = vmatpush1.msra.mxu0 0.0
    %619 = vmatprep.subr.mxu0 0.0
    %620 = vmatpush1.msra.mxu0 0.0
    %621 = vmatprep.subr.mxu0 0.0
    %622 = vmatpush1.msra.mxu0 0.0
    %623 = vmatprep.subr.mxu0 0.0
    %624 = vmatpush1.msra.mxu0 0.0
    %625 = vmatprep.subr.mxu0 0.0
    %626 = vmatpush1.msra.mxu0 0.0
    %627 = vmatprep.subr.mxu0 0.0
    %628 = vmatpush1.msra.mxu0 0.0
    %629 = vmatprep.subr.mxu0 0.0
    %630 = vmatpush1.msra.mxu0 0.0
    %631 = vmatprep.subr.mxu0 0.0
    %632 = vmatpush1.msra.mxu0 0.0
    %633 = vmatprep.subr.mxu0 0.0
    %634 = vmatpush1.msra.mxu0 0.0
    %635 = vmatprep.subr.mxu0 0.0
    %636 = vmatpush1.msra.mxu0 0.0
    %637 = vmatprep.subr.mxu0 0.0
    %638 = vmatpush1.msra.mxu0 0.0
    %639 = vmatprep.subr.mxu0 0.0
    %640 = vmatpush1.msra.mxu0 0.0
    %641 = vmatprep.subr.mxu0 0.0
    %642 = vmatpush1.msra.mxu0 0.0
    %643 = vmatprep.subr.mxu0 0.0
    %644 = vmatpush1.msra.mxu0 0.0
    %645 = vmatprep.subr.mxu0 0.0
    %646 = vmatpush1.msra.mxu0 0.0
    %647 = vmatprep.subr.mxu0 0.0
    %648 = vmatpush1.msra.mxu0 0.0
    %649 = vmatprep.mubr.f32.mxu0 0.0
    %v650 = vand.u32 %v52, 4294901760
    %v651 = vsub.f32 %v52, %v650
    %652 = vmatmul.mubr.f32.gmra.mrb[0].mxu0 %v651
    %v653 = vpop.f32.mrb[0].mxu0
    %v654 = vadd.f32 %v517, %v653
    %v655 = vpop.f32.mrb[0].mxu0
    %v656 = vadd.f32 %v519, %v655
    %657 = vdwg.mxu0
    %v658 = vand.u32 %v54, 4294901760
    %659 = vmatprep.subr.mxu0 %v658
    %v660 = vand.u32 %v53, 4294901760
    %661 = vmatpush1.msra.mxu0 %v660
    %v662 = vand.u32 %v60, 4294901760
    %663 = vmatprep.subr.mxu0 %v662
    %v664 = vand.u32 %v59, 4294901760
    %665 = vmatpush1.msra.mxu0 %v664
    %v666 = vand.u32 %v66, 4294901760
    %667 = vmatprep.subr.mxu0 %v666
    %v668 = vand.u32 %v65, 4294901760
    %669 = vmatpush1.msra.mxu0 %v668
    %v670 = vand.u32 %v72, 4294901760
    %671 = vmatprep.subr.mxu0 %v670
    %v672 = vand.u32 %v71, 4294901760
    %673 = vmatpush1.msra.mxu0 %v672
    %v674 = vand.u32 %v78, 4294901760
    %675 = vmatprep.subr.mxu0 %v674
    %v676 = vand.u32 %v77, 4294901760
    %677 = vmatpush1.msra.mxu0 %v676
    %v678 = vand.u32 %v84, 4294901760
    %679 = vmatprep.subr.mxu0 %v678
    %v680 = vand.u32 %v83, 4294901760
    %681 = vmatpush1.msra.mxu0 %v680
    %v682 = vand.u32 %v90, 4294901760
    %683 = vmatprep.subr.mxu0 %v682
    %v684 = vand.u32 %v89, 4294901760
    %685 = vmatpush1.msra.mxu0 %v684
    %v686 = vand.u32 %v96, 4294901760
    %687 = vmatprep.subr.mxu0 %v686
    %v688 = vand.u32 %v95, 4294901760
    %689 = vmatpush1.msra.mxu0 %v688
    %v690 = vand.u32 %v102, 4294901760
    %691 = vmatprep.subr.mxu0 %v690
    %v692 = vand.u32 %v101, 4294901760
    %693 = vmatpush1.msra.mxu0 %v692
    %v694 = vand.u32 %v108, 4294901760
    %695 = vmatprep.subr.mxu0 %v694
    %v696 = vand.u32 %v107, 4294901760
    %697 = vmatpush1.msra.mxu0 %v696
    %v698 = vand.u32 %v114, 4294901760
    %699 = vmatprep.subr.mxu0 %v698
    %v700 = vand.u32 %v113, 4294901760
    %701 = vmatpush1.msra.mxu0 %v700
    %v702 = vand.u32 %v120, 4294901760
    %703 = vmatprep.subr.mxu0 %v702
    %v704 = vand.u32 %v119, 4294901760
    %705 = vmatpush1.msra.mxu0 %v704
    %v706 = vand.u32 %v126, 4294901760
    %707 = vmatprep.subr.mxu0 %v706
    %v708 = vand.u32 %v125, 4294901760
    %709 = vmatpush1.msra.mxu0 %v708
    %v710 = vand.u32 %v132, 4294901760
    %711 = vmatprep.subr.mxu0 %v710
    %v712 = vand.u32 %v131, 4294901760
    %713 = vmatpush1.msra.mxu0 %v712
    %v714 = vand.u32 %v138, 4294901760
    %715 = vmatprep.subr.mxu0 %v714
    %v716 = vand.u32 %v137, 4294901760
    %717 = vmatpush1.msra.mxu0 %v716
    %v718 = vand.u32 %v144, 4294901760
    %719 = vmatprep.subr.mxu0 %v718
    %v720 = vand.u32 %v143, 4294901760
    %721 = vmatpush1.msra.mxu0 %v720
    %722 = vmatprep.subr.mxu0 0.0
    %723 = vmatpush1.msra.mxu0 0.0
    %724 = vmatprep.subr.mxu0 0.0
    %725 = vmatpush1.msra.mxu0 0.0
    %726 = vmatprep.subr.mxu0 0.0
    %727 = vmatpush1.msra.mxu0 0.0
    %728 = vmatprep.subr.mxu0 0.0
    %729 = vmatpush1.msra.mxu0 0.0
    %730 = vmatprep.subr.mxu0 0.0
    %731 = vmatpush1.msra.mxu0 0.0
    %732 = vmatprep.subr.mxu0 0.0
    %733 = vmatpush1.msra.mxu0 0.0
    %734 = vmatprep.subr.mxu0 0.0
    %735 = vmatpush1.msra.mxu0 0.0
    %736 = vmatprep.subr.mxu0 0.0
    %737 = vmatpush1.msra.mxu0 0.0
    %738 = vmatprep.subr.mxu0 0.0
    %739 = vmatpush1.msra.mxu0 0.0
    %740 = vmatprep.subr.mxu0 0.0
    %741 = vmatpush1.msra.mxu0 0.0
    %742 = vmatprep.subr.mxu0 0.0
    %743 = vmatpush1.msra.mxu0 0.0
    %744 = vmatprep.subr.mxu0 0.0
    %745 = vmatpush1.msra.mxu0 0.0
    %746 = vmatprep.subr.mxu0 0.0
    %747 = vmatpush1.msra.mxu0 0.0
    %748 = vmatprep.subr.mxu0 0.0
    %749 = vmatpush1.msra.mxu0 0.0
    %750 = vmatprep.subr.mxu0 0.0
    %751 = vmatpush1.msra.mxu0 0.0
    %752 = vmatprep.subr.mxu0 0.0
    %753 = vmatpush1.msra.mxu0 0.0
    %754 = vmatprep.mubr.f32.mxu0 0.0
    %v755 = vand.u32 %v52, 4294901760
    %v756 = vsub.f32 %v52, %v755
    %v757 = vand.u32 %v756, 4294901760
    %758 = vmatmul.mubr.f32.gmra.mrb[0].mxu0 %v757
    %v759 = vpop.f32.mrb[0].mxu0
    %v760 = vadd.f32 %v654, %v759
    %v761 = vpop.f32.mrb[0].mxu0
    %v762 = vadd.f32 %v656, %v761
    %763 = vdwg.mxu0
    %v764 = vand.u32 %v54, 4294901760
    %v765 = vsub.f32 %v54, %v764
    %v766 = vand.u32 %v765, 4294901760
    %767 = vmatprep.subr.mxu0 %v766
    %v768 = vand.u32 %v53, 4294901760
    %v769 = vsub.f32 %v53, %v768
    %v770 = vand.u32 %v769, 4294901760
    %771 = vmatpush1.msra.mxu0 %v770
    %v772 = vand.u32 %v60, 4294901760
    %v773 = vsub.f32 %v60, %v772
    %v774 = vand.u32 %v773, 4294901760
    %775 = vmatprep.subr.mxu0 %v774
    %v776 = vand.u32 %v59, 4294901760
    %v777 = vsub.f32 %v59, %v776
    %v778 = vand.u32 %v777, 4294901760
    %779 = vmatpush1.msra.mxu0 %v778
    %v780 = vand.u32 %v66, 4294901760
    %v781 = vsub.f32 %v66, %v780
    %v782 = vand.u32 %v781, 4294901760
    %783 = vmatprep.subr.mxu0 %v782
    %v784 = vand.u32 %v65, 4294901760
    %v785 = vsub.f32 %v65, %v784
    %v786 = vand.u32 %v785, 4294901760
    %787 = vmatpush1.msra.mxu0 %v786
    %v788 = vand.u32 %v72, 4294901760
    %v789 = vsub.f32 %v72, %v788
    %v790 = vand.u32 %v789, 4294901760
    %791 = vmatprep.subr.mxu0 %v790
    %v792 = vand.u32 %v71, 4294901760
    %v793 = vsub.f32 %v71, %v792
    %v794 = vand.u32 %v793, 4294901760
    %795 = vmatpush1.msra.mxu0 %v794
    %v796 = vand.u32 %v78, 4294901760
    %v797 = vsub.f32 %v78, %v796
    %v798 = vand.u32 %v797, 4294901760
    %799 = vmatprep.subr.mxu0 %v798
    %v800 = vand.u32 %v77, 4294901760
    %v801 = vsub.f32 %v77, %v800
    %v802 = vand.u32 %v801, 4294901760
    %803 = vmatpush1.msra.mxu0 %v802
    %v804 = vand.u32 %v84, 4294901760
    %v805 = vsub.f32 %v84, %v804
    %v806 = vand.u32 %v805, 4294901760
    %807 = vmatprep.subr.mxu0 %v806
    %v808 = vand.u32 %v83, 4294901760
    %v809 = vsub.f32 %v83, %v808
    %v810 = vand.u32 %v809, 4294901760
    %811 = vmatpush1.msra.mxu0 %v810
    %v812 = vand.u32 %v90, 4294901760
    %v813 = vsub.f32 %v90, %v812
    %v814 = vand.u32 %v813, 4294901760
    %815 = vmatprep.subr.mxu0 %v814
    %v816 = vand.u32 %v89, 4294901760
    %v817 = vsub.f32 %v89, %v816
    %v818 = vand.u32 %v817, 4294901760
    %819 = vmatpush1.msra.mxu0 %v818
    %v820 = vand.u32 %v96, 4294901760
    %v821 = vsub.f32 %v96, %v820
    %v822 = vand.u32 %v821, 4294901760
    %823 = vmatprep.subr.mxu0 %v822
    %v824 = vand.u32 %v95, 4294901760
    %v825 = vsub.f32 %v95, %v824
    %v826 = vand.u32 %v825, 4294901760
    %827 = vmatpush1.msra.mxu0 %v826
    %v828 = vand.u32 %v102, 4294901760
    %v829 = vsub.f32 %v102, %v828
    %v830 = vand.u32 %v829, 4294901760
    %831 = vmatprep.subr.mxu0 %v830
    %v832 = vand.u32 %v101, 4294901760
    %v833 = vsub.f32 %v101, %v832
    %v834 = vand.u32 %v833, 4294901760
    %835 = vmatpush1.msra.mxu0 %v834
    %v836 = vand.u32 %v108, 4294901760
    %v837 = vsub.f32 %v108, %v836
    %v838 = vand.u32 %v837, 4294901760
    %839 = vmatprep.subr.mxu0 %v838
    %v840 = vand.u32 %v107, 4294901760
    %v841 = vsub.f32 %v107, %v840
    %v842 = vand.u32 %v841, 4294901760
    %843 = vmatpush1.msra.mxu0 %v842
    %v844 = vand.u32 %v114, 4294901760
    %v845 = vsub.f32 %v114, %v844
    %v846 = vand.u32 %v845, 4294901760
    %847 = vmatprep.subr.mxu0 %v846
    %v848 = vand.u32 %v113, 4294901760
    %v849 = vsub.f32 %v113, %v848
    %v850 = vand.u32 %v849, 4294901760
    %851 = vmatpush1.msra.mxu0 %v850
    %v852 = vand.u32 %v120, 4294901760
    %v853 = vsub.f32 %v120, %v852
    %v854 = vand.u32 %v853, 4294901760
    %855 = vmatprep.subr.mxu0 %v854
    %v856 = vand.u32 %v119, 4294901760
    %v857 = vsub.f32 %v119, %v856
    %v858 = vand.u32 %v857, 4294901760
    %859 = vmatpush1.msra.mxu0 %v858
    %v860 = vand.u32 %v126, 4294901760
    %v861 = vsub.f32 %v126, %v860
    %v862 = vand.u32 %v861, 4294901760
    %863 = vmatprep.subr.mxu0 %v862
    %v864 = vand.u32 %v125, 4294901760
    %v865 = vsub.f32 %v125, %v864
    %v866 = vand.u32 %v865, 4294901760
    %867 = vmatpush1.msra.mxu0 %v866
    %v868 = vand.u32 %v132, 4294901760
    %v869 = vsub.f32 %v132, %v868
    %v870 = vand.u32 %v869, 4294901760
    %871 = vmatprep.subr.mxu0 %v870
    %v872 = vand.u32 %v131, 4294901760
    %v873 = vsub.f32 %v131, %v872
    %v874 = vand.u32 %v873, 4294901760
    %875 = vmatpush1.msra.mxu0 %v874
    %v876 = vand.u32 %v138, 4294901760
    %v877 = vsub.f32 %v138, %v876
    %v878 = vand.u32 %v877, 4294901760
    %879 = vmatprep.subr.mxu0 %v878
    %v880 = vand.u32 %v137, 4294901760
    %v881 = vsub.f32 %v137, %v880
    %v882 = vand.u32 %v881, 4294901760
    %883 = vmatpush1.msra.mxu0 %v882
    %v884 = vand.u32 %v144, 4294901760
    %v885 = vsub.f32 %v144, %v884
    %v886 = vand.u32 %v885, 4294901760
    %887 = vmatprep.subr.mxu0 %v886
    %v888 = vand.u32 %v143, 4294901760
    %v889 = vsub.f32 %v143, %v888
    %v890 = vand.u32 %v889, 4294901760
    %891 = vmatpush1.msra.mxu0 %v890
    %892 = vmatprep.subr.mxu0 0.0
    %893 = vmatpush1.msra.mxu0 0.0
    %894 = vmatprep.subr.mxu0 0.0
    %895 = vmatpush1.msra.mxu0 0.0
    %896 = vmatprep.subr.mxu0 0.0
    %897 = vmatpush1.msra.mxu0 0.0
    %898 = vmatprep.subr.mxu0 0.0
    %899 = vmatpush1.msra.mxu0 0.0
    %900 = vmatprep.subr.mxu0 0.0
    %901 = vmatpush1.msra.mxu0 0.0
    %902 = vmatprep.subr.mxu0 0.0
    %903 = vmatpush1.msra.mxu0 0.0
    %904 = vmatprep.subr.mxu0 0.0
    %905 = vmatpush1.msra.mxu0 0.0
    %906 = vmatprep.subr.mxu0 0.0
    %907 = vmatpush1.msra.mxu0 0.0
    %908 = vmatprep.subr.mxu0 0.0
    %909 = vmatpush1.msra.mxu0 0.0
    %910 = vmatprep.subr.mxu0 0.0
    %911 = vmatpush1.msra.mxu0 0.0
    %912 = vmatprep.subr.mxu0 0.0
    %913 = vmatpush1.msra.mxu0 0.0
    %914 = vmatprep.subr.mxu0 0.0
    %915 = vmatpush1.msra.mxu0 0.0
    %916 = vmatprep.subr.mxu0 0.0
    %917 = vmatpush1.msra.mxu0 0.0
    %918 = vmatprep.subr.mxu0 0.0
    %919 = vmatpush1.msra.mxu0 0.0
    %920 = vmatprep.subr.mxu0 0.0
    %921 = vmatpush1.msra.mxu0 0.0
    %922 = vmatprep.subr.mxu0 0.0
    %923 = vmatpush1.msra.mxu0 0.0
    %924 = vmatprep.mubr.f32.mxu0 0.0
    %v925 = vand.u32 %v52, 4294901760
    %926 = vmatmul.mubr.f32.gmra.mrb[0].mxu0 %v925
    %v927 = vpop.f32.mrb[0].mxu0
    %v928 = vadd.f32 %v760, %v927
    %v929 = vpop.f32.mrb[0].mxu0
    %v930 = vadd.f32 %v762, %v929
    %931 = vdwg.mxu0
    %v932 = vand.u32 %v54, 4294901760
    %933 = vmatprep.subr.mxu0 %v932
    %v934 = vand.u32 %v53, 4294901760
    %935 = vmatpush1.msra.mxu0 %v934
    %v936 = vand.u32 %v60, 4294901760
    %937 = vmatprep.subr.mxu0 %v936
    %v938 = vand.u32 %v59, 4294901760
    %939 = vmatpush1.msra.mxu0 %v938
    %v940 = vand.u32 %v66, 4294901760
    %941 = vmatprep.subr.mxu0 %v940
    %v942 = vand.u32 %v65, 4294901760
    %943 = vmatpush1.msra.mxu0 %v942
    %v944 = vand.u32 %v72, 4294901760
    %945 = vmatprep.subr.mxu0 %v944
    %v946 = vand.u32 %v71, 4294901760
    %947 = vmatpush1.msra.mxu0 %v946
    %v948 = vand.u32 %v78, 4294901760
    %949 = vmatprep.subr.mxu0 %v948
    %v950 = vand.u32 %v77, 4294901760
    %951 = vmatpush1.msra.mxu0 %v950
    %v952 = vand.u32 %v84, 4294901760
    %953 = vmatprep.subr.mxu0 %v952
    %v954 = vand.u32 %v83, 4294901760
    %955 = vmatpush1.msra.mxu0 %v954
    %v956 = vand.u32 %v90, 4294901760
    %957 = vmatprep.subr.mxu0 %v956
    %v958 = vand.u32 %v89, 4294901760
    %959 = vmatpush1.msra.mxu0 %v958
    %v960 = vand.u32 %v96, 4294901760
    %961 = vmatprep.subr.mxu0 %v960
    %v962 = vand.u32 %v95, 4294901760
    %963 = vmatpush1.msra.mxu0 %v962
    %v964 = vand.u32 %v102, 4294901760
    %965 = vmatprep.subr.mxu0 %v964
    %v966 = vand.u32 %v101, 4294901760
    %967 = vmatpush1.msra.mxu0 %v966
    %v968 = vand.u32 %v108, 4294901760
    %969 = vmatprep.subr.mxu0 %v968
    %v970 = vand.u32 %v107, 4294901760
    %971 = vmatpush1.msra.mxu0 %v970
    %v972 = vand.u32 %v114, 4294901760
    %973 = vmatprep.subr.mxu0 %v972
    %v974 = vand.u32 %v113, 4294901760
    %975 = vmatpush1.msra.mxu0 %v974
    %v976 = vand.u32 %v120, 4294901760
    %977 = vmatprep.subr.mxu0 %v976
    %v978 = vand.u32 %v119, 4294901760
    %979 = vmatpush1.msra.mxu0 %v978
    %v980 = vand.u32 %v126, 4294901760
    %981 = vmatprep.subr.mxu0 %v980
    %v982 = vand.u32 %v125, 4294901760
    %983 = vmatpush1.msra.mxu0 %v982
    %v984 = vand.u32 %v132, 4294901760
    %985 = vmatprep.subr.mxu0 %v984
    %v986 = vand.u32 %v131, 4294901760
    %987 = vmatpush1.msra.mxu0 %v986
    %v988 = vand.u32 %v138, 4294901760
    %989 = vmatprep.subr.mxu0 %v988
    %v990 = vand.u32 %v137, 4294901760
    %991 = vmatpush1.msra.mxu0 %v990
    %v992 = vand.u32 %v144, 4294901760
    %993 = vmatprep.subr.mxu0 %v992
    %v994 = vand.u32 %v143, 4294901760
    %995 = vmatpush1.msra.mxu0 %v994
    %996 = vmatprep.subr.mxu0 0.0
    %997 = vmatpush1.msra.mxu0 0.0
    %998 = vmatprep.subr.mxu0 0.0
    %999 = vmatpush1.msra.mxu0 0.0
    %1000 = vmatprep.subr.mxu0 0.0
    %1001 = vmatpush1.msra.mxu0 0.0
    %1002 = vmatprep.subr.mxu0 0.0
    %1003 = vmatpush1.msra.mxu0 0.0
    %1004 = vmatprep.subr.mxu0 0.0
    %1005 = vmatpush1.msra.mxu0 0.0
    %1006 = vmatprep.subr.mxu0 0.0
    %1007 = vmatpush1.msra.mxu0 0.0
    %1008 = vmatprep.subr.mxu0 0.0
    %1009 = vmatpush1.msra.mxu0 0.0
    %1010 = vmatprep.subr.mxu0 0.0
    %1011 = vmatpush1.msra.mxu0 0.0
    %1012 = vmatprep.subr.mxu0 0.0
    %1013 = vmatpush1.msra.mxu0 0.0
    %1014 = vmatprep.subr.mxu0 0.0
    %1015 = vmatpush1.msra.mxu0 0.0
    %1016 = vmatprep.subr.mxu0 0.0
    %1017 = vmatpush1.msra.mxu0 0.0
    %1018 = vmatprep.subr.mxu0 0.0
    %1019 = vmatpush1.msra.mxu0 0.0
    %1020 = vmatprep.subr.mxu0 0.0
    %1021 = vmatpush1.msra.mxu0 0.0
    %1022 = vmatprep.subr.mxu0 0.0
    %1023 = vmatpush1.msra.mxu0 0.0
    %1024 = vmatprep.subr.mxu0 0.0
    %1025 = vmatpush1.msra.mxu0 0.0
    %1026 = vmatprep.subr.mxu0 0.0
    %1027 = vmatpush1.msra.mxu0 0.0
    %1028 = vmatprep.mubr.f32.mxu0 0.0
    %v1029 = vand.u32 %v52, 4294901760
    %1030 = vmatmul.mubr.f32.gmra.mrb[0].mxu0 %v1029
    %v1031 = vpop.f32.mrb[0].mxu0
    %v1032 = vadd.f32 %v928, %v1031
    %v1033 = vpop.f32.mrb[0].mxu0
    %v1034 = vadd.f32 %v930, %v1033
    %1035 = vdwg.mxu0
    %v1036 = vand.u32 %v56, 4294901760
    %1037 = vmatprep.subr.mxu0 %v1036
    %v1038 = vand.u32 %v55, 4294901760
    %1039 = vmatpush1.msra.mxu0 %v1038
    %v1040 = vand.u32 %v62, 4294901760
    %1041 = vmatprep.subr.mxu0 %v1040
    %v1042 = vand.u32 %v61, 4294901760
    %1043 = vmatpush1.msra.mxu0 %v1042
    %v1044 = vand.u32 %v68, 4294901760
    %1045 = vmatprep.subr.mxu0 %v1044
    %v1046 = vand.u32 %v67, 4294901760
    %1047 = vmatpush1.msra.mxu0 %v1046
    %v1048 = vand.u32 %v74, 4294901760
    %1049 = vmatprep.subr.mxu0 %v1048
    %v1050 = vand.u32 %v73, 4294901760
    %1051 = vmatpush1.msra.mxu0 %v1050
    %v1052 = vand.u32 %v80, 4294901760
    %1053 = vmatprep.subr.mxu0 %v1052
    %v1054 = vand.u32 %v79, 4294901760
    %1055 = vmatpush1.msra.mxu0 %v1054
    %v1056 = vand.u32 %v86, 4294901760
    %1057 = vmatprep.subr.mxu0 %v1056
    %v1058 = vand.u32 %v85, 4294901760
    %1059 = vmatpush1.msra.mxu0 %v1058
    %v1060 = vand.u32 %v92, 4294901760
    %1061 = vmatprep.subr.mxu0 %v1060
    %v1062 = vand.u32 %v91, 4294901760
    %1063 = vmatpush1.msra.mxu0 %v1062
    %v1064 = vand.u32 %v98, 4294901760
    %1065 = vmatprep.subr.mxu0 %v1064
    %v1066 = vand.u32 %v97, 4294901760
    %1067 = vmatpush1.msra.mxu0 %v1066
    %v1068 = vand.u32 %v104, 4294901760
    %1069 = vmatprep.subr.mxu0 %v1068
    %v1070 = vand.u32 %v103, 4294901760
    %1071 = vmatpush1.msra.mxu0 %v1070
    %v1072 = vand.u32 %v110, 4294901760
    %1073 = vmatprep.subr.mxu0 %v1072
    %v1074 = vand.u32 %v109, 4294901760
    %1075 = vmatpush1.msra.mxu0 %v1074
    %v1076 = vand.u32 %v116, 4294901760
    %1077 = vmatprep.subr.mxu0 %v1076
    %v1078 = vand.u32 %v115, 4294901760
    %1079 = vmatpush1.msra.mxu0 %v1078
    %v1080 = vand.u32 %v122, 4294901760
    %1081 = vmatprep.subr.mxu0 %v1080
    %v1082 = vand.u32 %v121, 4294901760
    %1083 = vmatpush1.msra.mxu0 %v1082
    %v1084 = vand.u32 %v128, 4294901760
    %1085 = vmatprep.subr.mxu0 %v1084
    %v1086 = vand.u32 %v127, 4294901760
    %1087 = vmatpush1.msra.mxu0 %v1086
    %v1088 = vand.u32 %v134, 4294901760
    %1089 = vmatprep.subr.mxu0 %v1088
    %v1090 = vand.u32 %v133, 4294901760
    %1091 = vmatpush1.msra.mxu0 %v1090
    %v1092 = vand.u32 %v140, 4294901760
    %1093 = vmatprep.subr.mxu0 %v1092
    %v1094 = vand.u32 %v139, 4294901760
    %1095 = vmatpush1.msra.mxu0 %v1094
    %v1096 = vand.u32 %v146, 4294901760
    %1097 = vmatprep.subr.mxu0 %v1096
    %v1098 = vand.u32 %v145, 4294901760
    %1099 = vmatpush1.msra.mxu0 %v1098
    %1100 = vmatprep.subr.mxu0 0.0
    %1101 = vmatpush1.msra.mxu0 0.0
    %1102 = vmatprep.subr.mxu0 0.0
    %1103 = vmatpush1.msra.mxu0 0.0
    %1104 = vmatprep.subr.mxu0 0.0
    %1105 = vmatpush1.msra.mxu0 0.0
    %1106 = vmatprep.subr.mxu0 0.0
    %1107 = vmatpush1.msra.mxu0 0.0
    %1108 = vmatprep.subr.mxu0 0.0
    %1109 = vmatpush1.msra.mxu0 0.0
    %1110 = vmatprep.subr.mxu0 0.0
    %1111 = vmatpush1.msra.mxu0 0.0
    %1112 = vmatprep.subr.mxu0 0.0
    %1113 = vmatpush1.msra.mxu0 0.0
    %1114 = vmatprep.subr.mxu0 0.0
    %1115 = vmatpush1.msra.mxu0 0.0
    %1116 = vmatprep.subr.mxu0 0.0
    %1117 = vmatpush1.msra.mxu0 0.0
    %1118 = vmatprep.subr.mxu0 0.0
    %1119 = vmatpush1.msra.mxu0 0.0
    %1120 = vmatprep.subr.mxu0 0.0
    %1121 = vmatpush1.msra.mxu0 0.0
    %1122 = vmatprep.subr.mxu0 0.0
    %1123 = vmatpush1.msra.mxu0 0.0
    %1124 = vmatprep.subr.mxu0 0.0
    %1125 = vmatpush1.msra.mxu0 0.0
    %1126 = vmatprep.subr.mxu0 0.0
    %1127 = vmatpush1.msra.mxu0 0.0
    %1128 = vmatprep.subr.mxu0 0.0
    %1129 = vmatpush1.msra.mxu0 0.0
    %1130 = vmatprep.subr.mxu0 0.0
    %1131 = vmatpush1.msra.mxu0 0.0
    %1132 = vmatprep.mubr.f32.mxu0 0.0
    %v1133 = vand.u32 %v52, 4294901760
    %v1134 = vsub.f32 %v52, %v1133
    %v1135 = vand.u32 %v1134, 4294901760
    %v1136 = vsub.f32 %v1134, %v1135
    %v1137 = vand.u32 %v1136, 4294901760
    %1138 = vmatmul.mubr.f32.gmra.mrb[0].mxu0 %v1137
    %v1139 = vpop.f32.mrb[0].mxu0
    %v1140 = vadd.f32 %v162, %v1139
    %v1141 = vpop.f32.mrb[0].mxu0
    %v1142 = vadd.f32 %v166, %v1141
    %1143 = vdwg.mxu0
    %v1144 = vand.u32 %v56, 4294901760
    %v1145 = vsub.f32 %v56, %v1144
    %v1146 = vand.u32 %v1145, 4294901760
    %v1147 = vsub.f32 %v1145, %v1146
    %v1148 = vand.u32 %v1147, 4294901760
    %1149 = vmatprep.subr.mxu0 %v1148
    %v1150 = vand.u32 %v55, 4294901760
    %v1151 = vsub.f32 %v55, %v1150
    %v1152 = vand.u32 %v1151, 4294901760
    %v1153 = vsub.f32 %v1151, %v1152
    %v1154 = vand.u32 %v1153, 4294901760
    %1155 = vmatpush1.msra.mxu0 %v1154
    %v1156 = vand.u32 %v62, 4294901760
    %v1157 = vsub.f32 %v62, %v1156
    %v1158 = vand.u32 %v1157, 4294901760
    %v1159 = vsub.f32 %v1157, %v1158
    %v1160 = vand.u32 %v1159, 4294901760
    %1161 = vmatprep.subr.mxu0 %v1160
    %v1162 = vand.u32 %v61, 4294901760
    %v1163 = vsub.f32 %v61, %v1162
    %v1164 = vand.u32 %v1163, 4294901760
    %v1165 = vsub.f32 %v1163, %v1164
    %v1166 = vand.u32 %v1165, 4294901760
    %1167 = vmatpush1.msra.mxu0 %v1166
    %v1168 = vand.u32 %v68, 4294901760
    %v1169 = vsub.f32 %v68, %v1168
    %v1170 = vand.u32 %v1169, 4294901760
    %v1171 = vsub.f32 %v1169, %v1170
    %v1172 = vand.u32 %v1171, 4294901760
    %1173 = vmatprep.subr.mxu0 %v1172
    %v1174 = vand.u32 %v67, 4294901760
    %v1175 = vsub.f32 %v67, %v1174
    %v1176 = vand.u32 %v1175, 4294901760
    %v1177 = vsub.f32 %v1175, %v1176
    %v1178 = vand.u32 %v1177, 4294901760
    %1179 = vmatpush1.msra.mxu0 %v1178
    %v1180 = vand.u32 %v74, 4294901760
    %v1181 = vsub.f32 %v74, %v1180
    %v1182 = vand.u32 %v1181, 4294901760
    %v1183 = vsub.f32 %v1181, %v1182
    %v1184 = vand.u32 %v1183, 4294901760
    %1185 = vmatprep.subr.mxu0 %v1184
    %v1186 = vand.u32 %v73, 4294901760
    %v1187 = vsub.f32 %v73, %v1186
    %v1188 = vand.u32 %v1187, 4294901760
    %v1189 = vsub.f32 %v1187, %v1188
    %v1190 = vand.u32 %v1189, 4294901760
    %1191 = vmatpush1.msra.mxu0 %v1190
    %v1192 = vand.u32 %v80, 4294901760
    %v1193 = vsub.f32 %v80, %v1192
    %v1194 = vand.u32 %v1193, 4294901760
    %v1195 = vsub.f32 %v1193, %v1194
    %v1196 = vand.u32 %v1195, 4294901760
    %1197 = vmatprep.subr.mxu0 %v1196
    %v1198 = vand.u32 %v79, 4294901760
    %v1199 = vsub.f32 %v79, %v1198
    %v1200 = vand.u32 %v1199, 4294901760
    %v1201 = vsub.f32 %v1199, %v1200
    %v1202 = vand.u32 %v1201, 4294901760
    %1203 = vmatpush1.msra.mxu0 %v1202
    %v1204 = vand.u32 %v86, 4294901760
    %v1205 = vsub.f32 %v86, %v1204
    %v1206 = vand.u32 %v1205, 4294901760
    %v1207 = vsub.f32 %v1205, %v1206
    %v1208 = vand.u32 %v1207, 4294901760
    %1209 = vmatprep.subr.mxu0 %v1208
    %v1210 = vand.u32 %v85, 4294901760
    %v1211 = vsub.f32 %v85, %v1210
    %v1212 = vand.u32 %v1211, 4294901760
    %v1213 = vsub.f32 %v1211, %v1212
    %v1214 = vand.u32 %v1213, 4294901760
    %1215 = vmatpush1.msra.mxu0 %v1214
    %v1216 = vand.u32 %v92, 4294901760
    %v1217 = vsub.f32 %v92, %v1216
    %v1218 = vand.u32 %v1217, 4294901760
    %v1219 = vsub.f32 %v1217, %v1218
    %v1220 = vand.u32 %v1219, 4294901760
    %1221 = vmatprep.subr.mxu0 %v1220
    %v1222 = vand.u32 %v91, 4294901760
    %v1223 = vsub.f32 %v91, %v1222
    %v1224 = vand.u32 %v1223, 4294901760
    %v1225 = vsub.f32 %v1223, %v1224
    %v1226 = vand.u32 %v1225, 4294901760
    %1227 = vmatpush1.msra.mxu0 %v1226
    %v1228 = vand.u32 %v98, 4294901760
    %v1229 = vsub.f32 %v98, %v1228
    %v1230 = vand.u32 %v1229, 4294901760
    %v1231 = vsub.f32 %v1229, %v1230
    %v1232 = vand.u32 %v1231, 4294901760
    %1233 = vmatprep.subr.mxu0 %v1232
    %v1234 = vand.u32 %v97, 4294901760
    %v1235 = vsub.f32 %v97, %v1234
    %v1236 = vand.u32 %v1235, 4294901760
    %v1237 = vsub.f32 %v1235, %v1236
    %v1238 = vand.u32 %v1237, 4294901760
    %1239 = vmatpush1.msra.mxu0 %v1238
    %v1240 = vand.u32 %v104, 4294901760
    %v1241 = vsub.f32 %v104, %v1240
    %v1242 = vand.u32 %v1241, 4294901760
    %v1243 = vsub.f32 %v1241, %v1242
    %v1244 = vand.u32 %v1243, 4294901760
    %1245 = vmatprep.subr.mxu0 %v1244
    %v1246 = vand.u32 %v103, 4294901760
    %v1247 = vsub.f32 %v103, %v1246
    %v1248 = vand.u32 %v1247, 4294901760
    %v1249 = vsub.f32 %v1247, %v1248
    %v1250 = vand.u32 %v1249, 4294901760
    %1251 = vmatpush1.msra.mxu0 %v1250
    %v1252 = vand.u32 %v110, 4294901760
    %v1253 = vsub.f32 %v110, %v1252
    %v1254 = vand.u32 %v1253, 4294901760
    %v1255 = vsub.f32 %v1253, %v1254
    %v1256 = vand.u32 %v1255, 4294901760
    %1257 = vmatprep.subr.mxu0 %v1256
    %v1258 = vand.u32 %v109, 4294901760
    %v1259 = vsub.f32 %v109, %v1258
    %v1260 = vand.u32 %v1259, 4294901760
    %v1261 = vsub.f32 %v1259, %v1260
    %v1262 = vand.u32 %v1261, 4294901760
    %1263 = vmatpush1.msra.mxu0 %v1262
    %v1264 = vand.u32 %v116, 4294901760
    %v1265 = vsub.f32 %v116, %v1264
    %v1266 = vand.u32 %v1265, 4294901760
    %v1267 = vsub.f32 %v1265, %v1266
    %v1268 = vand.u32 %v1267, 4294901760
    %1269 = vmatprep.subr.mxu0 %v1268
    %v1270 = vand.u32 %v115, 4294901760
    %v1271 = vsub.f32 %v115, %v1270
    %v1272 = vand.u32 %v1271, 4294901760
    %v1273 = vsub.f32 %v1271, %v1272
    %v1274 = vand.u32 %v1273, 4294901760
    %1275 = vmatpush1.msra.mxu0 %v1274
    %v1276 = vand.u32 %v122, 4294901760
    %v1277 = vsub.f32 %v122, %v1276
    %v1278 = vand.u32 %v1277, 4294901760
    %v1279 = vsub.f32 %v1277, %v1278
    %v1280 = vand.u32 %v1279, 4294901760
    %1281 = vmatprep.subr.mxu0 %v1280
    %v1282 = vand.u32 %v121, 4294901760
    %v1283 = vsub.f32 %v121, %v1282
    %v1284 = vand.u32 %v1283, 4294901760
    %v1285 = vsub.f32 %v1283, %v1284
    %v1286 = vand.u32 %v1285, 4294901760
    %1287 = vmatpush1.msra.mxu0 %v1286
    %v1288 = vand.u32 %v128, 4294901760
    %v1289 = vsub.f32 %v128, %v1288
    %v1290 = vand.u32 %v1289, 4294901760
    %v1291 = vsub.f32 %v1289, %v1290
    %v1292 = vand.u32 %v1291, 4294901760
    %1293 = vmatprep.subr.mxu0 %v1292
    %v1294 = vand.u32 %v127, 4294901760
    %v1295 = vsub.f32 %v127, %v1294
    %v1296 = vand.u32 %v1295, 4294901760
    %v1297 = vsub.f32 %v1295, %v1296
    %v1298 = vand.u32 %v1297, 4294901760
    %1299 = vmatpush1.msra.mxu0 %v1298
    %v1300 = vand.u32 %v134, 4294901760
    %v1301 = vsub.f32 %v134, %v1300
    %v1302 = vand.u32 %v1301, 4294901760
    %v1303 = vsub.f32 %v1301, %v1302
    %v1304 = vand.u32 %v1303, 4294901760
    %1305 = vmatprep.subr.mxu0 %v1304
    %v1306 = vand.u32 %v133, 4294901760
    %v1307 = vsub.f32 %v133, %v1306
    %v1308 = vand.u32 %v1307, 4294901760
    %v1309 = vsub.f32 %v1307, %v1308
    %v1310 = vand.u32 %v1309, 4294901760
    %1311 = vmatpush1.msra.mxu0 %v1310
    %v1312 = vand.u32 %v140, 4294901760
    %v1313 = vsub.f32 %v140, %v1312
    %v1314 = vand.u32 %v1313, 4294901760
    %v1315 = vsub.f32 %v1313, %v1314
    %v1316 = vand.u32 %v1315, 4294901760
    %1317 = vmatprep.subr.mxu0 %v1316
    %v1318 = vand.u32 %v139, 4294901760
    %v1319 = vsub.f32 %v139, %v1318
    %v1320 = vand.u32 %v1319, 4294901760
    %v1321 = vsub.f32 %v1319, %v1320
    %v1322 = vand.u32 %v1321, 4294901760
    %1323 = vmatpush1.msra.mxu0 %v1322
    %v1324 = vand.u32 %v146, 4294901760
    %v1325 = vsub.f32 %v146, %v1324
    %v1326 = vand.u32 %v1325, 4294901760
    %v1327 = vsub.f32 %v1325, %v1326
    %v1328 = vand.u32 %v1327, 4294901760
    %1329 = vmatprep.subr.mxu0 %v1328
    %v1330 = vand.u32 %v145, 4294901760
    %v1331 = vsub.f32 %v145, %v1330
    %v1332 = vand.u32 %v1331, 4294901760
    %v1333 = vsub.f32 %v1331, %v1332
    %v1334 = vand.u32 %v1333, 4294901760
    %1335 = vmatpush1.msra.mxu0 %v1334
    %1336 = vmatprep.subr.mxu0 0.0
    %1337 = vmatpush1.msra.mxu0 0.0
    %1338 = vmatprep.subr.mxu0 0.0
    %1339 = vmatpush1.msra.mxu0 0.0
    %1340 = vmatprep.subr.mxu0 0.0
    %1341 = vmatpush1.msra.mxu0 0.0
    %1342 = vmatprep.subr.mxu0 0.0
    %1343 = vmatpush1.msra.mxu0 0.0
    %1344 = vmatprep.subr.mxu0 0.0
    %1345 = vmatpush1.msra.mxu0 0.0
    %1346 = vmatprep.subr.mxu0 0.0
    %1347 = vmatpush1.msra.mxu0 0.0
    %1348 = vmatprep.subr.mxu0 0.0
    %1349 = vmatpush1.msra.mxu0 0.0
    %1350 = vmatprep.subr.mxu0 0.0
    %1351 = vmatpush1.msra.mxu0 0.0
    %1352 = vmatprep.subr.mxu0 0.0
    %1353 = vmatpush1.msra.mxu0 0.0
    %1354 = vmatprep.subr.mxu0 0.0
    %1355 = vmatpush1.msra.mxu0 0.0
    %1356 = vmatprep.subr.mxu0 0.0
    %1357 = vmatpush1.msra.mxu0 0.0
    %1358 = vmatprep.subr.mxu0 0.0
    %1359 = vmatpush1.msra.mxu0 0.0
    %1360 = vmatprep.subr.mxu0 0.0
    %1361 = vmatpush1.msra.mxu0 0.0
    %1362 = vmatprep.subr.mxu0 0.0
    %1363 = vmatpush1.msra.mxu0 0.0
    %1364 = vmatprep.subr.mxu0 0.0
    %1365 = vmatpush1.msra.mxu0 0.0
    %1366 = vmatprep.subr.mxu0 0.0
    %1367 = vmatpush1.msra.mxu0 0.0
    %1368 = vmatprep.mubr.f32.mxu0 0.0
    %v1369 = vand.u32 %v52, 4294901760
    %1370 = vmatmul.mubr.f32.gmra.mrb[0].mxu0 %v1369
    %v1371 = vpop.f32.mrb[0].mxu0
    %v1372 = vadd.f32 %v1140, %v1371
    %v1373 = vpop.f32.mrb[0].mxu0
    %v1374 = vadd.f32 %v1142, %v1373
    %1375 = vdwg.mxu0
    %v1376 = vand.u32 %v56, 4294901760
    %v1377 = vsub.f32 %v56, %v1376
    %1378 = vmatprep.subr.mxu0 %v1377
    %v1379 = vand.u32 %v55, 4294901760
    %v1380 = vsub.f32 %v55, %v1379
    %1381 = vmatpush1.msra.mxu0 %v1380
    %v1382 = vand.u32 %v62, 4294901760
    %v1383 = vsub.f32 %v62, %v1382
    %1384 = vmatprep.subr.mxu0 %v1383
    %v1385 = vand.u32 %v61, 4294901760
    %v1386 = vsub.f32 %v61, %v1385
    %1387 = vmatpush1.msra.mxu0 %v1386
    %v1388 = vand.u32 %v68, 4294901760
    %v1389 = vsub.f32 %v68, %v1388
    %1390 = vmatprep.subr.mxu0 %v1389
    %v1391 = vand.u32 %v67, 4294901760
    %v1392 = vsub.f32 %v67, %v1391
    %1393 = vmatpush1.msra.mxu0 %v1392
    %v1394 = vand.u32 %v74, 4294901760
    %v1395 = vsub.f32 %v74, %v1394
    %1396 = vmatprep.subr.mxu0 %v1395
    %v1397 = vand.u32 %v73, 4294901760
    %v1398 = vsub.f32 %v73, %v1397
    %1399 = vmatpush1.msra.mxu0 %v1398
    %v1400 = vand.u32 %v80, 4294901760
    %v1401 = vsub.f32 %v80, %v1400
    %1402 = vmatprep.subr.mxu0 %v1401
    %v1403 = vand.u32 %v79, 4294901760
    %v1404 = vsub.f32 %v79, %v1403
    %1405 = vmatpush1.msra.mxu0 %v1404
    %v1406 = vand.u32 %v86, 4294901760
    %v1407 = vsub.f32 %v86, %v1406
    %1408 = vmatprep.subr.mxu0 %v1407
    %v1409 = vand.u32 %v85, 4294901760
    %v1410 = vsub.f32 %v85, %v1409
    %1411 = vmatpush1.msra.mxu0 %v1410
    %v1412 = vand.u32 %v92, 4294901760
    %v1413 = vsub.f32 %v92, %v1412
    %1414 = vmatprep.subr.mxu0 %v1413
    %v1415 = vand.u32 %v91, 4294901760
    %v1416 = vsub.f32 %v91, %v1415
    %1417 = vmatpush1.msra.mxu0 %v1416
    %v1418 = vand.u32 %v98, 4294901760
    %v1419 = vsub.f32 %v98, %v1418
    %1420 = vmatprep.subr.mxu0 %v1419
    %v1421 = vand.u32 %v97, 4294901760
    %v1422 = vsub.f32 %v97, %v1421
    %1423 = vmatpush1.msra.mxu0 %v1422
    %v1424 = vand.u32 %v104, 4294901760
    %v1425 = vsub.f32 %v104, %v1424
    %1426 = vmatprep.subr.mxu0 %v1425
    %v1427 = vand.u32 %v103, 4294901760
    %v1428 = vsub.f32 %v103, %v1427
    %1429 = vmatpush1.msra.mxu0 %v1428
    %v1430 = vand.u32 %v110, 4294901760
    %v1431 = vsub.f32 %v110, %v1430
    %1432 = vmatprep.subr.mxu0 %v1431
    %v1433 = vand.u32 %v109, 4294901760
    %v1434 = vsub.f32 %v109, %v1433
    %1435 = vmatpush1.msra.mxu0 %v1434
    %v1436 = vand.u32 %v116, 4294901760
    %v1437 = vsub.f32 %v116, %v1436
    %1438 = vmatprep.subr.mxu0 %v1437
    %v1439 = vand.u32 %v115, 4294901760
    %v1440 = vsub.f32 %v115, %v1439
    %1441 = vmatpush1.msra.mxu0 %v1440
    %v1442 = vand.u32 %v122, 4294901760
    %v1443 = vsub.f32 %v122, %v1442
    %1444 = vmatprep.subr.mxu0 %v1443
    %v1445 = vand.u32 %v121, 4294901760
    %v1446 = vsub.f32 %v121, %v1445
    %1447 = vmatpush1.msra.mxu0 %v1446
    %v1448 = vand.u32 %v128, 4294901760
    %v1449 = vsub.f32 %v128, %v1448
    %1450 = vmatprep.subr.mxu0 %v1449
    %v1451 = vand.u32 %v127, 4294901760
    %v1452 = vsub.f32 %v127, %v1451
    %1453 = vmatpush1.msra.mxu0 %v1452
    %v1454 = vand.u32 %v134, 4294901760
    %v1455 = vsub.f32 %v134, %v1454
    %1456 = vmatprep.subr.mxu0 %v1455
    %v1457 = vand.u32 %v133, 4294901760
    %v1458 = vsub.f32 %v133, %v1457
    %1459 = vmatpush1.msra.mxu0 %v1458
    %v1460 = vand.u32 %v140, 4294901760
    %v1461 = vsub.f32 %v140, %v1460
    %1462 = vmatprep.subr.mxu0 %v1461
    %v1463 = vand.u32 %v139, 4294901760
    %v1464 = vsub.f32 %v139, %v1463
    %1465 = vmatpush1.msra.mxu0 %v1464
    %v1466 = vand.u32 %v146, 4294901760
    %v1467 = vsub.f32 %v146, %v1466
    %1468 = vmatprep.subr.mxu0 %v1467
    %v1469 = vand.u32 %v145, 4294901760
    %v1470 = vsub.f32 %v145, %v1469
    %1471 = vmatpush1.msra.mxu0 %v1470
    %1472 = vmatprep.subr.mxu0 0.0
    %1473 = vmatpush1.msra.mxu0 0.0
    %1474 = vmatprep.subr.mxu0 0.0
    %1475 = vmatpush1.msra.mxu0 0.0
    %1476 = vmatprep.subr.mxu0 0.0
    %1477 = vmatpush1.msra.mxu0 0.0
    %1478 = vmatprep.subr.mxu0 0.0
    %1479 = vmatpush1.msra.mxu0 0.0
    %1480 = vmatprep.subr.mxu0 0.0
    %1481 = vmatpush1.msra.mxu0 0.0
    %1482 = vmatprep.subr.mxu0 0.0
    %1483 = vmatpush1.msra.mxu0 0.0
    %1484 = vmatprep.subr.mxu0 0.0
    %1485 = vmatpush1.msra.mxu0 0.0
    %1486 = vmatprep.subr.mxu0 0.0
    %1487 = vmatpush1.msra.mxu0 0.0
    %1488 = vmatprep.subr.mxu0 0.0
    %1489 = vmatpush1.msra.mxu0 0.0
    %1490 = vmatprep.subr.mxu0 0.0
    %1491 = vmatpush1.msra.mxu0 0.0
    %1492 = vmatprep.subr.mxu0 0.0
    %1493 = vmatpush1.msra.mxu0 0.0
    %1494 = vmatprep.subr.mxu0 0.0
    %1495 = vmatpush1.msra.mxu0 0.0
    %1496 = vmatprep.subr.mxu0 0.0
    %1497 = vmatpush1.msra.mxu0 0.0
    %1498 = vmatprep.subr.mxu0 0.0
    %1499 = vmatpush1.msra.mxu0 0.0
    %1500 = vmatprep.subr.mxu0 0.0
    %1501 = vmatpush1.msra.mxu0 0.0
    %1502 = vmatprep.subr.mxu0 0.0
    %1503 = vmatpush1.msra.mxu0 0.0
    %1504 = vmatprep.mubr.f32.mxu0 0.0
    %v1505 = vand.u32 %v52, 4294901760
    %v1506 = vsub.f32 %v52, %v1505
    %1507 = vmatmul.mubr.f32.gmra.mrb[0].mxu0 %v1506
    %v1508 = vpop.f32.mrb[0].mxu0
    %v1509 = vadd.f32 %v1372, %v1508
    %v1510 = vpop.f32.mrb[0].mxu0
    %v1511 = vadd.f32 %v1374, %v1510
    %1512 = vdwg.mxu0
    %v1513 = vand.u32 %v56, 4294901760
    %1514 = vmatprep.subr.mxu0 %v1513
    %v1515 = vand.u32 %v55, 4294901760
    %1516 = vmatpush1.msra.mxu0 %v1515
    %v1517 = vand.u32 %v62, 4294901760
    %1518 = vmatprep.subr.mxu0 %v1517
    %v1519 = vand.u32 %v61, 4294901760
    %1520 = vmatpush1.msra.mxu0 %v1519
    %v1521 = vand.u32 %v68, 4294901760
    %1522 = vmatprep.subr.mxu0 %v1521
    %v1523 = vand.u32 %v67, 4294901760
    %1524 = vmatpush1.msra.mxu0 %v1523
    %v1525 = vand.u32 %v74, 4294901760
    %1526 = vmatprep.subr.mxu0 %v1525
    %v1527 = vand.u32 %v73, 4294901760
    %1528 = vmatpush1.msra.mxu0 %v1527
    %v1529 = vand.u32 %v80, 4294901760
    %1530 = vmatprep.subr.mxu0 %v1529
    %v1531 = vand.u32 %v79, 4294901760
    %1532 = vmatpush1.msra.mxu0 %v1531
    %v1533 = vand.u32 %v86, 4294901760
    %1534 = vmatprep.subr.mxu0 %v1533
    %v1535 = vand.u32 %v85, 4294901760
    %1536 = vmatpush1.msra.mxu0 %v1535
    %v1537 = vand.u32 %v92, 4294901760
    %1538 = vmatprep.subr.mxu0 %v1537
    %v1539 = vand.u32 %v91, 4294901760
    %1540 = vmatpush1.msra.mxu0 %v1539
    %v1541 = vand.u32 %v98, 4294901760
    %1542 = vmatprep.subr.mxu0 %v1541
    %v1543 = vand.u32 %v97, 4294901760
    %1544 = vmatpush1.msra.mxu0 %v1543
    %v1545 = vand.u32 %v104, 4294901760
    %1546 = vmatprep.subr.mxu0 %v1545
    %v1547 = vand.u32 %v103, 4294901760
    %1548 = vmatpush1.msra.mxu0 %v1547
    %v1549 = vand.u32 %v110, 4294901760
    %1550 = vmatprep.subr.mxu0 %v1549
    %v1551 = vand.u32 %v109, 4294901760
    %1552 = vmatpush1.msra.mxu0 %v1551
    %v1553 = vand.u32 %v116, 4294901760
    %1554 = vmatprep.subr.mxu0 %v1553
    %v1555 = vand.u32 %v115, 4294901760
    %1556 = vmatpush1.msra.mxu0 %v1555
    %v1557 = vand.u32 %v122, 4294901760
    %1558 = vmatprep.subr.mxu0 %v1557
    %v1559 = vand.u32 %v121, 4294901760
    %1560 = vmatpush1.msra.mxu0 %v1559
    %v1561 = vand.u32 %v128, 4294901760
    %1562 = vmatprep.subr.mxu0 %v1561
    %v1563 = vand.u32 %v127, 4294901760
    %1564 = vmatpush1.msra.mxu0 %v1563
    %v1565 = vand.u32 %v134, 4294901760
    %1566 = vmatprep.subr.mxu0 %v1565
    %v1567 = vand.u32 %v133, 4294901760
    %1568 = vmatpush1.msra.mxu0 %v1567
    %v1569 = vand.u32 %v140, 4294901760
    %1570 = vmatprep.subr.mxu0 %v1569
    %v1571 = vand.u32 %v139, 4294901760
    %1572 = vmatpush1.msra.mxu0 %v1571
    %v1573 = vand.u32 %v146, 4294901760
    %1574 = vmatprep.subr.mxu0 %v1573
    %v1575 = vand.u32 %v145, 4294901760
    %1576 = vmatpush1.msra.mxu0 %v1575
    %1577 = vmatprep.subr.mxu0 0.0
    %1578 = vmatpush1.msra.mxu0 0.0
    %1579 = vmatprep.subr.mxu0 0.0
    %1580 = vmatpush1.msra.mxu0 0.0
    %1581 = vmatprep.subr.mxu0 0.0
    %1582 = vmatpush1.msra.mxu0 0.0
    %1583 = vmatprep.subr.mxu0 0.0
    %1584 = vmatpush1.msra.mxu0 0.0
    %1585 = vmatprep.subr.mxu0 0.0
    %1586 = vmatpush1.msra.mxu0 0.0
    %1587 = vmatprep.subr.mxu0 0.0
    %1588 = vmatpush1.msra.mxu0 0.0
    %1589 = vmatprep.subr.mxu0 0.0
    %1590 = vmatpush1.msra.mxu0 0.0
    %1591 = vmatprep.subr.mxu0 0.0
    %1592 = vmatpush1.msra.mxu0 0.0
    %1593 = vmatprep.subr.mxu0 0.0
    %1594 = vmatpush1.msra.mxu0 0.0
    %1595 = vmatprep.subr.mxu0 0.0
    %1596 = vmatpush1.msra.mxu0 0.0
    %1597 = vmatprep.subr.mxu0 0.0
    %1598 = vmatpush1.msra.mxu0 0.0
    %1599 = vmatprep.subr.mxu0 0.0
    %1600 = vmatpush1.msra.mxu0 0.0
    %1601 = vmatprep.subr.mxu0 0.0
    %1602 = vmatpush1.msra.mxu0 0.0
    %1603 = vmatprep.subr.mxu0 0.0
    %1604 = vmatpush1.msra.mxu0 0.0
    %1605 = vmatprep.subr.mxu0 0.0
    %1606 = vmatpush1.msra.mxu0 0.0
    %1607 = vmatprep.subr.mxu0 0.0
    %1608 = vmatpush1.msra.mxu0 0.0
    %1609 = vmatprep.mubr.f32.mxu0 0.0
    %v1610 = vand.u32 %v52, 4294901760
    %v1611 = vsub.f32 %v52, %v1610
    %v1612 = vand.u32 %v1611, 4294901760
    %1613 = vmatmul.mubr.f32.gmra.mrb[0].mxu0 %v1612
    %v1614 = vpop.f32.mrb[0].mxu0
    %v1615 = vadd.f32 %v1509, %v1614
    %v1616 = vpop.f32.mrb[0].mxu0
    %v1617 = vadd.f32 %v1511, %v1616
    %1618 = vdwg.mxu0
    %v1619 = vand.u32 %v56, 4294901760
    %v1620 = vsub.f32 %v56, %v1619
    %v1621 = vand.u32 %v1620, 4294901760
    %1622 = vmatprep.subr.mxu0 %v1621
    %v1623 = vand.u32 %v55, 4294901760
    %v1624 = vsub.f32 %v55, %v1623
    %v1625 = vand.u32 %v1624, 4294901760
    %1626 = vmatpush1.msra.mxu0 %v1625
    %v1627 = vand.u32 %v62, 4294901760
    %v1628 = vsub.f32 %v62, %v1627
    %v1629 = vand.u32 %v1628, 4294901760
    %1630 = vmatprep.subr.mxu0 %v1629
    %v1631 = vand.u32 %v61, 4294901760
    %v1632 = vsub.f32 %v61, %v1631
    %v1633 = vand.u32 %v1632, 4294901760
    %1634 = vmatpush1.msra.mxu0 %v1633
    %v1635 = vand.u32 %v68, 4294901760
    %v1636 = vsub.f32 %v68, %v1635
    %v1637 = vand.u32 %v1636, 4294901760
    %1638 = vmatprep.subr.mxu0 %v1637
    %v1639 = vand.u32 %v67, 4294901760
    %v1640 = vsub.f32 %v67, %v1639
    %v1641 = vand.u32 %v1640, 4294901760
    %1642 = vmatpush1.msra.mxu0 %v1641
    %v1643 = vand.u32 %v74, 4294901760
    %v1644 = vsub.f32 %v74, %v1643
    %v1645 = vand.u32 %v1644, 4294901760
    %1646 = vmatprep.subr.mxu0 %v1645
    %v1647 = vand.u32 %v73, 4294901760
    %v1648 = vsub.f32 %v73, %v1647
    %v1649 = vand.u32 %v1648, 4294901760
    %1650 = vmatpush1.msra.mxu0 %v1649
    %v1651 = vand.u32 %v80, 4294901760
    %v1652 = vsub.f32 %v80, %v1651
    %v1653 = vand.u32 %v1652, 4294901760
    %1654 = vmatprep.subr.mxu0 %v1653
    %v1655 = vand.u32 %v79, 4294901760
    %v1656 = vsub.f32 %v79, %v1655
    %v1657 = vand.u32 %v1656, 4294901760
    %1658 = vmatpush1.msra.mxu0 %v1657
    %v1659 = vand.u32 %v86, 4294901760
    %v1660 = vsub.f32 %v86, %v1659
    %v1661 = vand.u32 %v1660, 4294901760
    %1662 = vmatprep.subr.mxu0 %v1661
    %v1663 = vand.u32 %v85, 4294901760
    %v1664 = vsub.f32 %v85, %v1663
    %v1665 = vand.u32 %v1664, 4294901760
    %1666 = vmatpush1.msra.mxu0 %v1665
    %v1667 = vand.u32 %v92, 4294901760
    %v1668 = vsub.f32 %v92, %v1667
    %v1669 = vand.u32 %v1668, 4294901760
    %1670 = vmatprep.subr.mxu0 %v1669
    %v1671 = vand.u32 %v91, 4294901760
    %v1672 = vsub.f32 %v91, %v1671
    %v1673 = vand.u32 %v1672, 4294901760
    %1674 = vmatpush1.msra.mxu0 %v1673
    %v1675 = vand.u32 %v98, 4294901760
    %v1676 = vsub.f32 %v98, %v1675
    %v1677 = vand.u32 %v1676, 4294901760
    %1678 = vmatprep.subr.mxu0 %v1677
    %v1679 = vand.u32 %v97, 4294901760
    %v1680 = vsub.f32 %v97, %v1679
    %v1681 = vand.u32 %v1680, 4294901760
    %1682 = vmatpush1.msra.mxu0 %v1681
    %v1683 = vand.u32 %v104, 4294901760
    %v1684 = vsub.f32 %v104, %v1683
    %v1685 = vand.u32 %v1684, 4294901760
    %1686 = vmatprep.subr.mxu0 %v1685
    %v1687 = vand.u32 %v103, 4294901760
    %v1688 = vsub.f32 %v103, %v1687
    %v1689 = vand.u32 %v1688, 4294901760
    %1690 = vmatpush1.msra.mxu0 %v1689
    %v1691 = vand.u32 %v110, 4294901760
    %v1692 = vsub.f32 %v110, %v1691
    %v1693 = vand.u32 %v1692, 4294901760
    %1694 = vmatprep.subr.mxu0 %v1693
    %v1695 = vand.u32 %v109, 4294901760
    %v1696 = vsub.f32 %v109, %v1695
    %v1697 = vand.u32 %v1696, 4294901760
    %1698 = vmatpush1.msra.mxu0 %v1697
    %v1699 = vand.u32 %v116, 4294901760
    %v1700 = vsub.f32 %v116, %v1699
    %v1701 = vand.u32 %v1700, 4294901760
    %1702 = vmatprep.subr.mxu0 %v1701
    %v1703 = vand.u32 %v115, 4294901760
    %v1704 = vsub.f32 %v115, %v1703
    %v1705 = vand.u32 %v1704, 4294901760
    %1706 = vmatpush1.msra.mxu0 %v1705
    %v1707 = vand.u32 %v122, 4294901760
    %v1708 = vsub.f32 %v122, %v1707
    %v1709 = vand.u32 %v1708, 4294901760
    %1710 = vmatprep.subr.mxu0 %v1709
    %v1711 = vand.u32 %v121, 4294901760
    %v1712 = vsub.f32 %v121, %v1711
    %v1713 = vand.u32 %v1712, 4294901760
    %1714 = vmatpush1.msra.mxu0 %v1713
    %v1715 = vand.u32 %v128, 4294901760
    %v1716 = vsub.f32 %v128, %v1715
    %v1717 = vand.u32 %v1716, 4294901760
    %1718 = vmatprep.subr.mxu0 %v1717
    %v1719 = vand.u32 %v127, 4294901760
    %v1720 = vsub.f32 %v127, %v1719
    %v1721 = vand.u32 %v1720, 4294901760
    %1722 = vmatpush1.msra.mxu0 %v1721
    %v1723 = vand.u32 %v134, 4294901760
    %v1724 = vsub.f32 %v134, %v1723
    %v1725 = vand.u32 %v1724, 4294901760
    %1726 = vmatprep.subr.mxu0 %v1725
    %v1727 = vand.u32 %v133, 4294901760
    %v1728 = vsub.f32 %v133, %v1727
    %v1729 = vand.u32 %v1728, 4294901760
    %1730 = vmatpush1.msra.mxu0 %v1729
    %v1731 = vand.u32 %v140, 4294901760
    %v1732 = vsub.f32 %v140, %v1731
    %v1733 = vand.u32 %v1732, 4294901760
    %1734 = vmatprep.subr.mxu0 %v1733
    %v1735 = vand.u32 %v139, 4294901760
    %v1736 = vsub.f32 %v139, %v1735
    %v1737 = vand.u32 %v1736, 4294901760
    %1738 = vmatpush1.msra.mxu0 %v1737
    %v1739 = vand.u32 %v146, 4294901760
    %v1740 = vsub.f32 %v146, %v1739
    %v1741 = vand.u32 %v1740, 4294901760
    %1742 = vmatprep.subr.mxu0 %v1741
    %v1743 = vand.u32 %v145, 4294901760
    %v1744 = vsub.f32 %v145, %v1743
    %v1745 = vand.u32 %v1744, 4294901760
    %1746 = vmatpush1.msra.mxu0 %v1745
    %1747 = vmatprep.subr.mxu0 0.0
    %1748 = vmatpush1.msra.mxu0 0.0
    %1749 = vmatprep.subr.mxu0 0.0
    %1750 = vmatpush1.msra.mxu0 0.0
    %1751 = vmatprep.subr.mxu0 0.0
    %1752 = vmatpush1.msra.mxu0 0.0
    %1753 = vmatprep.subr.mxu0 0.0
    %1754 = vmatpush1.msra.mxu0 0.0
    %1755 = vmatprep.subr.mxu0 0.0
    %1756 = vmatpush1.msra.mxu0 0.0
    %1757 = vmatprep.subr.mxu0 0.0
    %1758 = vmatpush1.msra.mxu0 0.0
    %1759 = vmatprep.subr.mxu0 0.0
    %1760 = vmatpush1.msra.mxu0 0.0
    %1761 = vmatprep.subr.mxu0 0.0
    %1762 = vmatpush1.msra.mxu0 0.0
    %1763 = vmatprep.subr.mxu0 0.0
    %1764 = vmatpush1.msra.mxu0 0.0
    %1765 = vmatprep.subr.mxu0 0.0
    %1766 = vmatpush1.msra.mxu0 0.0
    %1767 = vmatprep.subr.mxu0 0.0
    %1768 = vmatpush1.msra.mxu0 0.0
    %1769 = vmatprep.subr.mxu0 0.0
    %1770 = vmatpush1.msra.mxu0 0.0
    %1771 = vmatprep.subr.mxu0 0.0
    %1772 = vmatpush1.msra.mxu0 0.0
    %1773 = vmatprep.subr.mxu0 0.0
    %1774 = vmatpush1.msra.mxu0 0.0
    %1775 = vmatprep.subr.mxu0 0.0
    %1776 = vmatpush1.msra.mxu0 0.0
    %1777 = vmatprep.subr.mxu0 0.0
    %1778 = vmatpush1.msra.mxu0 0.0
    %1779 = vmatprep.mubr.f32.mxu0 0.0
    %v1780 = vand.u32 %v52, 4294901760
    %1781 = vmatmul.mubr.f32.gmra.mrb[0].mxu0 %v1780
    %v1782 = vpop.f32.mrb[0].mxu0
    %v1783 = vadd.f32 %v1615, %v1782
    %v1784 = vpop.f32.mrb[0].mxu0
    %v1785 = vadd.f32 %v1617, %v1784
    %1786 = vdwg.mxu0
    %v1787 = vand.u32 %v56, 4294901760
    %1788 = vmatprep.subr.mxu0 %v1787
    %v1789 = vand.u32 %v55, 4294901760
    %1790 = vmatpush1.msra.mxu0 %v1789
    %v1791 = vand.u32 %v62, 4294901760
    %1792 = vmatprep.subr.mxu0 %v1791
    %v1793 = vand.u32 %v61, 4294901760
    %1794 = vmatpush1.msra.mxu0 %v1793
    %v1795 = vand.u32 %v68, 4294901760
    %1796 = vmatprep.subr.mxu0 %v1795
    %v1797 = vand.u32 %v67, 4294901760
    %1798 = vmatpush1.msra.mxu0 %v1797
    %v1799 = vand.u32 %v74, 4294901760
    %1800 = vmatprep.subr.mxu0 %v1799
    %v1801 = vand.u32 %v73, 4294901760
    %1802 = vmatpush1.msra.mxu0 %v1801
    %v1803 = vand.u32 %v80, 4294901760
    %1804 = vmatprep.subr.mxu0 %v1803
    %v1805 = vand.u32 %v79, 4294901760
    %1806 = vmatpush1.msra.mxu0 %v1805
    %v1807 = vand.u32 %v86, 4294901760
    %1808 = vmatprep.subr.mxu0 %v1807
    %v1809 = vand.u32 %v85, 4294901760
    %1810 = vmatpush1.msra.mxu0 %v1809
    %v1811 = vand.u32 %v92, 4294901760
    %1812 = vmatprep.subr.mxu0 %v1811
    %v1813 = vand.u32 %v91, 4294901760
    %1814 = vmatpush1.msra.mxu0 %v1813
    %v1815 = vand.u32 %v98, 4294901760
    %1816 = vmatprep.subr.mxu0 %v1815
    %v1817 = vand.u32 %v97, 4294901760
    %1818 = vmatpush1.msra.mxu0 %v1817
    %v1819 = vand.u32 %v104, 4294901760
    %1820 = vmatprep.subr.mxu0 %v1819
    %v1821 = vand.u32 %v103, 4294901760
    %1822 = vmatpush1.msra.mxu0 %v1821
    %v1823 = vand.u32 %v110, 4294901760
    %1824 = vmatprep.subr.mxu0 %v1823
    %v1825 = vand.u32 %v109, 4294901760
    %1826 = vmatpush1.msra.mxu0 %v1825
    %v1827 = vand.u32 %v116, 4294901760
    %1828 = vmatprep.subr.mxu0 %v1827
    %v1829 = vand.u32 %v115, 4294901760
    %1830 = vmatpush1.msra.mxu0 %v1829
    %v1831 = vand.u32 %v122, 4294901760
    %1832 = vmatprep.subr.mxu0 %v1831
    %v1833 = vand.u32 %v121, 4294901760
    %1834 = vmatpush1.msra.mxu0 %v1833
    %v1835 = vand.u32 %v128, 4294901760
    %1836 = vmatprep.subr.mxu0 %v1835
    %v1837 = vand.u32 %v127, 4294901760
    %1838 = vmatpush1.msra.mxu0 %v1837
    %v1839 = vand.u32 %v134, 4294901760
    %1840 = vmatprep.subr.mxu0 %v1839
    %v1841 = vand.u32 %v133, 4294901760
    %1842 = vmatpush1.msra.mxu0 %v1841
    %v1843 = vand.u32 %v140, 4294901760
    %1844 = vmatprep.subr.mxu0 %v1843
    %v1845 = vand.u32 %v139, 4294901760
    %1846 = vmatpush1.msra.mxu0 %v1845
    %v1847 = vand.u32 %v146, 4294901760
    %1848 = vmatprep.subr.mxu0 %v1847
    %v1849 = vand.u32 %v145, 4294901760
    %1850 = vmatpush1.msra.mxu0 %v1849
    %1851 = vmatprep.subr.mxu0 0.0
    %1852 = vmatpush1.msra.mxu0 0.0
    %1853 = vmatprep.subr.mxu0 0.0
    %1854 = vmatpush1.msra.mxu0 0.0
    %1855 = vmatprep.subr.mxu0 0.0
    %1856 = vmatpush1.msra.mxu0 0.0
    %1857 = vmatprep.subr.mxu0 0.0
    %1858 = vmatpush1.msra.mxu0 0.0
    %1859 = vmatprep.subr.mxu0 0.0
    %1860 = vmatpush1.msra.mxu0 0.0
    %1861 = vmatprep.subr.mxu0 0.0
    %1862 = vmatpush1.msra.mxu0 0.0
    %1863 = vmatprep.subr.mxu0 0.0
    %1864 = vmatpush1.msra.mxu0 0.0
    %1865 = vmatprep.subr.mxu0 0.0
    %1866 = vmatpush1.msra.mxu0 0.0
    %1867 = vmatprep.subr.mxu0 0.0
    %1868 = vmatpush1.msra.mxu0 0.0
    %1869 = vmatprep.subr.mxu0 0.0
    %1870 = vmatpush1.msra.mxu0 0.0
    %1871 = vmatprep.subr.mxu0 0.0
    %1872 = vmatpush1.msra.mxu0 0.0
    %1873 = vmatprep.subr.mxu0 0.0
    %1874 = vmatpush1.msra.mxu0 0.0
    %1875 = vmatprep.subr.mxu0 0.0
    %1876 = vmatpush1.msra.mxu0 0.0
    %1877 = vmatprep.subr.mxu0 0.0
    %1878 = vmatpush1.msra.mxu0 0.0
    %1879 = vmatprep.subr.mxu0 0.0
    %1880 = vmatpush1.msra.mxu0 0.0
    %1881 = vmatprep.subr.mxu0 0.0
    %1882 = vmatpush1.msra.mxu0 0.0
    %1883 = vmatprep.mubr.f32.mxu0 0.0
    %v1884 = vand.u32 %v52, 4294901760
    %1885 = vmatmul.mubr.f32.gmra.mrb[0].mxu0 %v1884
    %v1886 = vpop.f32.mrb[0].mxu0
    %v1887 = vadd.f32 %v1783, %v1886
    %v1888 = vpop.f32.mrb[0].mxu0
    %v1889 = vadd.f32 %v1785, %v1888
    %1890 = vdwg.mxu0
    %v1891 = vand.u32 %v58, 4294901760
    %1892 = vmatprep.subr.mxu0 %v1891
    %v1893 = vand.u32 %v57, 4294901760
    %1894 = vmatpush1.msra.mxu0 %v1893
    %v1895 = vand.u32 %v64, 4294901760
    %1896 = vmatprep.subr.mxu0 %v1895
    %v1897 = vand.u32 %v63, 4294901760
    %1898 = vmatpush1.msra.mxu0 %v1897
    %v1899 = vand.u32 %v70, 4294901760
    %1900 = vmatprep.subr.mxu0 %v1899
    %v1901 = vand.u32 %v69, 4294901760
    %1902 = vmatpush1.msra.mxu0 %v1901
    %v1903 = vand.u32 %v76, 4294901760
    %1904 = vmatprep.subr.mxu0 %v1903
    %v1905 = vand.u32 %v75, 4294901760
    %1906 = vmatpush1.msra.mxu0 %v1905
    %v1907 = vand.u32 %v82, 4294901760
    %1908 = vmatprep.subr.mxu0 %v1907
    %v1909 = vand.u32 %v81, 4294901760
    %1910 = vmatpush1.msra.mxu0 %v1909
    %v1911 = vand.u32 %v88, 4294901760
    %1912 = vmatprep.subr.mxu0 %v1911
    %v1913 = vand.u32 %v87, 4294901760
    %1914 = vmatpush1.msra.mxu0 %v1913
    %v1915 = vand.u32 %v94, 4294901760
    %1916 = vmatprep.subr.mxu0 %v1915
    %v1917 = vand.u32 %v93, 4294901760
    %1918 = vmatpush1.msra.mxu0 %v1917
    %v1919 = vand.u32 %v100, 4294901760
    %1920 = vmatprep.subr.mxu0 %v1919
    %v1921 = vand.u32 %v99, 4294901760
    %1922 = vmatpush1.msra.mxu0 %v1921
    %v1923 = vand.u32 %v106, 4294901760
    %1924 = vmatprep.subr.mxu0 %v1923
    %v1925 = vand.u32 %v105, 4294901760
    %1926 = vmatpush1.msra.mxu0 %v1925
    %v1927 = vand.u32 %v112, 4294901760
    %1928 = vmatprep.subr.mxu0 %v1927
    %v1929 = vand.u32 %v111, 4294901760
    %1930 = vmatpush1.msra.mxu0 %v1929
    %v1931 = vand.u32 %v118, 4294901760
    %1932 = vmatprep.subr.mxu0 %v1931
    %v1933 = vand.u32 %v117, 4294901760
    %1934 = vmatpush1.msra.mxu0 %v1933
    %v1935 = vand.u32 %v124, 4294901760
    %1936 = vmatprep.subr.mxu0 %v1935
    %v1937 = vand.u32 %v123, 4294901760
    %1938 = vmatpush1.msra.mxu0 %v1937
    %v1939 = vand.u32 %v130, 4294901760
    %1940 = vmatprep.subr.mxu0 %v1939
    %v1941 = vand.u32 %v129, 4294901760
    %1942 = vmatpush1.msra.mxu0 %v1941
    %v1943 = vand.u32 %v136, 4294901760
    %1944 = vmatprep.subr.mxu0 %v1943
    %v1945 = vand.u32 %v135, 4294901760
    %1946 = vmatpush1.msra.mxu0 %v1945
    %v1947 = vand.u32 %v142, 4294901760
    %1948 = vmatprep.subr.mxu0 %v1947
    %v1949 = vand.u32 %v141, 4294901760
    %1950 = vmatpush1.msra.mxu0 %v1949
    %v1951 = vand.u32 %v148, 4294901760
    %1952 = vmatprep.subr.mxu0 %v1951
    %v1953 = vand.u32 %v147, 4294901760
    %1954 = vmatpush1.msra.mxu0 %v1953
    %1955 = vmatprep.subr.mxu0 0.0
    %1956 = vmatpush1.msra.mxu0 0.0
    %1957 = vmatprep.subr.mxu0 0.0
    %1958 = vmatpush1.msra.mxu0 0.0
    %1959 = vmatprep.subr.mxu0 0.0
    %1960 = vmatpush1.msra.mxu0 0.0
    %1961 = vmatprep.subr.mxu0 0.0
    %1962 = vmatpush1.msra.mxu0 0.0
    %1963 = vmatprep.subr.mxu0 0.0
    %1964 = vmatpush1.msra.mxu0 0.0
    %1965 = vmatprep.subr.mxu0 0.0
    %1966 = vmatpush1.msra.mxu0 0.0
    %1967 = vmatprep.subr.mxu0 0.0
    %1968 = vmatpush1.msra.mxu0 0.0
    %1969 = vmatprep.subr.mxu0 0.0
    %1970 = vmatpush1.msra.mxu0 0.0
    %1971 = vmatprep.subr.mxu0 0.0
    %1972 = vmatpush1.msra.mxu0 0.0
    %1973 = vmatprep.subr.mxu0 0.0
    %1974 = vmatpush1.msra.mxu0 0.0
    %1975 = vmatprep.subr.mxu0 0.0
    %1976 = vmatpush1.msra.mxu0 0.0
    %1977 = vmatprep.subr.mxu0 0.0
    %1978 = vmatpush1.msra.mxu0 0.0
    %1979 = vmatprep.subr.mxu0 0.0
    %1980 = vmatpush1.msra.mxu0 0.0
    %1981 = vmatprep.subr.mxu0 0.0
    %1982 = vmatpush1.msra.mxu0 0.0
    %1983 = vmatprep.subr.mxu0 0.0
    %1984 = vmatpush1.msra.mxu0 0.0
    %1985 = vmatprep.subr.mxu0 0.0
    %1986 = vmatpush1.msra.mxu0 0.0
    %1987 = vmatprep.mubr.f32.mxu0 0.0
    %v1988 = vand.u32 %v52, 4294901760
    %v1989 = vsub.f32 %v52, %v1988
    %v1990 = vand.u32 %v1989, 4294901760
    %v1991 = vsub.f32 %v1989, %v1990
    %v1992 = vand.u32 %v1991, 4294901760
    %1993 = vmatmul.mubr.f32.gmra.mrb[0].mxu0 %v1992
    %v1994 = vpop.f32.mrb[0].mxu0
    %v1995 = vadd.f32 %v170, %v1994
    %v1996 = vpop.f32.mrb[0].mxu0
    %v1997 = vadd.f32 %v174, %v1996
    %1998 = vdwg.mxu0
    %v1999 = vand.u32 %v58, 4294901760
    %v2000 = vsub.f32 %v58, %v1999
    %v2001 = vand.u32 %v2000, 4294901760
    %v2002 = vsub.f32 %v2000, %v2001
    %v2003 = vand.u32 %v2002, 4294901760
    %2004 = vmatprep.subr.mxu0 %v2003
    %v2005 = vand.u32 %v57, 4294901760
    %v2006 = vsub.f32 %v57, %v2005
    %v2007 = vand.u32 %v2006, 4294901760
    %v2008 = vsub.f32 %v2006, %v2007
    %v2009 = vand.u32 %v2008, 4294901760
    %2010 = vmatpush1.msra.mxu0 %v2009
    %v2011 = vand.u32 %v64, 4294901760
    %v2012 = vsub.f32 %v64, %v2011
    %v2013 = vand.u32 %v2012, 4294901760
    %v2014 = vsub.f32 %v2012, %v2013
    %v2015 = vand.u32 %v2014, 4294901760
    %2016 = vmatprep.subr.mxu0 %v2015
    %v2017 = vand.u32 %v63, 4294901760
    %v2018 = vsub.f32 %v63, %v2017
    %v2019 = vand.u32 %v2018, 4294901760
    %v2020 = vsub.f32 %v2018, %v2019
    %v2021 = vand.u32 %v2020, 4294901760
    %2022 = vmatpush1.msra.mxu0 %v2021
    %v2023 = vand.u32 %v70, 4294901760
    %v2024 = vsub.f32 %v70, %v2023
    %v2025 = vand.u32 %v2024, 4294901760
    %v2026 = vsub.f32 %v2024, %v2025
    %v2027 = vand.u32 %v2026, 4294901760
    %2028 = vmatprep.subr.mxu0 %v2027
    %v2029 = vand.u32 %v69, 4294901760
    %v2030 = vsub.f32 %v69, %v2029
    %v2031 = vand.u32 %v2030, 4294901760
    %v2032 = vsub.f32 %v2030, %v2031
    %v2033 = vand.u32 %v2032, 4294901760
    %2034 = vmatpush1.msra.mxu0 %v2033
    %v2035 = vand.u32 %v76, 4294901760
    %v2036 = vsub.f32 %v76, %v2035
    %v2037 = vand.u32 %v2036, 4294901760
    %v2038 = vsub.f32 %v2036, %v2037
    %v2039 = vand.u32 %v2038, 4294901760
    %2040 = vmatprep.subr.mxu0 %v2039
    %v2041 = vand.u32 %v75, 4294901760
    %v2042 = vsub.f32 %v75, %v2041
    %v2043 = vand.u32 %v2042, 4294901760
    %v2044 = vsub.f32 %v2042, %v2043
    %v2045 = vand.u32 %v2044, 4294901760
    %2046 = vmatpush1.msra.mxu0 %v2045
    %v2047 = vand.u32 %v82, 4294901760
    %v2048 = vsub.f32 %v82, %v2047
    %v2049 = vand.u32 %v2048, 4294901760
    %v2050 = vsub.f32 %v2048, %v2049
    %v2051 = vand.u32 %v2050, 4294901760
    %2052 = vmatprep.subr.mxu0 %v2051
    %v2053 = vand.u32 %v81, 4294901760
    %v2054 = vsub.f32 %v81, %v2053
    %v2055 = vand.u32 %v2054, 4294901760
    %v2056 = vsub.f32 %v2054, %v2055
    %v2057 = vand.u32 %v2056, 4294901760
    %2058 = vmatpush1.msra.mxu0 %v2057
    %v2059 = vand.u32 %v88, 4294901760
    %v2060 = vsub.f32 %v88, %v2059
    %v2061 = vand.u32 %v2060, 4294901760
    %v2062 = vsub.f32 %v2060, %v2061
    %v2063 = vand.u32 %v2062, 4294901760
    %2064 = vmatprep.subr.mxu0 %v2063
    %v2065 = vand.u32 %v87, 4294901760
    %v2066 = vsub.f32 %v87, %v2065
    %v2067 = vand.u32 %v2066, 4294901760
    %v2068 = vsub.f32 %v2066, %v2067
    %v2069 = vand.u32 %v2068, 4294901760
    %2070 = vmatpush1.msra.mxu0 %v2069
    %v2071 = vand.u32 %v94, 4294901760
    %v2072 = vsub.f32 %v94, %v2071
    %v2073 = vand.u32 %v2072, 4294901760
    %v2074 = vsub.f32 %v2072, %v2073
    %v2075 = vand.u32 %v2074, 4294901760
    %2076 = vmatprep.subr.mxu0 %v2075
    %v2077 = vand.u32 %v93, 4294901760
    %v2078 = vsub.f32 %v93, %v2077
    %v2079 = vand.u32 %v2078, 4294901760
    %v2080 = vsub.f32 %v2078, %v2079
    %v2081 = vand.u32 %v2080, 4294901760
    %2082 = vmatpush1.msra.mxu0 %v2081
    %v2083 = vand.u32 %v100, 4294901760
    %v2084 = vsub.f32 %v100, %v2083
    %v2085 = vand.u32 %v2084, 4294901760
    %v2086 = vsub.f32 %v2084, %v2085
    %v2087 = vand.u32 %v2086, 4294901760
    %2088 = vmatprep.subr.mxu0 %v2087
    %v2089 = vand.u32 %v99, 4294901760
    %v2090 = vsub.f32 %v99, %v2089
    %v2091 = vand.u32 %v2090, 4294901760
    %v2092 = vsub.f32 %v2090, %v2091
    %v2093 = vand.u32 %v2092, 4294901760
    %2094 = vmatpush1.msra.mxu0 %v2093
    %v2095 = vand.u32 %v106, 4294901760
    %v2096 = vsub.f32 %v106, %v2095
    %v2097 = vand.u32 %v2096, 4294901760
    %v2098 = vsub.f32 %v2096, %v2097
    %v2099 = vand.u32 %v2098, 4294901760
    %2100 = vmatprep.subr.mxu0 %v2099
    %v2101 = vand.u32 %v105, 4294901760
    %v2102 = vsub.f32 %v105, %v2101
    %v2103 = vand.u32 %v2102, 4294901760
    %v2104 = vsub.f32 %v2102, %v2103
    %v2105 = vand.u32 %v2104, 4294901760
    %2106 = vmatpush1.msra.mxu0 %v2105
    %v2107 = vand.u32 %v112, 4294901760
    %v2108 = vsub.f32 %v112, %v2107
    %v2109 = vand.u32 %v2108, 4294901760
    %v2110 = vsub.f32 %v2108, %v2109
    %v2111 = vand.u32 %v2110, 4294901760
    %2112 = vmatprep.subr.mxu0 %v2111
    %v2113 = vand.u32 %v111, 4294901760
    %v2114 = vsub.f32 %v111, %v2113
    %v2115 = vand.u32 %v2114, 4294901760
    %v2116 = vsub.f32 %v2114, %v2115
    %v2117 = vand.u32 %v2116, 4294901760
    %2118 = vmatpush1.msra.mxu0 %v2117
    %v2119 = vand.u32 %v118, 4294901760
    %v2120 = vsub.f32 %v118, %v2119
    %v2121 = vand.u32 %v2120, 4294901760
    %v2122 = vsub.f32 %v2120, %v2121
    %v2123 = vand.u32 %v2122, 4294901760
    %2124 = vmatprep.subr.mxu0 %v2123
    %v2125 = vand.u32 %v117, 4294901760
    %v2126 = vsub.f32 %v117, %v2125
    %v2127 = vand.u32 %v2126, 4294901760
    %v2128 = vsub.f32 %v2126, %v2127
    %v2129 = vand.u32 %v2128, 4294901760
    %2130 = vmatpush1.msra.mxu0 %v2129
    %v2131 = vand.u32 %v124, 4294901760
    %v2132 = vsub.f32 %v124, %v2131
    %v2133 = vand.u32 %v2132, 4294901760
    %v2134 = vsub.f32 %v2132, %v2133
    %v2135 = vand.u32 %v2134, 4294901760
    %2136 = vmatprep.subr.mxu0 %v2135
    %v2137 = vand.u32 %v123, 4294901760
    %v2138 = vsub.f32 %v123, %v2137
    %v2139 = vand.u32 %v2138, 4294901760
    %v2140 = vsub.f32 %v2138, %v2139
    %v2141 = vand.u32 %v2140, 4294901760
    %2142 = vmatpush1.msra.mxu0 %v2141
    %v2143 = vand.u32 %v130, 4294901760
    %v2144 = vsub.f32 %v130, %v2143
    %v2145 = vand.u32 %v2144, 4294901760
    %v2146 = vsub.f32 %v2144, %v2145
    %v2147 = vand.u32 %v2146, 4294901760
    %2148 = vmatprep.subr.mxu0 %v2147
    %v2149 = vand.u32 %v129, 4294901760
    %v2150 = vsub.f32 %v129, %v2149
    %v2151 = vand.u32 %v2150, 4294901760
    %v2152 = vsub.f32 %v2150, %v2151
    %v2153 = vand.u32 %v2152, 4294901760
    %2154 = vmatpush1.msra.mxu0 %v2153
    %v2155 = vand.u32 %v136, 4294901760
    %v2156 = vsub.f32 %v136, %v2155
    %v2157 = vand.u32 %v2156, 4294901760
    %v2158 = vsub.f32 %v2156, %v2157
    %v2159 = vand.u32 %v2158, 4294901760
    %2160 = vmatprep.subr.mxu0 %v2159
    %v2161 = vand.u32 %v135, 4294901760
    %v2162 = vsub.f32 %v135, %v2161
    %v2163 = vand.u32 %v2162, 4294901760
    %v2164 = vsub.f32 %v2162, %v2163
    %v2165 = vand.u32 %v2164, 4294901760
    %2166 = vmatpush1.msra.mxu0 %v2165
    %v2167 = vand.u32 %v142, 4294901760
    %v2168 = vsub.f32 %v142, %v2167
    %v2169 = vand.u32 %v2168, 4294901760
    %v2170 = vsub.f32 %v2168, %v2169
    %v2171 = vand.u32 %v2170, 4294901760
    %2172 = vmatprep.subr.mxu0 %v2171
    %v2173 = vand.u32 %v141, 4294901760
    %v2174 = vsub.f32 %v141, %v2173
    %v2175 = vand.u32 %v2174, 4294901760
    %v2176 = vsub.f32 %v2174, %v2175
    %v2177 = vand.u32 %v2176, 4294901760
    %2178 = vmatpush1.msra.mxu0 %v2177
    %v2179 = vand.u32 %v148, 4294901760
    %v2180 = vsub.f32 %v148, %v2179
    %v2181 = vand.u32 %v2180, 4294901760
    %v2182 = vsub.f32 %v2180, %v2181
    %v2183 = vand.u32 %v2182, 4294901760
    %2184 = vmatprep.subr.mxu0 %v2183
    %v2185 = vand.u32 %v147, 4294901760
    %v2186 = vsub.f32 %v147, %v2185
    %v2187 = vand.u32 %v2186, 4294901760
    %v2188 = vsub.f32 %v2186, %v2187
    %v2189 = vand.u32 %v2188, 4294901760
    %2190 = vmatpush1.msra.mxu0 %v2189
    %2191 = vmatprep.subr.mxu0 0.0
    %2192 = vmatpush1.msra.mxu0 0.0
    %2193 = vmatprep.subr.mxu0 0.0
    %2194 = vmatpush1.msra.mxu0 0.0
    %2195 = vmatprep.subr.mxu0 0.0
    %2196 = vmatpush1.msra.mxu0 0.0
    %2197 = vmatprep.subr.mxu0 0.0
    %2198 = vmatpush1.msra.mxu0 0.0
    %2199 = vmatprep.subr.mxu0 0.0
    %2200 = vmatpush1.msra.mxu0 0.0
    %2201 = vmatprep.subr.mxu0 0.0
    %2202 = vmatpush1.msra.mxu0 0.0
    %2203 = vmatprep.subr.mxu0 0.0
    %2204 = vmatpush1.msra.mxu0 0.0
    %2205 = vmatprep.subr.mxu0 0.0
    %2206 = vmatpush1.msra.mxu0 0.0
    %2207 = vmatprep.subr.mxu0 0.0
    %2208 = vmatpush1.msra.mxu0 0.0
    %2209 = vmatprep.subr.mxu0 0.0
    %2210 = vmatpush1.msra.mxu0 0.0
    %2211 = vmatprep.subr.mxu0 0.0
    %2212 = vmatpush1.msra.mxu0 0.0
    %2213 = vmatprep.subr.mxu0 0.0
    %2214 = vmatpush1.msra.mxu0 0.0
    %2215 = vmatprep.subr.mxu0 0.0
    %2216 = vmatpush1.msra.mxu0 0.0
    %2217 = vmatprep.subr.mxu0 0.0
    %2218 = vmatpush1.msra.mxu0 0.0
    %2219 = vmatprep.subr.mxu0 0.0
    %2220 = vmatpush1.msra.mxu0 0.0
    %2221 = vmatprep.subr.mxu0 0.0
    %2222 = vmatpush1.msra.mxu0 0.0
    %2223 = vmatprep.mubr.f32.mxu0 0.0
    %v2224 = vand.u32 %v52, 4294901760
    %2225 = vmatmul.mubr.f32.gmra.mrb[0].mxu0 %v2224
    %v2226 = vpop.f32.mrb[0].mxu0
    %v2227 = vadd.f32 %v1995, %v2226
    %v2228 = vpop.f32.mrb[0].mxu0
    %v2229 = vadd.f32 %v1997, %v2228
    %2230 = vdwg.mxu0
    %v2231 = vand.u32 %v58, 4294901760
    %v2232 = vsub.f32 %v58, %v2231
    %2233 = vmatprep.subr.mxu0 %v2232
    %v2234 = vand.u32 %v57, 4294901760
    %v2235 = vsub.f32 %v57, %v2234
    %2236 = vmatpush1.msra.mxu0 %v2235
    %v2237 = vand.u32 %v64, 4294901760
    %v2238 = vsub.f32 %v64, %v2237
    %2239 = vmatprep.subr.mxu0 %v2238
    %v2240 = vand.u32 %v63, 4294901760
    %v2241 = vsub.f32 %v63, %v2240
    %2242 = vmatpush1.msra.mxu0 %v2241
    %v2243 = vand.u32 %v70, 4294901760
    %v2244 = vsub.f32 %v70, %v2243
    %2245 = vmatprep.subr.mxu0 %v2244
    %v2246 = vand.u32 %v69, 4294901760
    %v2247 = vsub.f32 %v69, %v2246
    %2248 = vmatpush1.msra.mxu0 %v2247
    %v2249 = vand.u32 %v76, 4294901760
    %v2250 = vsub.f32 %v76, %v2249
    %2251 = vmatprep.subr.mxu0 %v2250
    %v2252 = vand.u32 %v75, 4294901760
    %v2253 = vsub.f32 %v75, %v2252
    %2254 = vmatpush1.msra.mxu0 %v2253
    %v2255 = vand.u32 %v82, 4294901760
    %v2256 = vsub.f32 %v82, %v2255
    %2257 = vmatprep.subr.mxu0 %v2256
    %v2258 = vand.u32 %v81, 4294901760
    %v2259 = vsub.f32 %v81, %v2258
    %2260 = vmatpush1.msra.mxu0 %v2259
    %v2261 = vand.u32 %v88, 4294901760
    %v2262 = vsub.f32 %v88, %v2261
    %2263 = vmatprep.subr.mxu0 %v2262
    %v2264 = vand.u32 %v87, 4294901760
    %v2265 = vsub.f32 %v87, %v2264
    %2266 = vmatpush1.msra.mxu0 %v2265
    %v2267 = vand.u32 %v94, 4294901760
    %v2268 = vsub.f32 %v94, %v2267
    %2269 = vmatprep.subr.mxu0 %v2268
    %v2270 = vand.u32 %v93, 4294901760
    %v2271 = vsub.f32 %v93, %v2270
    %2272 = vmatpush1.msra.mxu0 %v2271
    %v2273 = vand.u32 %v100, 4294901760
    %v2274 = vsub.f32 %v100, %v2273
    %2275 = vmatprep.subr.mxu0 %v2274
    %v2276 = vand.u32 %v99, 4294901760
    %v2277 = vsub.f32 %v99, %v2276
    %2278 = vmatpush1.msra.mxu0 %v2277
    %v2279 = vand.u32 %v106, 4294901760
    %v2280 = vsub.f32 %v106, %v2279
    %2281 = vmatprep.subr.mxu0 %v2280
    %v2282 = vand.u32 %v105, 4294901760
    %v2283 = vsub.f32 %v105, %v2282
    %2284 = vmatpush1.msra.mxu0 %v2283
    %v2285 = vand.u32 %v112, 4294901760
    %v2286 = vsub.f32 %v112, %v2285
    %2287 = vmatprep.subr.mxu0 %v2286
    %v2288 = vand.u32 %v111, 4294901760
    %v2289 = vsub.f32 %v111, %v2288
    %2290 = vmatpush1.msra.mxu0 %v2289
    %v2291 = vand.u32 %v118, 4294901760
    %v2292 = vsub.f32 %v118, %v2291
    %2293 = vmatprep.subr.mxu0 %v2292
    %v2294 = vand.u32 %v117, 4294901760
    %v2295 = vsub.f32 %v117, %v2294
    %2296 = vmatpush1.msra.mxu0 %v2295
    %v2297 = vand.u32 %v124, 4294901760
    %v2298 = vsub.f32 %v124, %v2297
    %2299 = vmatprep.subr.mxu0 %v2298
    %v2300 = vand.u32 %v123, 4294901760
    %v2301 = vsub.f32 %v123, %v2300
    %2302 = vmatpush1.msra.mxu0 %v2301
    %v2303 = vand.u32 %v130, 4294901760
    %v2304 = vsub.f32 %v130, %v2303
    %2305 = vmatprep.subr.mxu0 %v2304
    %v2306 = vand.u32 %v129, 4294901760
    %v2307 = vsub.f32 %v129, %v2306
    %2308 = vmatpush1.msra.mxu0 %v2307
    %v2309 = vand.u32 %v136, 4294901760
    %v2310 = vsub.f32 %v136, %v2309
    %2311 = vmatprep.subr.mxu0 %v2310
    %v2312 = vand.u32 %v135, 4294901760
    %v2313 = vsub.f32 %v135, %v2312
    %2314 = vmatpush1.msra.mxu0 %v2313
    %v2315 = vand.u32 %v142, 4294901760
    %v2316 = vsub.f32 %v142, %v2315
    %2317 = vmatprep.subr.mxu0 %v2316
    %v2318 = vand.u32 %v141, 4294901760
    %v2319 = vsub.f32 %v141, %v2318
    %2320 = vmatpush1.msra.mxu0 %v2319
    %v2321 = vand.u32 %v148, 4294901760
    %v2322 = vsub.f32 %v148, %v2321
    %2323 = vmatprep.subr.mxu0 %v2322
    %v2324 = vand.u32 %v147, 4294901760
    %v2325 = vsub.f32 %v147, %v2324
    %2326 = vmatpush1.msra.mxu0 %v2325
    %2327 = vmatprep.subr.mxu0 0.0
    %2328 = vmatpush1.msra.mxu0 0.0
    %2329 = vmatprep.subr.mxu0 0.0
    %2330 = vmatpush1.msra.mxu0 0.0
    %2331 = vmatprep.subr.mxu0 0.0
    %2332 = vmatpush1.msra.mxu0 0.0
    %2333 = vmatprep.subr.mxu0 0.0
    %2334 = vmatpush1.msra.mxu0 0.0
    %2335 = vmatprep.subr.mxu0 0.0
    %2336 = vmatpush1.msra.mxu0 0.0
    %2337 = vmatprep.subr.mxu0 0.0
    %2338 = vmatpush1.msra.mxu0 0.0
    %2339 = vmatprep.subr.mxu0 0.0
    %2340 = vmatpush1.msra.mxu0 0.0
    %2341 = vmatprep.subr.mxu0 0.0
    %2342 = vmatpush1.msra.mxu0 0.0
    %2343 = vmatprep.subr.mxu0 0.0
    %2344 = vmatpush1.msra.mxu0 0.0
    %2345 = vmatprep.subr.mxu0 0.0
    %2346 = vmatpush1.msra.mxu0 0.0
    %2347 = vmatprep.subr.mxu0 0.0
    %2348 = vmatpush1.msra.mxu0 0.0
    %2349 = vmatprep.subr.mxu0 0.0
    %2350 = vmatpush1.msra.mxu0 0.0
    %2351 = vmatprep.subr.mxu0 0.0
    %2352 = vmatpush1.msra.mxu0 0.0
    %2353 = vmatprep.subr.mxu0 0.0
    %2354 = vmatpush1.msra.mxu0 0.0
    %2355 = vmatprep.subr.mxu0 0.0
    %2356 = vmatpush1.msra.mxu0 0.0
    %2357 = vmatprep.subr.mxu0 0.0
    %2358 = vmatpush1.msra.mxu0 0.0
    %2359 = vmatprep.mubr.f32.mxu0 0.0
    %v2360 = vand.u32 %v52, 4294901760
    %v2361 = vsub.f32 %v52, %v2360
    %2362 = vmatmul.mubr.f32.gmra.mrb[0].mxu0 %v2361
    %v2363 = vpop.f32.mrb[0].mxu0
    %v2364 = vadd.f32 %v2227, %v2363
    %v2365 = vpop.f32.mrb[0].mxu0
    %v2366 = vadd.f32 %v2229, %v2365
    %2367 = vdwg.mxu0
    %v2368 = vand.u32 %v58, 4294901760
    %2369 = vmatprep.subr.mxu0 %v2368
    %v2370 = vand.u32 %v57, 4294901760
    %2371 = vmatpush1.msra.mxu0 %v2370
    %v2372 = vand.u32 %v64, 4294901760
    %2373 = vmatprep.subr.mxu0 %v2372
    %v2374 = vand.u32 %v63, 4294901760
    %2375 = vmatpush1.msra.mxu0 %v2374
    %v2376 = vand.u32 %v70, 4294901760
    %2377 = vmatprep.subr.mxu0 %v2376
    %v2378 = vand.u32 %v69, 4294901760
    %2379 = vmatpush1.msra.mxu0 %v2378
    %v2380 = vand.u32 %v76, 4294901760
    %2381 = vmatprep.subr.mxu0 %v2380
    %v2382 = vand.u32 %v75, 4294901760
    %2383 = vmatpush1.msra.mxu0 %v2382
    %v2384 = vand.u32 %v82, 4294901760
    %2385 = vmatprep.subr.mxu0 %v2384
    %v2386 = vand.u32 %v81, 4294901760
    %2387 = vmatpush1.msra.mxu0 %v2386
    %v2388 = vand.u32 %v88, 4294901760
    %2389 = vmatprep.subr.mxu0 %v2388
    %v2390 = vand.u32 %v87, 4294901760
    %2391 = vmatpush1.msra.mxu0 %v2390
    %v2392 = vand.u32 %v94, 4294901760
    %2393 = vmatprep.subr.mxu0 %v2392
    %v2394 = vand.u32 %v93, 4294901760
    %2395 = vmatpush1.msra.mxu0 %v2394
    %v2396 = vand.u32 %v100, 4294901760
    %2397 = vmatprep.subr.mxu0 %v2396
    %v2398 = vand.u32 %v99, 4294901760
    %2399 = vmatpush1.msra.mxu0 %v2398
    %v2400 = vand.u32 %v106, 4294901760
    %2401 = vmatprep.subr.mxu0 %v2400
    %v2402 = vand.u32 %v105, 4294901760
    %2403 = vmatpush1.msra.mxu0 %v2402
    %v2404 = vand.u32 %v112, 4294901760
    %2405 = vmatprep.subr.mxu0 %v2404
    %v2406 = vand.u32 %v111, 4294901760
    %2407 = vmatpush1.msra.mxu0 %v2406
    %v2408 = vand.u32 %v118, 4294901760
    %2409 = vmatprep.subr.mxu0 %v2408
    %v2410 = vand.u32 %v117, 4294901760
    %2411 = vmatpush1.msra.mxu0 %v2410
    %v2412 = vand.u32 %v124, 4294901760
    %2413 = vmatprep.subr.mxu0 %v2412
    %v2414 = vand.u32 %v123, 4294901760
    %2415 = vmatpush1.msra.mxu0 %v2414
    %v2416 = vand.u32 %v130, 4294901760
    %2417 = vmatprep.subr.mxu0 %v2416
    %v2418 = vand.u32 %v129, 4294901760
    %2419 = vmatpush1.msra.mxu0 %v2418
    %v2420 = vand.u32 %v136, 4294901760
    %2421 = vmatprep.subr.mxu0 %v2420
    %v2422 = vand.u32 %v135, 4294901760
    %2423 = vmatpush1.msra.mxu0 %v2422
    %v2424 = vand.u32 %v142, 4294901760
    %2425 = vmatprep.subr.mxu0 %v2424
    %v2426 = vand.u32 %v141, 4294901760
    %2427 = vmatpush1.msra.mxu0 %v2426
    %v2428 = vand.u32 %v148, 4294901760
    %2429 = vmatprep.subr.mxu0 %v2428
    %v2430 = vand.u32 %v147, 4294901760
    %2431 = vmatpush1.msra.mxu0 %v2430
    %2432 = vmatprep.subr.mxu0 0.0
    %2433 = vmatpush1.msra.mxu0 0.0
    %2434 = vmatprep.subr.mxu0 0.0
    %2435 = vmatpush1.msra.mxu0 0.0
    %2436 = vmatprep.subr.mxu0 0.0
    %2437 = vmatpush1.msra.mxu0 0.0
    %2438 = vmatprep.subr.mxu0 0.0
    %2439 = vmatpush1.msra.mxu0 0.0
    %2440 = vmatprep.subr.mxu0 0.0
    %2441 = vmatpush1.msra.mxu0 0.0
    %2442 = vmatprep.subr.mxu0 0.0
    %2443 = vmatpush1.msra.mxu0 0.0
    %2444 = vmatprep.subr.mxu0 0.0
    %2445 = vmatpush1.msra.mxu0 0.0
    %2446 = vmatprep.subr.mxu0 0.0
    %2447 = vmatpush1.msra.mxu0 0.0
    %2448 = vmatprep.subr.mxu0 0.0
    %2449 = vmatpush1.msra.mxu0 0.0
    %2450 = vmatprep.subr.mxu0 0.0
    %2451 = vmatpush1.msra.mxu0 0.0
    %2452 = vmatprep.subr.mxu0 0.0
    %2453 = vmatpush1.msra.mxu0 0.0
    %2454 = vmatprep.subr.mxu0 0.0
    %2455 = vmatpush1.msra.mxu0 0.0
    %2456 = vmatprep.subr.mxu0 0.0
    %2457 = vmatpush1.msra.mxu0 0.0
    %2458 = vmatprep.subr.mxu0 0.0
    %2459 = vmatpush1.msra.mxu0 0.0
    %2460 = vmatprep.subr.mxu0 0.0
    %2461 = vmatpush1.msra.mxu0 0.0
    %2462 = vmatprep.subr.mxu0 0.0
    %2463 = vmatpush1.msra.mxu0 0.0
    %2464 = vmatprep.mubr.f32.mxu0 0.0
    %v2465 = vand.u32 %v52, 4294901760
    %v2466 = vsub.f32 %v52, %v2465
    %v2467 = vand.u32 %v2466, 4294901760
    %2468 = vmatmul.mubr.f32.gmra.mrb[0].mxu0 %v2467
    %v2469 = vpop.f32.mrb[0].mxu0
    %v2470 = vadd.f32 %v2364, %v2469
    %v2471 = vpop.f32.mrb[0].mxu0
    %v2472 = vadd.f32 %v2366, %v2471
    %2473 = vdwg.mxu0
    %v2474 = vand.u32 %v58, 4294901760
    %v2475 = vsub.f32 %v58, %v2474
    %v2476 = vand.u32 %v2475, 4294901760
    %2477 = vmatprep.subr.mxu0 %v2476
    %v2478 = vand.u32 %v57, 4294901760
    %v2479 = vsub.f32 %v57, %v2478
    %v2480 = vand.u32 %v2479, 4294901760
    %2481 = vmatpush1.msra.mxu0 %v2480
    %v2482 = vand.u32 %v64, 4294901760
    %v2483 = vsub.f32 %v64, %v2482
    %v2484 = vand.u32 %v2483, 4294901760
    %2485 = vmatprep.subr.mxu0 %v2484
    %v2486 = vand.u32 %v63, 4294901760
    %v2487 = vsub.f32 %v63, %v2486
    %v2488 = vand.u32 %v2487, 4294901760
    %2489 = vmatpush1.msra.mxu0 %v2488
    %v2490 = vand.u32 %v70, 4294901760
    %v2491 = vsub.f32 %v70, %v2490
    %v2492 = vand.u32 %v2491, 4294901760
    %2493 = vmatprep.subr.mxu0 %v2492
    %v2494 = vand.u32 %v69, 4294901760
    %v2495 = vsub.f32 %v69, %v2494
    %v2496 = vand.u32 %v2495, 4294901760
    %2497 = vmatpush1.msra.mxu0 %v2496
    %v2498 = vand.u32 %v76, 4294901760
    %v2499 = vsub.f32 %v76, %v2498
    %v2500 = vand.u32 %v2499, 4294901760
    %2501 = vmatprep.subr.mxu0 %v2500
    %v2502 = vand.u32 %v75, 4294901760
    %v2503 = vsub.f32 %v75, %v2502
    %v2504 = vand.u32 %v2503, 4294901760
    %2505 = vmatpush1.msra.mxu0 %v2504
    %v2506 = vand.u32 %v82, 4294901760
    %v2507 = vsub.f32 %v82, %v2506
    %v2508 = vand.u32 %v2507, 4294901760
    %2509 = vmatprep.subr.mxu0 %v2508
    %v2510 = vand.u32 %v81, 4294901760
    %v2511 = vsub.f32 %v81, %v2510
    %v2512 = vand.u32 %v2511, 4294901760
    %2513 = vmatpush1.msra.mxu0 %v2512
    %v2514 = vand.u32 %v88, 4294901760
    %v2515 = vsub.f32 %v88, %v2514
    %v2516 = vand.u32 %v2515, 4294901760
    %2517 = vmatprep.subr.mxu0 %v2516
    %v2518 = vand.u32 %v87, 4294901760
    %v2519 = vsub.f32 %v87, %v2518
    %v2520 = vand.u32 %v2519, 4294901760
    %2521 = vmatpush1.msra.mxu0 %v2520
    %v2522 = vand.u32 %v94, 4294901760
    %v2523 = vsub.f32 %v94, %v2522
    %v2524 = vand.u32 %v2523, 4294901760
    %2525 = vmatprep.subr.mxu0 %v2524
    %v2526 = vand.u32 %v93, 4294901760
    %v2527 = vsub.f32 %v93, %v2526
    %v2528 = vand.u32 %v2527, 4294901760
    %2529 = vmatpush1.msra.mxu0 %v2528
    %v2530 = vand.u32 %v100, 4294901760
    %v2531 = vsub.f32 %v100, %v2530
    %v2532 = vand.u32 %v2531, 4294901760
    %2533 = vmatprep.subr.mxu0 %v2532
    %v2534 = vand.u32 %v99, 4294901760
    %v2535 = vsub.f32 %v99, %v2534
    %v2536 = vand.u32 %v2535, 4294901760
    %2537 = vmatpush1.msra.mxu0 %v2536
    %v2538 = vand.u32 %v106, 4294901760
    %v2539 = vsub.f32 %v106, %v2538
    %v2540 = vand.u32 %v2539, 4294901760
    %2541 = vmatprep.subr.mxu0 %v2540
    %v2542 = vand.u32 %v105, 4294901760
    %v2543 = vsub.f32 %v105, %v2542
    %v2544 = vand.u32 %v2543, 4294901760
    %2545 = vmatpush1.msra.mxu0 %v2544
    %v2546 = vand.u32 %v112, 4294901760
    %v2547 = vsub.f32 %v112, %v2546
    %v2548 = vand.u32 %v2547, 4294901760
    %2549 = vmatprep.subr.mxu0 %v2548
    %v2550 = vand.u32 %v111, 4294901760
    %v2551 = vsub.f32 %v111, %v2550
    %v2552 = vand.u32 %v2551, 4294901760
    %2553 = vmatpush1.msra.mxu0 %v2552
    %v2554 = vand.u32 %v118, 4294901760
    %v2555 = vsub.f32 %v118, %v2554
    %v2556 = vand.u32 %v2555, 4294901760
    %2557 = vmatprep.subr.mxu0 %v2556
    %v2558 = vand.u32 %v117, 4294901760
    %v2559 = vsub.f32 %v117, %v2558
    %v2560 = vand.u32 %v2559, 4294901760
    %2561 = vmatpush1.msra.mxu0 %v2560
    %v2562 = vand.u32 %v124, 4294901760
    %v2563 = vsub.f32 %v124, %v2562
    %v2564 = vand.u32 %v2563, 4294901760
    %2565 = vmatprep.subr.mxu0 %v2564
    %v2566 = vand.u32 %v123, 4294901760
    %v2567 = vsub.f32 %v123, %v2566
    %v2568 = vand.u32 %v2567, 4294901760
    %2569 = vmatpush1.msra.mxu0 %v2568
    %v2570 = vand.u32 %v130, 4294901760
    %v2571 = vsub.f32 %v130, %v2570
    %v2572 = vand.u32 %v2571, 4294901760
    %2573 = vmatprep.subr.mxu0 %v2572
    %v2574 = vand.u32 %v129, 4294901760
    %v2575 = vsub.f32 %v129, %v2574
    %v2576 = vand.u32 %v2575, 4294901760
    %2577 = vmatpush1.msra.mxu0 %v2576
    %v2578 = vand.u32 %v136, 4294901760
    %v2579 = vsub.f32 %v136, %v2578
    %v2580 = vand.u32 %v2579, 4294901760
    %2581 = vmatprep.subr.mxu0 %v2580
    %v2582 = vand.u32 %v135, 4294901760
    %v2583 = vsub.f32 %v135, %v2582
    %v2584 = vand.u32 %v2583, 4294901760
    %2585 = vmatpush1.msra.mxu0 %v2584
    %v2586 = vand.u32 %v142, 4294901760
    %v2587 = vsub.f32 %v142, %v2586
    %v2588 = vand.u32 %v2587, 4294901760
    %2589 = vmatprep.subr.mxu0 %v2588
    %v2590 = vand.u32 %v141, 4294901760
    %v2591 = vsub.f32 %v141, %v2590
    %v2592 = vand.u32 %v2591, 4294901760
    %2593 = vmatpush1.msra.mxu0 %v2592
    %v2594 = vand.u32 %v148, 4294901760
    %v2595 = vsub.f32 %v148, %v2594
    %v2596 = vand.u32 %v2595, 4294901760
    %2597 = vmatprep.subr.mxu0 %v2596
    %v2598 = vand.u32 %v147, 4294901760
    %v2599 = vsub.f32 %v147, %v2598
    %v2600 = vand.u32 %v2599, 4294901760
    %2601 = vmatpush1.msra.mxu0 %v2600
    %2602 = vmatprep.subr.mxu0 0.0
    %2603 = vmatpush1.msra.mxu0 0.0
    %2604 = vmatprep.subr.mxu0 0.0
    %2605 = vmatpush1.msra.mxu0 0.0
    %2606 = vmatprep.subr.mxu0 0.0
    %2607 = vmatpush1.msra.mxu0 0.0
    %2608 = vmatprep.subr.mxu0 0.0
    %2609 = vmatpush1.msra.mxu0 0.0
    %2610 = vmatprep.subr.mxu0 0.0
    %2611 = vmatpush1.msra.mxu0 0.0
    %2612 = vmatprep.subr.mxu0 0.0
    %2613 = vmatpush1.msra.mxu0 0.0
    %2614 = vmatprep.subr.mxu0 0.0
    %2615 = vmatpush1.msra.mxu0 0.0
    %2616 = vmatprep.subr.mxu0 0.0
    %2617 = vmatpush1.msra.mxu0 0.0
    %2618 = vmatprep.subr.mxu0 0.0
    %2619 = vmatpush1.msra.mxu0 0.0
    %2620 = vmatprep.subr.mxu0 0.0
    %2621 = vmatpush1.msra.mxu0 0.0
    %2622 = vmatprep.subr.mxu0 0.0
    %2623 = vmatpush1.msra.mxu0 0.0
    %2624 = vmatprep.subr.mxu0 0.0
    %2625 = vmatpush1.msra.mxu0 0.0
    %2626 = vmatprep.subr.mxu0 0.0
    %2627 = vmatpush1.msra.mxu0 0.0
    %2628 = vmatprep.subr.mxu0 0.0
    %2629 = vmatpush1.msra.mxu0 0.0
    %2630 = vmatprep.subr.mxu0 0.0
    %2631 = vmatpush1.msra.mxu0 0.0
    %2632 = vmatprep.subr.mxu0 0.0
    %2633 = vmatpush1.msra.mxu0 0.0
    %2634 = vmatprep.mubr.f32.mxu0 0.0
    %v2635 = vand.u32 %v52, 4294901760
    %2636 = vmatmul.mubr.f32.gmra.mrb[0].mxu0 %v2635
    %v2637 = vpop.f32.mrb[0].mxu0
    %v2638 = vadd.f32 %v2470, %v2637
    %v2639 = vpop.f32.mrb[0].mxu0
    %v2640 = vadd.f32 %v2472, %v2639
    %2641 = vdwg.mxu0
    %v2642 = vand.u32 %v58, 4294901760
    %2643 = vmatprep.subr.mxu0 %v2642
    %v2644 = vand.u32 %v57, 4294901760
    %2645 = vmatpush1.msra.mxu0 %v2644
    %v2646 = vand.u32 %v64, 4294901760
    %2647 = vmatprep.subr.mxu0 %v2646
    %v2648 = vand.u32 %v63, 4294901760
    %2649 = vmatpush1.msra.mxu0 %v2648
    %v2650 = vand.u32 %v70, 4294901760
    %2651 = vmatprep.subr.mxu0 %v2650
    %v2652 = vand.u32 %v69, 4294901760
    %2653 = vmatpush1.msra.mxu0 %v2652
    %v2654 = vand.u32 %v76, 4294901760
    %2655 = vmatprep.subr.mxu0 %v2654
    %v2656 = vand.u32 %v75, 4294901760
    %2657 = vmatpush1.msra.mxu0 %v2656
    %v2658 = vand.u32 %v82, 4294901760
    %2659 = vmatprep.subr.mxu0 %v2658
    %v2660 = vand.u32 %v81, 4294901760
    %2661 = vmatpush1.msra.mxu0 %v2660
    %v2662 = vand.u32 %v88, 4294901760
    %2663 = vmatprep.subr.mxu0 %v2662
    %v2664 = vand.u32 %v87, 4294901760
    %2665 = vmatpush1.msra.mxu0 %v2664
    %v2666 = vand.u32 %v94, 4294901760
    %2667 = vmatprep.subr.mxu0 %v2666
    %v2668 = vand.u32 %v93, 4294901760
    %2669 = vmatpush1.msra.mxu0 %v2668
    %v2670 = vand.u32 %v100, 4294901760
    %2671 = vmatprep.subr.mxu0 %v2670
    %v2672 = vand.u32 %v99, 4294901760
    %2673 = vmatpush1.msra.mxu0 %v2672
    %v2674 = vand.u32 %v106, 4294901760
    %2675 = vmatprep.subr.mxu0 %v2674
    %v2676 = vand.u32 %v105, 4294901760
    %2677 = vmatpush1.msra.mxu0 %v2676
    %v2678 = vand.u32 %v112, 4294901760
    %2679 = vmatprep.subr.mxu0 %v2678
    %v2680 = vand.u32 %v111, 4294901760
    %2681 = vmatpush1.msra.mxu0 %v2680
    %v2682 = vand.u32 %v118, 4294901760
    %2683 = vmatprep.subr.mxu0 %v2682
    %v2684 = vand.u32 %v117, 4294901760
    %2685 = vmatpush1.msra.mxu0 %v2684
    %v2686 = vand.u32 %v124, 4294901760
    %2687 = vmatprep.subr.mxu0 %v2686
    %v2688 = vand.u32 %v123, 4294901760
    %2689 = vmatpush1.msra.mxu0 %v2688
    %v2690 = vand.u32 %v130, 4294901760
    %2691 = vmatprep.subr.mxu0 %v2690
    %v2692 = vand.u32 %v129, 4294901760
    %2693 = vmatpush1.msra.mxu0 %v2692
    %v2694 = vand.u32 %v136, 4294901760
    %2695 = vmatprep.subr.mxu0 %v2694
    %v2696 = vand.u32 %v135, 4294901760
    %2697 = vmatpush1.msra.mxu0 %v2696
    %v2698 = vand.u32 %v142, 4294901760
    %2699 = vmatprep.subr.mxu0 %v2698
    %v2700 = vand.u32 %v141, 4294901760
    %2701 = vmatpush1.msra.mxu0 %v2700
    %v2702 = vand.u32 %v148, 4294901760
    %2703 = vmatprep.subr.mxu0 %v2702
    %v2704 = vand.u32 %v147, 4294901760
    %2705 = vmatpush1.msra.mxu0 %v2704
    %2706 = vmatprep.subr.mxu0 0.0
    %2707 = vmatpush1.msra.mxu0 0.0
    %2708 = vmatprep.subr.mxu0 0.0
    %2709 = vmatpush1.msra.mxu0 0.0
    %2710 = vmatprep.subr.mxu0 0.0
    %2711 = vmatpush1.msra.mxu0 0.0
    %2712 = vmatprep.subr.mxu0 0.0
    %2713 = vmatpush1.msra.mxu0 0.0
    %2714 = vmatprep.subr.mxu0 0.0
    %2715 = vmatpush1.msra.mxu0 0.0
    %2716 = vmatprep.subr.mxu0 0.0
    %2717 = vmatpush1.msra.mxu0 0.0
    %2718 = vmatprep.subr.mxu0 0.0
    %2719 = vmatpush1.msra.mxu0 0.0
    %2720 = vmatprep.subr.mxu0 0.0
    %2721 = vmatpush1.msra.mxu0 0.0
    %2722 = vmatprep.subr.mxu0 0.0
    %2723 = vmatpush1.msra.mxu0 0.0
    %2724 = vmatprep.subr.mxu0 0.0
    %2725 = vmatpush1.msra.mxu0 0.0
    %2726 = vmatprep.subr.mxu0 0.0
    %2727 = vmatpush1.msra.mxu0 0.0
    %2728 = vmatprep.subr.mxu0 0.0
    %2729 = vmatpush1.msra.mxu0 0.0
    %2730 = vmatprep.subr.mxu0 0.0
    %2731 = vmatpush1.msra.mxu0 0.0
    %2732 = vmatprep.subr.mxu0 0.0
    %2733 = vmatpush1.msra.mxu0 0.0
    %2734 = vmatprep.subr.mxu0 0.0
    %2735 = vmatpush1.msra.mxu0 0.0
    %2736 = vmatprep.subr.mxu0 0.0
    %2737 = vmatpush1.msra.mxu0 0.0
    %2738 = vmatprep.mubr.f32.mxu0 0.0
    %v2739 = vand.u32 %v52, 4294901760
    %2740 = vmatmul.mubr.f32.gmra.mrb[0].mxu0 %v2739
    %v2741 = vpop.f32.mrb[0].mxu0
    %v2742 = vadd.f32 %v2638, %v2741
    %v2743 = vpop.f32.mrb[0].mxu0
    %v2744 = vadd.f32 %v2640, %v2743
    %2745 = vdwg.mxu0
    %v2746 = vld [vmem:[#allocation2] sm:$0xff]
    %v2747 = vld [vmem:[#allocation2 + $0x8] sm:$0xff]
    %v2748 = vld [vmem:[#allocation2 + $0x10] sm:$0xff]
    %v2749 = vld [vmem:[#allocation2 + $0x18] sm:$0xff]
    %v2750 = vld [vmem:[#allocation2 + $0x20] sm:$0xff]
    %v2751 = vld [vmem:[#allocation2 + $0x28] sm:$0xff]
    %v2752 = vld [vmem:[#allocation2 + $0x30] sm:$0xff]
    %v2753 = vld [vmem:[#allocation2 + $0x38] sm:$0xff]
    %v2754 = vld [vmem:[#allocation2 + $0x40] sm:$0xff]
    %v2755 = vld [vmem:[#allocation2 + $0x48] sm:$0xff]
    %v2756 = vld [vmem:[#allocation2 + $0x50] sm:$0xff]
    %v2757 = vld [vmem:[#allocation2 + $0x58] sm:$0xff]
    %v2758 = vld [vmem:[#allocation2 + $0x60] sm:$0xff]
    %v2759 = vld [vmem:[#allocation2 + $0x68] sm:$0xff]
    %v2760 = vld [vmem:[#allocation2 + $0x70] sm:$0xff]
    %v2761 = vld [vmem:[#allocation2 + $0x78] sm:$0xff]
    %v2762 = vld [vmem:[#allocation2 + $0x80] sm:$0xff]
    %v2763 = vld [vmem:[#allocation2 + $0x88] sm:$0xff]
    %v2764 = vld [vmem:[#allocation2 + $0x90] sm:$0xff]
    %v2765 = vld [vmem:[#allocation2 + $0x98] sm:$0xff]
    %v2766 = vld [vmem:[#allocation2 + $0xa0] sm:$0xff]
    %v2767 = vld [vmem:[#allocation2 + $0xa8] sm:$0xff]
    %v2768 = vld [vmem:[#allocation2 + $0xb0] sm:$0xff]
    %v2769 = vld [vmem:[#allocation2 + $0xb8] sm:$0xff]
    %v2770 = vld [vmem:[#allocation2 + $0xc0] sm:$0xff]
    %v2771 = vld [vmem:[#allocation2 + $0xc8] sm:$0xff]
    %v2772 = vld [vmem:[#allocation2 + $0xd0] sm:$0xff]
    %v2773 = vld [vmem:[#allocation2 + $0xd8] sm:$0xff]
    %v2774 = vld [vmem:[#allocation2 + $0xe0] sm:$0xff]
    %v2775 = vld [vmem:[#allocation2 + $0xe8] sm:$0xff]
    %v2776 = vld [vmem:[#allocation2 + $0xf0] sm:$0xff]
    %v2777 = vld [vmem:[#allocation2 + $0xf8] sm:$0xff]
    %v2778 = vand.u32 %v2747, 4294901760
    %2779 = vmatprep.subr.mxu0 %v2778
    %v2780 = vand.u32 %v2746, 4294901760
    %2781 = vmatpush1.msra.mxu0 %v2780
    %v2782 = vand.u32 %v2749, 4294901760
    %2783 = vmatprep.subr.mxu0 %v2782
    %v2784 = vand.u32 %v2748, 4294901760
    %2785 = vmatpush1.msra.mxu0 %v2784
    %v2786 = vand.u32 %v2751, 4294901760
    %2787 = vmatprep.subr.mxu0 %v2786
    %v2788 = vand.u32 %v2750, 4294901760
    %2789 = vmatpush1.msra.mxu0 %v2788
    %v2790 = vand.u32 %v2753, 4294901760
    %2791 = vmatprep.subr.mxu0 %v2790
    %v2792 = vand.u32 %v2752, 4294901760
    %2793 = vmatpush1.msra.mxu0 %v2792
    %v2794 = vand.u32 %v2755, 4294901760
    %2795 = vmatprep.subr.mxu0 %v2794
    %v2796 = vand.u32 %v2754, 4294901760
    %2797 = vmatpush1.msra.mxu0 %v2796
    %v2798 = vand.u32 %v2757, 4294901760
    %2799 = vmatprep.subr.mxu0 %v2798
    %v2800 = vand.u32 %v2756, 4294901760
    %2801 = vmatpush1.msra.mxu0 %v2800
    %v2802 = vand.u32 %v2759, 4294901760
    %2803 = vmatprep.subr.mxu0 %v2802
    %v2804 = vand.u32 %v2758, 4294901760
    %2805 = vmatpush1.msra.mxu0 %v2804
    %v2806 = vand.u32 %v2761, 4294901760
    %2807 = vmatprep.subr.mxu0 %v2806
    %v2808 = vand.u32 %v2760, 4294901760
    %2809 = vmatpush1.msra.mxu0 %v2808
    %v2810 = vand.u32 %v2763, 4294901760
    %2811 = vmatprep.subr.mxu0 %v2810
    %v2812 = vand.u32 %v2762, 4294901760
    %2813 = vmatpush1.msra.mxu0 %v2812
    %v2814 = vand.u32 %v2765, 4294901760
    %2815 = vmatprep.subr.mxu0 %v2814
    %v2816 = vand.u32 %v2764, 4294901760
    %2817 = vmatpush1.msra.mxu0 %v2816
    %v2818 = vand.u32 %v2767, 4294901760
    %2819 = vmatprep.subr.mxu0 %v2818
    %v2820 = vand.u32 %v2766, 4294901760
    %2821 = vmatpush1.msra.mxu0 %v2820
    %v2822 = vand.u32 %v2769, 4294901760
    %2823 = vmatprep.subr.mxu0 %v2822
    %v2824 = vand.u32 %v2768, 4294901760
    %2825 = vmatpush1.msra.mxu0 %v2824
    %v2826 = vand.u32 %v2771, 4294901760
    %2827 = vmatprep.subr.mxu0 %v2826
    %v2828 = vand.u32 %v2770, 4294901760
    %2829 = vmatpush1.msra.mxu0 %v2828
    %v2830 = vand.u32 %v2773, 4294901760
    %2831 = vmatprep.subr.mxu0 %v2830
    %v2832 = vand.u32 %v2772, 4294901760
    %2833 = vmatpush1.msra.mxu0 %v2832
    %v2834 = vand.u32 %v2775, 4294901760
    %2835 = vmatprep.subr.mxu0 %v2834
    %v2836 = vand.u32 %v2774, 4294901760
    %2837 = vmatpush1.msra.mxu0 %v2836
    %v2838 = vand.u32 %v2777, 4294901760
    %2839 = vmatprep.subr.mxu0 %v2838
    %v2840 = vand.u32 %v2776, 4294901760
    %2841 = vmatpush1.msra.mxu0 %v2840
    %2842 = vmatprep.subr.mxu0 0.0
    %2843 = vmatpush1.msra.mxu0 0.0
    %2844 = vmatprep.subr.mxu0 0.0
    %2845 = vmatpush1.msra.mxu0 0.0
    %2846 = vmatprep.subr.mxu0 0.0
    %2847 = vmatpush1.msra.mxu0 0.0
    %2848 = vmatprep.subr.mxu0 0.0
    %2849 = vmatpush1.msra.mxu0 0.0
    %2850 = vmatprep.subr.mxu0 0.0
    %2851 = vmatpush1.msra.mxu0 0.0
    %2852 = vmatprep.subr.mxu0 0.0
    %2853 = vmatpush1.msra.mxu0 0.0
    %2854 = vmatprep.subr.mxu0 0.0
    %2855 = vmatpush1.msra.mxu0 0.0
    %2856 = vmatprep.subr.mxu0 0.0
    %2857 = vmatpush1.msra.mxu0 0.0
    %2858 = vmatprep.subr.mxu0 0.0
    %2859 = vmatpush1.msra.mxu0 0.0
    %2860 = vmatprep.subr.mxu0 0.0
    %2861 = vmatpush1.msra.mxu0 0.0
    %2862 = vmatprep.subr.mxu0 0.0
    %2863 = vmatpush1.msra.mxu0 0.0
    %2864 = vmatprep.subr.mxu0 0.0
    %2865 = vmatpush1.msra.mxu0 0.0
    %2866 = vmatprep.subr.mxu0 0.0
    %2867 = vmatpush1.msra.mxu0 0.0
    %2868 = vmatprep.subr.mxu0 0.0
    %2869 = vmatpush1.msra.mxu0 0.0
    %2870 = vmatprep.subr.mxu0 0.0
    %2871 = vmatpush1.msra.mxu0 0.0
    %2872 = vmatprep.subr.mxu0 0.0
    %2873 = vmatpush1.msra.mxu0 0.0
    %2874 = vmatprep.mubr.f32.mxu0 0.0
    %v2875 = vand.u32 %v51, 4294901760
    %v2876 = vsub.f32 %v51, %v2875
    %v2877 = vand.u32 %v2876, 4294901760
    %v2878 = vsub.f32 %v2876, %v2877
    %v2879 = vand.u32 %v2878, 4294901760
    %2880 = vmatmul.mubr.f32.gmra.mrb[0].mxu0 %v2879
    %v2881 = vpop.f32.mrb[0].mxu0
    %v2882 = vadd.f32 %v1032, %v2881
    %v2883 = vpop.f32.mrb[0].mxu0
    %v2884 = vadd.f32 %v1034, %v2883
    %2885 = vdwg.mxu0
    %v2886 = vand.u32 %v2747, 4294901760
    %v2887 = vsub.f32 %v2747, %v2886
    %v2888 = vand.u32 %v2887, 4294901760
    %v2889 = vsub.f32 %v2887, %v2888
    %v2890 = vand.u32 %v2889, 4294901760
    %2891 = vmatprep.subr.mxu0 %v2890
    %v2892 = vand.u32 %v2746, 4294901760
    %v2893 = vsub.f32 %v2746, %v2892
    %v2894 = vand.u32 %v2893, 4294901760
    %v2895 = vsub.f32 %v2893, %v2894
    %v2896 = vand.u32 %v2895, 4294901760
    %2897 = vmatpush1.msra.mxu0 %v2896
    %v2898 = vand.u32 %v2749, 4294901760
    %v2899 = vsub.f32 %v2749, %v2898
    %v2900 = vand.u32 %v2899, 4294901760
    %v2901 = vsub.f32 %v2899, %v2900
    %v2902 = vand.u32 %v2901, 4294901760
    %2903 = vmatprep.subr.mxu0 %v2902
    %v2904 = vand.u32 %v2748, 4294901760
    %v2905 = vsub.f32 %v2748, %v2904
    %v2906 = vand.u32 %v2905, 4294901760
    %v2907 = vsub.f32 %v2905, %v2906
    %v2908 = vand.u32 %v2907, 4294901760
    %2909 = vmatpush1.msra.mxu0 %v2908
    %v2910 = vand.u32 %v2751, 4294901760
    %v2911 = vsub.f32 %v2751, %v2910
    %v2912 = vand.u32 %v2911, 4294901760
    %v2913 = vsub.f32 %v2911, %v2912
    %v2914 = vand.u32 %v2913, 4294901760
    %2915 = vmatprep.subr.mxu0 %v2914
    %v2916 = vand.u32 %v2750, 4294901760
    %v2917 = vsub.f32 %v2750, %v2916
    %v2918 = vand.u32 %v2917, 4294901760
    %v2919 = vsub.f32 %v2917, %v2918
    %v2920 = vand.u32 %v2919, 4294901760
    %2921 = vmatpush1.msra.mxu0 %v2920
    %v2922 = vand.u32 %v2753, 4294901760
    %v2923 = vsub.f32 %v2753, %v2922
    %v2924 = vand.u32 %v2923, 4294901760
    %v2925 = vsub.f32 %v2923, %v2924
    %v2926 = vand.u32 %v2925, 4294901760
    %2927 = vmatprep.subr.mxu0 %v2926
    %v2928 = vand.u32 %v2752, 4294901760
    %v2929 = vsub.f32 %v2752, %v2928
    %v2930 = vand.u32 %v2929, 4294901760
    %v2931 = vsub.f32 %v2929, %v2930
    %v2932 = vand.u32 %v2931, 4294901760
    %2933 = vmatpush1.msra.mxu0 %v2932
    %v2934 = vand.u32 %v2755, 4294901760
    %v2935 = vsub.f32 %v2755, %v2934
    %v2936 = vand.u32 %v2935, 4294901760
    %v2937 = vsub.f32 %v2935, %v2936
    %v2938 = vand.u32 %v2937, 4294901760
    %2939 = vmatprep.subr.mxu0 %v2938
    %v2940 = vand.u32 %v2754, 4294901760
    %v2941 = vsub.f32 %v2754, %v2940
    %v2942 = vand.u32 %v2941, 4294901760
    %v2943 = vsub.f32 %v2941, %v2942
    %v2944 = vand.u32 %v2943, 4294901760
    %2945 = vmatpush1.msra.mxu0 %v2944
    %v2946 = vand.u32 %v2757, 4294901760
    %v2947 = vsub.f32 %v2757, %v2946
    %v2948 = vand.u32 %v2947, 4294901760
    %v2949 = vsub.f32 %v2947, %v2948
    %v2950 = vand.u32 %v2949, 4294901760
    %2951 = vmatprep.subr.mxu0 %v2950
    %v2952 = vand.u32 %v2756, 4294901760
    %v2953 = vsub.f32 %v2756, %v2952
    %v2954 = vand.u32 %v2953, 4294901760
    %v2955 = vsub.f32 %v2953, %v2954
    %v2956 = vand.u32 %v2955, 4294901760
    %2957 = vmatpush1.msra.mxu0 %v2956
    %v2958 = vand.u32 %v2759, 4294901760
    %v2959 = vsub.f32 %v2759, %v2958
    %v2960 = vand.u32 %v2959, 4294901760
    %v2961 = vsub.f32 %v2959, %v2960
    %v2962 = vand.u32 %v2961, 4294901760
    %2963 = vmatprep.subr.mxu0 %v2962
    %v2964 = vand.u32 %v2758, 4294901760
    %v2965 = vsub.f32 %v2758, %v2964
    %v2966 = vand.u32 %v2965, 4294901760
    %v2967 = vsub.f32 %v2965, %v2966
    %v2968 = vand.u32 %v2967, 4294901760
    %2969 = vmatpush1.msra.mxu0 %v2968
    %v2970 = vand.u32 %v2761, 4294901760
    %v2971 = vsub.f32 %v2761, %v2970
    %v2972 = vand.u32 %v2971, 4294901760
    %v2973 = vsub.f32 %v2971, %v2972
    %v2974 = vand.u32 %v2973, 4294901760
    %2975 = vmatprep.subr.mxu0 %v2974
    %v2976 = vand.u32 %v2760, 4294901760
    %v2977 = vsub.f32 %v2760, %v2976
    %v2978 = vand.u32 %v2977, 4294901760
    %v2979 = vsub.f32 %v2977, %v2978
    %v2980 = vand.u32 %v2979, 4294901760
    %2981 = vmatpush1.msra.mxu0 %v2980
    %v2982 = vand.u32 %v2763, 4294901760
    %v2983 = vsub.f32 %v2763, %v2982
    %v2984 = vand.u32 %v2983, 4294901760
    %v2985 = vsub.f32 %v2983, %v2984
    %v2986 = vand.u32 %v2985, 4294901760
    %2987 = vmatprep.subr.mxu0 %v2986
    %v2988 = vand.u32 %v2762, 4294901760
    %v2989 = vsub.f32 %v2762, %v2988
    %v2990 = vand.u32 %v2989, 4294901760
    %v2991 = vsub.f32 %v2989, %v2990
    %v2992 = vand.u32 %v2991, 4294901760
    %2993 = vmatpush1.msra.mxu0 %v2992
    %v2994 = vand.u32 %v2765, 4294901760
    %v2995 = vsub.f32 %v2765, %v2994
    %v2996 = vand.u32 %v2995, 4294901760
    %v2997 = vsub.f32 %v2995, %v2996
    %v2998 = vand.u32 %v2997, 4294901760
    %2999 = vmatprep.subr.mxu0 %v2998
    %v3000 = vand.u32 %v2764, 4294901760
    %v3001 = vsub.f32 %v2764, %v3000
    %v3002 = vand.u32 %v3001, 4294901760
    %v3003 = vsub.f32 %v3001, %v3002
    %v3004 = vand.u32 %v3003, 4294901760
    %3005 = vmatpush1.msra.mxu0 %v3004
    %v3006 = vand.u32 %v2767, 4294901760
    %v3007 = vsub.f32 %v2767, %v3006
    %v3008 = vand.u32 %v3007, 4294901760
    %v3009 = vsub.f32 %v3007, %v3008
    %v3010 = vand.u32 %v3009, 4294901760
    %3011 = vmatprep.subr.mxu0 %v3010
    %v3012 = vand.u32 %v2766, 4294901760
    %v3013 = vsub.f32 %v2766, %v3012
    %v3014 = vand.u32 %v3013, 4294901760
    %v3015 = vsub.f32 %v3013, %v3014
    %v3016 = vand.u32 %v3015, 4294901760
    %3017 = vmatpush1.msra.mxu0 %v3016
    %v3018 = vand.u32 %v2769, 4294901760
    %v3019 = vsub.f32 %v2769, %v3018
    %v3020 = vand.u32 %v3019, 4294901760
    %v3021 = vsub.f32 %v3019, %v3020
    %v3022 = vand.u32 %v3021, 4294901760
    %3023 = vmatprep.subr.mxu0 %v3022
    %v3024 = vand.u32 %v2768, 4294901760
    %v3025 = vsub.f32 %v2768, %v3024
    %v3026 = vand.u32 %v3025, 4294901760
    %v3027 = vsub.f32 %v3025, %v3026
    %v3028 = vand.u32 %v3027, 4294901760
    %3029 = vmatpush1.msra.mxu0 %v3028
    %v3030 = vand.u32 %v2771, 4294901760
    %v3031 = vsub.f32 %v2771, %v3030
    %v3032 = vand.u32 %v3031, 4294901760
    %v3033 = vsub.f32 %v3031, %v3032
    %v3034 = vand.u32 %v3033, 4294901760
    %3035 = vmatprep.subr.mxu0 %v3034
    %v3036 = vand.u32 %v2770, 4294901760
    %v3037 = vsub.f32 %v2770, %v3036
    %v3038 = vand.u32 %v3037, 4294901760
    %v3039 = vsub.f32 %v3037, %v3038
    %v3040 = vand.u32 %v3039, 4294901760
    %3041 = vmatpush1.msra.mxu0 %v3040
    %v3042 = vand.u32 %v2773, 4294901760
    %v3043 = vsub.f32 %v2773, %v3042
    %v3044 = vand.u32 %v3043, 4294901760
    %v3045 = vsub.f32 %v3043, %v3044
    %v3046 = vand.u32 %v3045, 4294901760
    %3047 = vmatprep.subr.mxu0 %v3046
    %v3048 = vand.u32 %v2772, 4294901760
    %v3049 = vsub.f32 %v2772, %v3048
    %v3050 = vand.u32 %v3049, 4294901760
    %v3051 = vsub.f32 %v3049, %v3050
    %v3052 = vand.u32 %v3051, 4294901760
    %3053 = vmatpush1.msra.mxu0 %v3052
    %v3054 = vand.u32 %v2775, 4294901760
    %v3055 = vsub.f32 %v2775, %v3054
    %v3056 = vand.u32 %v3055, 4294901760
    %v3057 = vsub.f32 %v3055, %v3056
    %v3058 = vand.u32 %v3057, 4294901760
    %3059 = vmatprep.subr.mxu0 %v3058
    %v3060 = vand.u32 %v2774, 4294901760
    %v3061 = vsub.f32 %v2774, %v3060
    %v3062 = vand.u32 %v3061, 4294901760
    %v3063 = vsub.f32 %v3061, %v3062
    %v3064 = vand.u32 %v3063, 4294901760
    %3065 = vmatpush1.msra.mxu0 %v3064
    %v3066 = vand.u32 %v2777, 4294901760
    %v3067 = vsub.f32 %v2777, %v3066
    %v3068 = vand.u32 %v3067, 4294901760
    %v3069 = vsub.f32 %v3067, %v3068
    %v3070 = vand.u32 %v3069, 4294901760
    %3071 = vmatprep.subr.mxu0 %v3070
    %v3072 = vand.u32 %v2776, 4294901760
    %v3073 = vsub.f32 %v2776, %v3072
    %v3074 = vand.u32 %v3073, 4294901760
    %v3075 = vsub.f32 %v3073, %v3074
    %v3076 = vand.u32 %v3075, 4294901760
    %3077 = vmatpush1.msra.mxu0 %v3076
    %3078 = vmatprep.subr.mxu0 0.0
    %3079 = vmatpush1.msra.mxu0 0.0
    %3080 = vmatprep.subr.mxu0 0.0
    %3081 = vmatpush1.msra.mxu0 0.0
    %3082 = vmatprep.subr.mxu0 0.0
    %3083 = vmatpush1.msra.mxu0 0.0
    %3084 = vmatprep.subr.mxu0 0.0
    %3085 = vmatpush1.msra.mxu0 0.0
    %3086 = vmatprep.subr.mxu0 0.0
    %3087 = vmatpush1.msra.mxu0 0.0
    %3088 = vmatprep.subr.mxu0 0.0
    %3089 = vmatpush1.msra.mxu0 0.0
    %3090 = vmatprep.subr.mxu0 0.0
    %3091 = vmatpush1.msra.mxu0 0.0
    %3092 = vmatprep.subr.mxu0 0.0
    %3093 = vmatpush1.msra.mxu0 0.0
    %3094 = vmatprep.subr.mxu0 0.0
    %3095 = vmatpush1.msra.mxu0 0.0
    %3096 = vmatprep.subr.mxu0 0.0
    %3097 = vmatpush1.msra.mxu0 0.0
    %3098 = vmatprep.subr.mxu0 0.0
    %3099 = vmatpush1.msra.mxu0 0.0
    %3100 = vmatprep.subr.mxu0 0.0
    %3101 = vmatpush1.msra.mxu0 0.0
    %3102 = vmatprep.subr.mxu0 0.0
    %3103 = vmatpush1.msra.mxu0 0.0
    %3104 = vmatprep.subr.mxu0 0.0
    %3105 = vmatpush1.msra.mxu0 0.0
    %3106 = vmatprep.subr.mxu0 0.0
    %3107 = vmatpush1.msra.mxu0 0.0
    %3108 = vmatprep.subr.mxu0 0.0
    %3109 = vmatpush1.msra.mxu0 0.0
    %3110 = vmatprep.mubr.f32.mxu0 0.0
    %v3111 = vand.u32 %v51, 4294901760
    %3112 = vmatmul.mubr.f32.gmra.mrb[0].mxu0 %v3111
    %v3113 = vpop.f32.mrb[0].mxu0
    %v3114 = vadd.f32 %v2882, %v3113
    %v3115 = vpop.f32.mrb[0].mxu0
    %v3116 = vadd.f32 %v2884, %v3115
    %3117 = vdwg.mxu0
    %v3118 = vand.u32 %v2747, 4294901760
    %v3119 = vsub.f32 %v2747, %v3118
    %3120 = vmatprep.subr.mxu0 %v3119
    %v3121 = vand.u32 %v2746, 4294901760
    %v3122 = vsub.f32 %v2746, %v3121
    %3123 = vmatpush1.msra.mxu0 %v3122
    %v3124 = vand.u32 %v2749, 4294901760
    %v3125 = vsub.f32 %v2749, %v3124
    %3126 = vmatprep.subr.mxu0 %v3125
    %v3127 = vand.u32 %v2748, 4294901760
    %v3128 = vsub.f32 %v2748, %v3127
    %3129 = vmatpush1.msra.mxu0 %v3128
    %v3130 = vand.u32 %v2751, 4294901760
    %v3131 = vsub.f32 %v2751, %v3130
    %3132 = vmatprep.subr.mxu0 %v3131
    %v3133 = vand.u32 %v2750, 4294901760
    %v3134 = vsub.f32 %v2750, %v3133
    %3135 = vmatpush1.msra.mxu0 %v3134
    %v3136 = vand.u32 %v2753, 4294901760
    %v3137 = vsub.f32 %v2753, %v3136
    %3138 = vmatprep.subr.mxu0 %v3137
    %v3139 = vand.u32 %v2752, 4294901760
    %v3140 = vsub.f32 %v2752, %v3139
    %3141 = vmatpush1.msra.mxu0 %v3140
    %v3142 = vand.u32 %v2755, 4294901760
    %v3143 = vsub.f32 %v2755, %v3142
    %3144 = vmatprep.subr.mxu0 %v3143
    %v3145 = vand.u32 %v2754, 4294901760
    %v3146 = vsub.f32 %v2754, %v3145
    %3147 = vmatpush1.msra.mxu0 %v3146
    %v3148 = vand.u32 %v2757, 4294901760
    %v3149 = vsub.f32 %v2757, %v3148
    %3150 = vmatprep.subr.mxu0 %v3149
    %v3151 = vand.u32 %v2756, 4294901760
    %v3152 = vsub.f32 %v2756, %v3151
    %3153 = vmatpush1.msra.mxu0 %v3152
    %v3154 = vand.u32 %v2759, 4294901760
    %v3155 = vsub.f32 %v2759, %v3154
    %3156 = vmatprep.subr.mxu0 %v3155
    %v3157 = vand.u32 %v2758, 4294901760
    %v3158 = vsub.f32 %v2758, %v3157
    %3159 = vmatpush1.msra.mxu0 %v3158
    %v3160 = vand.u32 %v2761, 4294901760
    %v3161 = vsub.f32 %v2761, %v3160
    %3162 = vmatprep.subr.mxu0 %v3161
    %v3163 = vand.u32 %v2760, 4294901760
    %v3164 = vsub.f32 %v2760, %v3163
    %3165 = vmatpush1.msra.mxu0 %v3164
    %v3166 = vand.u32 %v2763, 4294901760
    %v3167 = vsub.f32 %v2763, %v3166
    %3168 = vmatprep.subr.mxu0 %v3167
    %v3169 = vand.u32 %v2762, 4294901760
    %v3170 = vsub.f32 %v2762, %v3169
    %3171 = vmatpush1.msra.mxu0 %v3170
    %v3172 = vand.u32 %v2765, 4294901760
    %v3173 = vsub.f32 %v2765, %v3172
    %3174 = vmatprep.subr.mxu0 %v3173
    %v3175 = vand.u32 %v2764, 4294901760
    %v3176 = vsub.f32 %v2764, %v3175
    %3177 = vmatpush1.msra.mxu0 %v3176
    %v3178 = vand.u32 %v2767, 4294901760
    %v3179 = vsub.f32 %v2767, %v3178
    %3180 = vmatprep.subr.mxu0 %v3179
    %v3181 = vand.u32 %v2766, 4294901760
    %v3182 = vsub.f32 %v2766, %v3181
    %3183 = vmatpush1.msra.mxu0 %v3182
    %v3184 = vand.u32 %v2769, 4294901760
    %v3185 = vsub.f32 %v2769, %v3184
    %3186 = vmatprep.subr.mxu0 %v3185
    %v3187 = vand.u32 %v2768, 4294901760
    %v3188 = vsub.f32 %v2768, %v3187
    %3189 = vmatpush1.msra.mxu0 %v3188
    %v3190 = vand.u32 %v2771, 4294901760
    %v3191 = vsub.f32 %v2771, %v3190
    %3192 = vmatprep.subr.mxu0 %v3191
    %v3193 = vand.u32 %v2770, 4294901760
    %v3194 = vsub.f32 %v2770, %v3193
    %3195 = vmatpush1.msra.mxu0 %v3194
    %v3196 = vand.u32 %v2773, 4294901760
    %v3197 = vsub.f32 %v2773, %v3196
    %3198 = vmatprep.subr.mxu0 %v3197
    %v3199 = vand.u32 %v2772, 4294901760
    %v3200 = vsub.f32 %v2772, %v3199
    %3201 = vmatpush1.msra.mxu0 %v3200
    %v3202 = vand.u32 %v2775, 4294901760
    %v3203 = vsub.f32 %v2775, %v3202
    %3204 = vmatprep.subr.mxu0 %v3203
    %v3205 = vand.u32 %v2774, 4294901760
    %v3206 = vsub.f32 %v2774, %v3205
    %3207 = vmatpush1.msra.mxu0 %v3206
    %v3208 = vand.u32 %v2777, 4294901760
    %v3209 = vsub.f32 %v2777, %v3208
    %3210 = vmatprep.subr.mxu0 %v3209
    %v3211 = vand.u32 %v2776, 4294901760
    %v3212 = vsub.f32 %v2776, %v3211
    %3213 = vmatpush1.msra.mxu0 %v3212
    %3214 = vmatprep.subr.mxu0 0.0
    %3215 = vmatpush1.msra.mxu0 0.0
    %3216 = vmatprep.subr.mxu0 0.0
    %3217 = vmatpush1.msra.mxu0 0.0
    %3218 = vmatprep.subr.mxu0 0.0
    %3219 = vmatpush1.msra.mxu0 0.0
    %3220 = vmatprep.subr.mxu0 0.0
    %3221 = vmatpush1.msra.mxu0 0.0
    %3222 = vmatprep.subr.mxu0 0.0
    %3223 = vmatpush1.msra.mxu0 0.0
    %3224 = vmatprep.subr.mxu0 0.0
    %3225 = vmatpush1.msra.mxu0 0.0
    %3226 = vmatprep.subr.mxu0 0.0
    %3227 = vmatpush1.msra.mxu0 0.0
    %3228 = vmatprep.subr.mxu0 0.0
    %3229 = vmatpush1.msra.mxu0 0.0
    %3230 = vmatprep.subr.mxu0 0.0
    %3231 = vmatpush1.msra.mxu0 0.0
    %3232 = vmatprep.subr.mxu0 0.0
    %3233 = vmatpush1.msra.mxu0 0.0
    %3234 = vmatprep.subr.mxu0 0.0
    %3235 = vmatpush1.msra.mxu0 0.0
    %3236 = vmatprep.subr.mxu0 0.0
    %3237 = vmatpush1.msra.mxu0 0.0
    %3238 = vmatprep.subr.mxu0 0.0
    %3239 = vmatpush1.msra.mxu0 0.0
    %3240 = vmatprep.subr.mxu0 0.0
    %3241 = vmatpush1.msra.mxu0 0.0
    %3242 = vmatprep.subr.mxu0 0.0
    %3243 = vmatpush1.msra.mxu0 0.0
    %3244 = vmatprep.subr.mxu0 0.0
    %3245 = vmatpush1.msra.mxu0 0.0
    %3246 = vmatprep.mubr.f32.mxu0 0.0
    %v3247 = vand.u32 %v51, 4294901760
    %v3248 = vsub.f32 %v51, %v3247
    %3249 = vmatmul.mubr.f32.gmra.mrb[0].mxu0 %v3248
    %v3250 = vpop.f32.mrb[0].mxu0
    %v3251 = vadd.f32 %v3114, %v3250
    %v3252 = vpop.f32.mrb[0].mxu0
    %v3253 = vadd.f32 %v3116, %v3252
    %3254 = vdwg.mxu0
    %v3255 = vand.u32 %v2747, 4294901760
    %3256 = vmatprep.subr.mxu0 %v3255
    %v3257 = vand.u32 %v2746, 4294901760
    %3258 = vmatpush1.msra.mxu0 %v3257
    %v3259 = vand.u32 %v2749, 4294901760
    %3260 = vmatprep.subr.mxu0 %v3259
    %v3261 = vand.u32 %v2748, 4294901760
    %3262 = vmatpush1.msra.mxu0 %v3261
    %v3263 = vand.u32 %v2751, 4294901760
    %3264 = vmatprep.subr.mxu0 %v3263
    %v3265 = vand.u32 %v2750, 4294901760
    %3266 = vmatpush1.msra.mxu0 %v3265
    %v3267 = vand.u32 %v2753, 4294901760
    %3268 = vmatprep.subr.mxu0 %v3267
    %v3269 = vand.u32 %v2752, 4294901760
    %3270 = vmatpush1.msra.mxu0 %v3269
    %v3271 = vand.u32 %v2755, 4294901760
    %3272 = vmatprep.subr.mxu0 %v3271
    %v3273 = vand.u32 %v2754, 4294901760
    %3274 = vmatpush1.msra.mxu0 %v3273
    %v3275 = vand.u32 %v2757, 4294901760
    %3276 = vmatprep.subr.mxu0 %v3275
    %v3277 = vand.u32 %v2756, 4294901760
    %3278 = vmatpush1.msra.mxu0 %v3277
    %v3279 = vand.u32 %v2759, 4294901760
    %3280 = vmatprep.subr.mxu0 %v3279
    %v3281 = vand.u32 %v2758, 4294901760
    %3282 = vmatpush1.msra.mxu0 %v3281
    %v3283 = vand.u32 %v2761, 4294901760
    %3284 = vmatprep.subr.mxu0 %v3283
    %v3285 = vand.u32 %v2760, 4294901760
    %3286 = vmatpush1.msra.mxu0 %v3285
    %v3287 = vand.u32 %v2763, 4294901760
    %3288 = vmatprep.subr.mxu0 %v3287
    %v3289 = vand.u32 %v2762, 4294901760
    %3290 = vmatpush1.msra.mxu0 %v3289
    %v3291 = vand.u32 %v2765, 4294901760
    %3292 = vmatprep.subr.mxu0 %v3291
    %v3293 = vand.u32 %v2764, 4294901760
    %3294 = vmatpush1.msra.mxu0 %v3293
    %v3295 = vand.u32 %v2767, 4294901760
    %3296 = vmatprep.subr.mxu0 %v3295
    %v3297 = vand.u32 %v2766, 4294901760
    %3298 = vmatpush1.msra.mxu0 %v3297
    %v3299 = vand.u32 %v2769, 4294901760
    %3300 = vmatprep.subr.mxu0 %v3299
    %v3301 = vand.u32 %v2768, 4294901760
    %3302 = vmatpush1.msra.mxu0 %v3301
    %v3303 = vand.u32 %v2771, 4294901760
    %3304 = vmatprep.subr.mxu0 %v3303
    %v3305 = vand.u32 %v2770, 4294901760
    %3306 = vmatpush1.msra.mxu0 %v3305
    %v3307 = vand.u32 %v2773, 4294901760
    %3308 = vmatprep.subr.mxu0 %v3307
    %v3309 = vand.u32 %v2772, 4294901760
    %3310 = vmatpush1.msra.mxu0 %v3309
    %v3311 = vand.u32 %v2775, 4294901760
    %3312 = vmatprep.subr.mxu0 %v3311
    %v3313 = vand.u32 %v2774, 4294901760
    %3314 = vmatpush1.msra.mxu0 %v3313
    %v3315 = vand.u32 %v2777, 4294901760
    %3316 = vmatprep.subr.mxu0 %v3315
    %v3317 = vand.u32 %v2776, 4294901760
    %3318 = vmatpush1.msra.mxu0 %v3317
    %3319 = vmatprep.subr.mxu0 0.0
    %3320 = vmatpush1.msra.mxu0 0.0
    %3321 = vmatprep.subr.mxu0 0.0
    %3322 = vmatpush1.msra.mxu0 0.0
    %3323 = vmatprep.subr.mxu0 0.0
    %3324 = vmatpush1.msra.mxu0 0.0
    %3325 = vmatprep.subr.mxu0 0.0
    %3326 = vmatpush1.msra.mxu0 0.0
    %3327 = vmatprep.subr.mxu0 0.0
    %3328 = vmatpush1.msra.mxu0 0.0
    %3329 = vmatprep.subr.mxu0 0.0
    %3330 = vmatpush1.msra.mxu0 0.0
    %3331 = vmatprep.subr.mxu0 0.0
    %3332 = vmatpush1.msra.mxu0 0.0
    %3333 = vmatprep.subr.mxu0 0.0
    %3334 = vmatpush1.msra.mxu0 0.0
    %3335 = vmatprep.subr.mxu0 0.0
    %3336 = vmatpush1.msra.mxu0 0.0
    %3337 = vmatprep.subr.mxu0 0.0
    %3338 = vmatpush1.msra.mxu0 0.0
    %3339 = vmatprep.subr.mxu0 0.0
    %3340 = vmatpush1.msra.mxu0 0.0
    %3341 = vmatprep.subr.mxu0 0.0
    %3342 = vmatpush1.msra.mxu0 0.0
    %3343 = vmatprep.subr.mxu0 0.0
    %3344 = vmatpush1.msra.mxu0 0.0
    %3345 = vmatprep.subr.mxu0 0.0
    %3346 = vmatpush1.msra.mxu0 0.0
    %3347 = vmatprep.subr.mxu0 0.0
    %3348 = vmatpush1.msra.mxu0 0.0
    %3349 = vmatprep.subr.mxu0 0.0
    %3350 = vmatpush1.msra.mxu0 0.0
    %3351 = vmatprep.mubr.f32.mxu0 0.0
    %v3352 = vand.u32 %v51, 4294901760
    %v3353 = vsub.f32 %v51, %v3352
    %v3354 = vand.u32 %v3353, 4294901760
    %3355 = vmatmul.mubr.f32.gmra.mrb[0].mxu0 %v3354
    %v3356 = vpop.f32.mrb[0].mxu0
    %v3357 = vadd.f32 %v3251, %v3356
    %v3358 = vpop.f32.mrb[0].mxu0
    %v3359 = vadd.f32 %v3253, %v3358
    %3360 = vdwg.mxu0
    %v3361 = vand.u32 %v2747, 4294901760
    %v3362 = vsub.f32 %v2747, %v3361
    %v3363 = vand.u32 %v3362, 4294901760
    %3364 = vmatprep.subr.mxu0 %v3363
    %v3365 = vand.u32 %v2746, 4294901760
    %v3366 = vsub.f32 %v2746, %v3365
    %v3367 = vand.u32 %v3366, 4294901760
    %3368 = vmatpush1.msra.mxu0 %v3367
    %v3369 = vand.u32 %v2749, 4294901760
    %v3370 = vsub.f32 %v2749, %v3369
    %v3371 = vand.u32 %v3370, 4294901760
    %3372 = vmatprep.subr.mxu0 %v3371
    %v3373 = vand.u32 %v2748, 4294901760
    %v3374 = vsub.f32 %v2748, %v3373
    %v3375 = vand.u32 %v3374, 4294901760
    %3376 = vmatpush1.msra.mxu0 %v3375
    %v3377 = vand.u32 %v2751, 4294901760
    %v3378 = vsub.f32 %v2751, %v3377
    %v3379 = vand.u32 %v3378, 4294901760
    %3380 = vmatprep.subr.mxu0 %v3379
    %v3381 = vand.u32 %v2750, 4294901760
    %v3382 = vsub.f32 %v2750, %v3381
    %v3383 = vand.u32 %v3382, 4294901760
    %3384 = vmatpush1.msra.mxu0 %v3383
    %v3385 = vand.u32 %v2753, 4294901760
    %v3386 = vsub.f32 %v2753, %v3385
    %v3387 = vand.u32 %v3386, 4294901760
    %3388 = vmatprep.subr.mxu0 %v3387
    %v3389 = vand.u32 %v2752, 4294901760
    %v3390 = vsub.f32 %v2752, %v3389
    %v3391 = vand.u32 %v3390, 4294901760
    %3392 = vmatpush1.msra.mxu0 %v3391
    %v3393 = vand.u32 %v2755, 4294901760
    %v3394 = vsub.f32 %v2755, %v3393
    %v3395 = vand.u32 %v3394, 4294901760
    %3396 = vmatprep.subr.mxu0 %v3395
    %v3397 = vand.u32 %v2754, 4294901760
    %v3398 = vsub.f32 %v2754, %v3397
    %v3399 = vand.u32 %v3398, 4294901760
    %3400 = vmatpush1.msra.mxu0 %v3399
    %v3401 = vand.u32 %v2757, 4294901760
    %v3402 = vsub.f32 %v2757, %v3401
    %v3403 = vand.u32 %v3402, 4294901760
    %3404 = vmatprep.subr.mxu0 %v3403
    %v3405 = vand.u32 %v2756, 4294901760
    %v3406 = vsub.f32 %v2756, %v3405
    %v3407 = vand.u32 %v3406, 4294901760
    %3408 = vmatpush1.msra.mxu0 %v3407
    %v3409 = vand.u32 %v2759, 4294901760
    %v3410 = vsub.f32 %v2759, %v3409
    %v3411 = vand.u32 %v3410, 4294901760
    %3412 = vmatprep.subr.mxu0 %v3411
    %v3413 = vand.u32 %v2758, 4294901760
    %v3414 = vsub.f32 %v2758, %v3413
    %v3415 = vand.u32 %v3414, 4294901760
    %3416 = vmatpush1.msra.mxu0 %v3415
    %v3417 = vand.u32 %v2761, 4294901760
    %v3418 = vsub.f32 %v2761, %v3417
    %v3419 = vand.u32 %v3418, 4294901760
    %3420 = vmatprep.subr.mxu0 %v3419
    %v3421 = vand.u32 %v2760, 4294901760
    %v3422 = vsub.f32 %v2760, %v3421
    %v3423 = vand.u32 %v3422, 4294901760
    %3424 = vmatpush1.msra.mxu0 %v3423
    %v3425 = vand.u32 %v2763, 4294901760
    %v3426 = vsub.f32 %v2763, %v3425
    %v3427 = vand.u32 %v3426, 4294901760
    %3428 = vmatprep.subr.mxu0 %v3427
    %v3429 = vand.u32 %v2762, 4294901760
    %v3430 = vsub.f32 %v2762, %v3429
    %v3431 = vand.u32 %v3430, 4294901760
    %3432 = vmatpush1.msra.mxu0 %v3431
    %v3433 = vand.u32 %v2765, 4294901760
    %v3434 = vsub.f32 %v2765, %v3433
    %v3435 = vand.u32 %v3434, 4294901760
    %3436 = vmatprep.subr.mxu0 %v3435
    %v3437 = vand.u32 %v2764, 4294901760
    %v3438 = vsub.f32 %v2764, %v3437
    %v3439 = vand.u32 %v3438, 4294901760
    %3440 = vmatpush1.msra.mxu0 %v3439
    %v3441 = vand.u32 %v2767, 4294901760
    %v3442 = vsub.f32 %v2767, %v3441
    %v3443 = vand.u32 %v3442, 4294901760
    %3444 = vmatprep.subr.mxu0 %v3443
    %v3445 = vand.u32 %v2766, 4294901760
    %v3446 = vsub.f32 %v2766, %v3445
    %v3447 = vand.u32 %v3446, 4294901760
    %3448 = vmatpush1.msra.mxu0 %v3447
    %v3449 = vand.u32 %v2769, 4294901760
    %v3450 = vsub.f32 %v2769, %v3449
    %v3451 = vand.u32 %v3450, 4294901760
    %3452 = vmatprep.subr.mxu0 %v3451
    %v3453 = vand.u32 %v2768, 4294901760
    %v3454 = vsub.f32 %v2768, %v3453
    %v3455 = vand.u32 %v3454, 4294901760
    %3456 = vmatpush1.msra.mxu0 %v3455
    %v3457 = vand.u32 %v2771, 4294901760
    %v3458 = vsub.f32 %v2771, %v3457
    %v3459 = vand.u32 %v3458, 4294901760
    %3460 = vmatprep.subr.mxu0 %v3459
    %v3461 = vand.u32 %v2770, 4294901760
    %v3462 = vsub.f32 %v2770, %v3461
    %v3463 = vand.u32 %v3462, 4294901760
    %3464 = vmatpush1.msra.mxu0 %v3463
    %v3465 = vand.u32 %v2773, 4294901760
    %v3466 = vsub.f32 %v2773, %v3465
    %v3467 = vand.u32 %v3466, 4294901760
    %3468 = vmatprep.subr.mxu0 %v3467
    %v3469 = vand.u32 %v2772, 4294901760
    %v3470 = vsub.f32 %v2772, %v3469
    %v3471 = vand.u32 %v3470, 4294901760
    %3472 = vmatpush1.msra.mxu0 %v3471
    %v3473 = vand.u32 %v2775, 4294901760
    %v3474 = vsub.f32 %v2775, %v3473
    %v3475 = vand.u32 %v3474, 4294901760
    %3476 = vmatprep.subr.mxu0 %v3475
    %v3477 = vand.u32 %v2774, 4294901760
    %v3478 = vsub.f32 %v2774, %v3477
    %v3479 = vand.u32 %v3478, 4294901760
    %3480 = vmatpush1.msra.mxu0 %v3479
    %v3481 = vand.u32 %v2777, 4294901760
    %v3482 = vsub.f32 %v2777, %v3481
    %v3483 = vand.u32 %v3482, 4294901760
    %3484 = vmatprep.subr.mxu0 %v3483
    %v3485 = vand.u32 %v2776, 4294901760
    %v3486 = vsub.f32 %v2776, %v3485
    %v3487 = vand.u32 %v3486, 4294901760
    %3488 = vmatpush1.msra.mxu0 %v3487
    %3489 = vmatprep.subr.mxu0 0.0
    %3490 = vmatpush1.msra.mxu0 0.0
    %3491 = vmatprep.subr.mxu0 0.0
    %3492 = vmatpush1.msra.mxu0 0.0
    %3493 = vmatprep.subr.mxu0 0.0
    %3494 = vmatpush1.msra.mxu0 0.0
    %3495 = vmatprep.subr.mxu0 0.0
    %3496 = vmatpush1.msra.mxu0 0.0
    %3497 = vmatprep.subr.mxu0 0.0
    %3498 = vmatpush1.msra.mxu0 0.0
    %3499 = vmatprep.subr.mxu0 0.0
    %3500 = vmatpush1.msra.mxu0 0.0
    %3501 = vmatprep.subr.mxu0 0.0
    %3502 = vmatpush1.msra.mxu0 0.0
    %3503 = vmatprep.subr.mxu0 0.0
    %3504 = vmatpush1.msra.mxu0 0.0
    %3505 = vmatprep.subr.mxu0 0.0
    %3506 = vmatpush1.msra.mxu0 0.0
    %3507 = vmatprep.subr.mxu0 0.0
    %3508 = vmatpush1.msra.mxu0 0.0
    %3509 = vmatprep.subr.mxu0 0.0
    %3510 = vmatpush1.msra.mxu0 0.0
    %3511 = vmatprep.subr.mxu0 0.0
    %3512 = vmatpush1.msra.mxu0 0.0
    %3513 = vmatprep.subr.mxu0 0.0
    %3514 = vmatpush1.msra.mxu0 0.0
    %3515 = vmatprep.subr.mxu0 0.0
    %3516 = vmatpush1.msra.mxu0 0.0
    %3517 = vmatprep.subr.mxu0 0.0
    %3518 = vmatpush1.msra.mxu0 0.0
    %3519 = vmatprep.subr.mxu0 0.0
    %3520 = vmatpush1.msra.mxu0 0.0
    %3521 = vmatprep.mubr.f32.mxu0 0.0
    %v3522 = vand.u32 %v51, 4294901760
    %3523 = vmatmul.mubr.f32.gmra.mrb[0].mxu0 %v3522
    %v3524 = vpop.f32.mrb[0].mxu0
    %v3525 = vadd.f32 %v3357, %v3524
    %v3526 = vpop.f32.mrb[0].mxu0
    %v3527 = vadd.f32 %v3359, %v3526
    %3528 = vdwg.mxu0
    %v3529 = vand.u32 %v2747, 4294901760
    %3530 = vmatprep.subr.mxu0 %v3529
    %v3531 = vand.u32 %v2746, 4294901760
    %3532 = vmatpush1.msra.mxu0 %v3531
    %v3533 = vand.u32 %v2749, 4294901760
    %3534 = vmatprep.subr.mxu0 %v3533
    %v3535 = vand.u32 %v2748, 4294901760
    %3536 = vmatpush1.msra.mxu0 %v3535
    %v3537 = vand.u32 %v2751, 4294901760
    %3538 = vmatprep.subr.mxu0 %v3537
    %v3539 = vand.u32 %v2750, 4294901760
    %3540 = vmatpush1.msra.mxu0 %v3539
    %v3541 = vand.u32 %v2753, 4294901760
    %3542 = vmatprep.subr.mxu0 %v3541
    %v3543 = vand.u32 %v2752, 4294901760
    %3544 = vmatpush1.msra.mxu0 %v3543
    %v3545 = vand.u32 %v2755, 4294901760
    %3546 = vmatprep.subr.mxu0 %v3545
    %v3547 = vand.u32 %v2754, 4294901760
    %3548 = vmatpush1.msra.mxu0 %v3547
    %v3549 = vand.u32 %v2757, 4294901760
    %3550 = vmatprep.subr.mxu0 %v3549
    %v3551 = vand.u32 %v2756, 4294901760
    %3552 = vmatpush1.msra.mxu0 %v3551
    %v3553 = vand.u32 %v2759, 4294901760
    %3554 = vmatprep.subr.mxu0 %v3553
    %v3555 = vand.u32 %v2758, 4294901760
    %3556 = vmatpush1.msra.mxu0 %v3555
    %v3557 = vand.u32 %v2761, 4294901760
    %3558 = vmatprep.subr.mxu0 %v3557
    %v3559 = vand.u32 %v2760, 4294901760
    %3560 = vmatpush1.msra.mxu0 %v3559
    %v3561 = vand.u32 %v2763, 4294901760
    %3562 = vmatprep.subr.mxu0 %v3561
    %v3563 = vand.u32 %v2762, 4294901760
    %3564 = vmatpush1.msra.mxu0 %v3563
    %v3565 = vand.u32 %v2765, 4294901760
    %3566 = vmatprep.subr.mxu0 %v3565
    %v3567 = vand.u32 %v2764, 4294901760
    %3568 = vmatpush1.msra.mxu0 %v3567
    %v3569 = vand.u32 %v2767, 4294901760
    %3570 = vmatprep.subr.mxu0 %v3569
    %v3571 = vand.u32 %v2766, 4294901760
    %3572 = vmatpush1.msra.mxu0 %v3571
    %v3573 = vand.u32 %v2769, 4294901760
    %3574 = vmatprep.subr.mxu0 %v3573
    %v3575 = vand.u32 %v2768, 4294901760
    %3576 = vmatpush1.msra.mxu0 %v3575
    %v3577 = vand.u32 %v2771, 4294901760
    %3578 = vmatprep.subr.mxu0 %v3577
    %v3579 = vand.u32 %v2770, 4294901760
    %3580 = vmatpush1.msra.mxu0 %v3579
    %v3581 = vand.u32 %v2773, 4294901760
    %3582 = vmatprep.subr.mxu0 %v3581
    %v3583 = vand.u32 %v2772, 4294901760
    %3584 = vmatpush1.msra.mxu0 %v3583
    %v3585 = vand.u32 %v2775, 4294901760
    %3586 = vmatprep.subr.mxu0 %v3585
    %v3587 = vand.u32 %v2774, 4294901760
    %3588 = vmatpush1.msra.mxu0 %v3587
    %v3589 = vand.u32 %v2777, 4294901760
    %3590 = vmatprep.subr.mxu0 %v3589
    %v3591 = vand.u32 %v2776, 4294901760
    %3592 = vmatpush1.msra.mxu0 %v3591
    %3593 = vmatprep.subr.mxu0 0.0
    %3594 = vmatpush1.msra.mxu0 0.0
    %3595 = vmatprep.subr.mxu0 0.0
    %3596 = vmatpush1.msra.mxu0 0.0
    %3597 = vmatprep.subr.mxu0 0.0
    %3598 = vmatpush1.msra.mxu0 0.0
    %3599 = vmatprep.subr.mxu0 0.0
    %3600 = vmatpush1.msra.mxu0 0.0
    %3601 = vmatprep.subr.mxu0 0.0
    %3602 = vmatpush1.msra.mxu0 0.0
    %3603 = vmatprep.subr.mxu0 0.0
    %3604 = vmatpush1.msra.mxu0 0.0
    %3605 = vmatprep.subr.mxu0 0.0
    %3606 = vmatpush1.msra.mxu0 0.0
    %3607 = vmatprep.subr.mxu0 0.0
    %3608 = vmatpush1.msra.mxu0 0.0
    %3609 = vmatprep.subr.mxu0 0.0
    %3610 = vmatpush1.msra.mxu0 0.0
    %3611 = vmatprep.subr.mxu0 0.0
    %3612 = vmatpush1.msra.mxu0 0.0
    %3613 = vmatprep.subr.mxu0 0.0
    %3614 = vmatpush1.msra.mxu0 0.0
    %3615 = vmatprep.subr.mxu0 0.0
    %3616 = vmatpush1.msra.mxu0 0.0
    %3617 = vmatprep.subr.mxu0 0.0
    %3618 = vmatpush1.msra.mxu0 0.0
    %3619 = vmatprep.subr.mxu0 0.0
    %3620 = vmatpush1.msra.mxu0 0.0
    %3621 = vmatprep.subr.mxu0 0.0
    %3622 = vmatpush1.msra.mxu0 0.0
    %3623 = vmatprep.subr.mxu0 0.0
    %3624 = vmatpush1.msra.mxu0 0.0
    %3625 = vmatprep.mubr.f32.mxu0 0.0
    %v3626 = vand.u32 %v51, 4294901760
    %3627 = vmatmul.mubr.f32.gmra.mrb[0].mxu0 %v3626
    %v3628 = vpop.f32.mrb[0].mxu0
    %v3629 = vadd.f32 %v3525, %v3628
    %v3630 = vpop.f32.mrb[0].mxu0
    %v3631 = vadd.f32 %v3527, %v3630
    %3632 = vdwg.mxu0
    %v3633 = vtanh.pop %v3631
    %v3634 = vxor.u32 %v3629, 2147483648
    %v3635 = vmul.f32 %v3634, 1.442695
    %v3636 = vpow.pop %v3635
    %v3637 = vadd.f32 %v3636, 1.0
    %v3638 = vrcp.pop %v3637
    %v3639 = vmul.f32 1.0, %v3638
    %v3640 = vmul.f32 %v3639, %v51
    %v3641 = vadd.f32 %v3633, %v3640
    %s3642 = scalar_lea.vmem [#allocation2], 256
    %v3643 = vld [vmem:[%s3642] sm:$0xff]
    %v3644 = vld [vmem:[%s3642 + $0x8] sm:$0xff]
    %v3645 = vld [vmem:[%s3642 + $0x10] sm:$0xff]
    %v3646 = vld [vmem:[%s3642 + $0x18] sm:$0xff]
    %v3647 = vld [vmem:[%s3642 + $0x20] sm:$0xff]
    %v3648 = vld [vmem:[%s3642 + $0x28] sm:$0xff]
    %v3649 = vld [vmem:[%s3642 + $0x30] sm:$0xff]
    %v3650 = vld [vmem:[%s3642 + $0x38] sm:$0xff]
    %v3651 = vld [vmem:[%s3642 + $0x40] sm:$0xff]
    %v3652 = vld [vmem:[%s3642 + $0x48] sm:$0xff]
    %v3653 = vld [vmem:[%s3642 + $0x50] sm:$0xff]
    %v3654 = vld [vmem:[%s3642 + $0x58] sm:$0xff]
    %v3655 = vld [vmem:[%s3642 + $0x60] sm:$0xff]
    %v3656 = vld [vmem:[%s3642 + $0x68] sm:$0xff]
    %v3657 = vld [vmem:[%s3642 + $0x70] sm:$0xff]
    %v3658 = vld [vmem:[%s3642 + $0x78] sm:$0xff]
    %v3659 = vld [vmem:[%s3642 + $0x80] sm:$0xff]
    %v3660 = vld [vmem:[%s3642 + $0x88] sm:$0xff]
    %v3661 = vld [vmem:[%s3642 + $0x90] sm:$0xff]
    %v3662 = vld [vmem:[%s3642 + $0x98] sm:$0xff]
    %v3663 = vld [vmem:[%s3642 + $0xa0] sm:$0xff]
    %v3664 = vld [vmem:[%s3642 + $0xa8] sm:$0xff]
    %v3665 = vld [vmem:[%s3642 + $0xb0] sm:$0xff]
    %v3666 = vld [vmem:[%s3642 + $0xb8] sm:$0xff]
    %v3667 = vld [vmem:[%s3642 + $0xc0] sm:$0xff]
    %v3668 = vld [vmem:[%s3642 + $0xc8] sm:$0xff]
    %v3669 = vld [vmem:[%s3642 + $0xd0] sm:$0xff]
    %v3670 = vld [vmem:[%s3642 + $0xd8] sm:$0xff]
    %v3671 = vld [vmem:[%s3642 + $0xe0] sm:$0xff]
    %v3672 = vld [vmem:[%s3642 + $0xe8] sm:$0xff]
    %v3673 = vld [vmem:[%s3642 + $0xf0] sm:$0xff]
    %v3674 = vld [vmem:[%s3642 + $0xf8] sm:$0xff]
    %v3675 = vand.u32 %v3644, 4294901760
    %3676 = vmatprep.subr.mxu0 %v3675
    %v3677 = vand.u32 %v3643, 4294901760
    %3678 = vmatpush1.msra.mxu0 %v3677
    %v3679 = vand.u32 %v3646, 4294901760
    %3680 = vmatprep.subr.mxu0 %v3679
    %v3681 = vand.u32 %v3645, 4294901760
    %3682 = vmatpush1.msra.mxu0 %v3681
    %v3683 = vand.u32 %v3648, 4294901760
    %3684 = vmatprep.subr.mxu0 %v3683
    %v3685 = vand.u32 %v3647, 4294901760
    %3686 = vmatpush1.msra.mxu0 %v3685
    %v3687 = vand.u32 %v3650, 4294901760
    %3688 = vmatprep.subr.mxu0 %v3687
    %v3689 = vand.u32 %v3649, 4294901760
    %3690 = vmatpush1.msra.mxu0 %v3689
    %v3691 = vand.u32 %v3652, 4294901760
    %3692 = vmatprep.subr.mxu0 %v3691
    %v3693 = vand.u32 %v3651, 4294901760
    %3694 = vmatpush1.msra.mxu0 %v3693
    %v3695 = vand.u32 %v3654, 4294901760
    %3696 = vmatprep.subr.mxu0 %v3695
    %v3697 = vand.u32 %v3653, 4294901760
    %3698 = vmatpush1.msra.mxu0 %v3697
    %v3699 = vand.u32 %v3656, 4294901760
    %3700 = vmatprep.subr.mxu0 %v3699
    %v3701 = vand.u32 %v3655, 4294901760
    %3702 = vmatpush1.msra.mxu0 %v3701
    %v3703 = vand.u32 %v3658, 4294901760
    %3704 = vmatprep.subr.mxu0 %v3703
    %v3705 = vand.u32 %v3657, 4294901760
    %3706 = vmatpush1.msra.mxu0 %v3705
    %v3707 = vand.u32 %v3660, 4294901760
    %3708 = vmatprep.subr.mxu0 %v3707
    %v3709 = vand.u32 %v3659, 4294901760
    %3710 = vmatpush1.msra.mxu0 %v3709
    %v3711 = vand.u32 %v3662, 4294901760
    %3712 = vmatprep.subr.mxu0 %v3711
    %v3713 = vand.u32 %v3661, 4294901760
    %3714 = vmatpush1.msra.mxu0 %v3713
    %v3715 = vand.u32 %v3664, 4294901760
    %3716 = vmatprep.subr.mxu0 %v3715
    %v3717 = vand.u32 %v3663, 4294901760
    %3718 = vmatpush1.msra.mxu0 %v3717
    %v3719 = vand.u32 %v3666, 4294901760
    %3720 = vmatprep.subr.mxu0 %v3719
    %v3721 = vand.u32 %v3665, 4294901760
    %3722 = vmatpush1.msra.mxu0 %v3721
    %v3723 = vand.u32 %v3668, 4294901760
    %3724 = vmatprep.subr.mxu0 %v3723
    %v3725 = vand.u32 %v3667, 4294901760
    %3726 = vmatpush1.msra.mxu0 %v3725
    %v3727 = vand.u32 %v3670, 4294901760
    %3728 = vmatprep.subr.mxu0 %v3727
    %v3729 = vand.u32 %v3669, 4294901760
    %3730 = vmatpush1.msra.mxu0 %v3729
    %v3731 = vand.u32 %v3672, 4294901760
    %3732 = vmatprep.subr.mxu0 %v3731
    %v3733 = vand.u32 %v3671, 4294901760
    %3734 = vmatpush1.msra.mxu0 %v3733
    %v3735 = vand.u32 %v3674, 4294901760
    %3736 = vmatprep.subr.mxu0 %v3735
    %v3737 = vand.u32 %v3673, 4294901760
    %3738 = vmatpush1.msra.mxu0 %v3737
    %3739 = vmatprep.subr.mxu0 0.0
    %3740 = vmatpush1.msra.mxu0 0.0
    %3741 = vmatprep.subr.mxu0 0.0
    %3742 = vmatpush1.msra.mxu0 0.0
    %3743 = vmatprep.subr.mxu0 0.0
    %3744 = vmatpush1.msra.mxu0 0.0
    %3745 = vmatprep.subr.mxu0 0.0
    %3746 = vmatpush1.msra.mxu0 0.0
    %3747 = vmatprep.subr.mxu0 0.0
    %3748 = vmatpush1.msra.mxu0 0.0
    %3749 = vmatprep.subr.mxu0 0.0
    %3750 = vmatpush1.msra.mxu0 0.0
    %3751 = vmatprep.subr.mxu0 0.0
    %3752 = vmatpush1.msra.mxu0 0.0
    %3753 = vmatprep.subr.mxu0 0.0
    %3754 = vmatpush1.msra.mxu0 0.0
    %3755 = vmatprep.subr.mxu0 0.0
    %3756 = vmatpush1.msra.mxu0 0.0
    %3757 = vmatprep.subr.mxu0 0.0
    %3758 = vmatpush1.msra.mxu0 0.0
    %3759 = vmatprep.subr.mxu0 0.0
    %3760 = vmatpush1.msra.mxu0 0.0
    %3761 = vmatprep.subr.mxu0 0.0
    %3762 = vmatpush1.msra.mxu0 0.0
    %3763 = vmatprep.subr.mxu0 0.0
    %3764 = vmatpush1.msra.mxu0 0.0
    %3765 = vmatprep.subr.mxu0 0.0
    %3766 = vmatpush1.msra.mxu0 0.0
    %3767 = vmatprep.subr.mxu0 0.0
    %3768 = vmatpush1.msra.mxu0 0.0
    %3769 = vmatprep.subr.mxu0 0.0
    %3770 = vmatpush1.msra.mxu0 0.0
    %3771 = vmatprep.mubr.f32.mxu0 0.0
    %v3772 = vand.u32 %v3641, 4294901760
    %v3773 = vsub.f32 %v3641, %v3772
    %v3774 = vand.u32 %v3773, 4294901760
    %v3775 = vsub.f32 %v3773, %v3774
    %v3776 = vand.u32 %v3775, 4294901760
    %3777 = vmatmul.mubr.f32.gmra.mrb[0].mxu0 %v3776
    %v3778 = vpop.f32.mrb[0].mxu0
    %v3779 = vadd.f32 %v1887, %v3778
    %v3780 = vpop.f32.mrb[0].mxu0
    %v3781 = vadd.f32 %v1889, %v3780
    %3782 = vdwg.mxu0
    %v3783 = vand.u32 %v3644, 4294901760
    %v3784 = vsub.f32 %v3644, %v3783
    %v3785 = vand.u32 %v3784, 4294901760
    %v3786 = vsub.f32 %v3784, %v3785
    %v3787 = vand.u32 %v3786, 4294901760
    %3788 = vmatprep.subr.mxu0 %v3787
    %v3789 = vand.u32 %v3643, 4294901760
    %v3790 = vsub.f32 %v3643, %v3789
    %v3791 = vand.u32 %v3790, 4294901760
    %v3792 = vsub.f32 %v3790, %v3791
    %v3793 = vand.u32 %v3792, 4294901760
    %3794 = vmatpush1.msra.mxu0 %v3793
    %v3795 = vand.u32 %v3646, 4294901760
    %v3796 = vsub.f32 %v3646, %v3795
    %v3797 = vand.u32 %v3796, 4294901760
    %v3798 = vsub.f32 %v3796, %v3797
    %v3799 = vand.u32 %v3798, 4294901760
    %3800 = vmatprep.subr.mxu0 %v3799
    %v3801 = vand.u32 %v3645, 4294901760
    %v3802 = vsub.f32 %v3645, %v3801
    %v3803 = vand.u32 %v3802, 4294901760
    %v3804 = vsub.f32 %v3802, %v3803
    %v3805 = vand.u32 %v3804, 4294901760
    %3806 = vmatpush1.msra.mxu0 %v3805
    %v3807 = vand.u32 %v3648, 4294901760
    %v3808 = vsub.f32 %v3648, %v3807
    %v3809 = vand.u32 %v3808, 4294901760
    %v3810 = vsub.f32 %v3808, %v3809
    %v3811 = vand.u32 %v3810, 4294901760
    %3812 = vmatprep.subr.mxu0 %v3811
    %v3813 = vand.u32 %v3647, 4294901760
    %v3814 = vsub.f32 %v3647, %v3813
    %v3815 = vand.u32 %v3814, 4294901760
    %v3816 = vsub.f32 %v3814, %v3815
    %v3817 = vand.u32 %v3816, 4294901760
    %3818 = vmatpush1.msra.mxu0 %v3817
    %v3819 = vand.u32 %v3650, 4294901760
    %v3820 = vsub.f32 %v3650, %v3819
    %v3821 = vand.u32 %v3820, 4294901760
    %v3822 = vsub.f32 %v3820, %v3821
    %v3823 = vand.u32 %v3822, 4294901760
    %3824 = vmatprep.subr.mxu0 %v3823
    %v3825 = vand.u32 %v3649, 4294901760
    %v3826 = vsub.f32 %v3649, %v3825
    %v3827 = vand.u32 %v3826, 4294901760
    %v3828 = vsub.f32 %v3826, %v3827
    %v3829 = vand.u32 %v3828, 4294901760
    %3830 = vmatpush1.msra.mxu0 %v3829
    %v3831 = vand.u32 %v3652, 4294901760
    %v3832 = vsub.f32 %v3652, %v3831
    %v3833 = vand.u32 %v3832, 4294901760
    %v3834 = vsub.f32 %v3832, %v3833
    %v3835 = vand.u32 %v3834, 4294901760
    %3836 = vmatprep.subr.mxu0 %v3835
    %v3837 = vand.u32 %v3651, 4294901760
    %v3838 = vsub.f32 %v3651, %v3837
    %v3839 = vand.u32 %v3838, 4294901760
    %v3840 = vsub.f32 %v3838, %v3839
    %v3841 = vand.u32 %v3840, 4294901760
    %3842 = vmatpush1.msra.mxu0 %v3841
    %v3843 = vand.u32 %v3654, 4294901760
    %v3844 = vsub.f32 %v3654, %v3843
    %v3845 = vand.u32 %v3844, 4294901760
    %v3846 = vsub.f32 %v3844, %v3845
    %v3847 = vand.u32 %v3846, 4294901760
    %3848 = vmatprep.subr.mxu0 %v3847
    %v3849 = vand.u32 %v3653, 4294901760
    %v3850 = vsub.f32 %v3653, %v3849
    %v3851 = vand.u32 %v3850, 4294901760
    %v3852 = vsub.f32 %v3850, %v3851
    %v3853 = vand.u32 %v3852, 4294901760
    %3854 = vmatpush1.msra.mxu0 %v3853
    %v3855 = vand.u32 %v3656, 4294901760
    %v3856 = vsub.f32 %v3656, %v3855
    %v3857 = vand.u32 %v3856, 4294901760
    %v3858 = vsub.f32 %v3856, %v3857
    %v3859 = vand.u32 %v3858, 4294901760
    %3860 = vmatprep.subr.mxu0 %v3859
    %v3861 = vand.u32 %v3655, 4294901760
    %v3862 = vsub.f32 %v3655, %v3861
    %v3863 = vand.u32 %v3862, 4294901760
    %v3864 = vsub.f32 %v3862, %v3863
    %v3865 = vand.u32 %v3864, 4294901760
    %3866 = vmatpush1.msra.mxu0 %v3865
    %v3867 = vand.u32 %v3658, 4294901760
    %v3868 = vsub.f32 %v3658, %v3867
    %v3869 = vand.u32 %v3868, 4294901760
    %v3870 = vsub.f32 %v3868, %v3869
    %v3871 = vand.u32 %v3870, 4294901760
    %3872 = vmatprep.subr.mxu0 %v3871
    %v3873 = vand.u32 %v3657, 4294901760
    %v3874 = vsub.f32 %v3657, %v3873
    %v3875 = vand.u32 %v3874, 4294901760
    %v3876 = vsub.f32 %v3874, %v3875
    %v3877 = vand.u32 %v3876, 4294901760
    %3878 = vmatpush1.msra.mxu0 %v3877
    %v3879 = vand.u32 %v3660, 4294901760
    %v3880 = vsub.f32 %v3660, %v3879
    %v3881 = vand.u32 %v3880, 4294901760
    %v3882 = vsub.f32 %v3880, %v3881
    %v3883 = vand.u32 %v3882, 4294901760
    %3884 = vmatprep.subr.mxu0 %v3883
    %v3885 = vand.u32 %v3659, 4294901760
    %v3886 = vsub.f32 %v3659, %v3885
    %v3887 = vand.u32 %v3886, 4294901760
    %v3888 = vsub.f32 %v3886, %v3887
    %v3889 = vand.u32 %v3888, 4294901760
    %3890 = vmatpush1.msra.mxu0 %v3889
    %v3891 = vand.u32 %v3662, 4294901760
    %v3892 = vsub.f32 %v3662, %v3891
    %v3893 = vand.u32 %v3892, 4294901760
    %v3894 = vsub.f32 %v3892, %v3893
    %v3895 = vand.u32 %v3894, 4294901760
    %3896 = vmatprep.subr.mxu0 %v3895
    %v3897 = vand.u32 %v3661, 4294901760
    %v3898 = vsub.f32 %v3661, %v3897
    %v3899 = vand.u32 %v3898, 4294901760
    %v3900 = vsub.f32 %v3898, %v3899
    %v3901 = vand.u32 %v3900, 4294901760
    %3902 = vmatpush1.msra.mxu0 %v3901
    %v3903 = vand.u32 %v3664, 4294901760
    %v3904 = vsub.f32 %v3664, %v3903
    %v3905 = vand.u32 %v3904, 4294901760
    %v3906 = vsub.f32 %v3904, %v3905
    %v3907 = vand.u32 %v3906, 4294901760
    %3908 = vmatprep.subr.mxu0 %v3907
    %v3909 = vand.u32 %v3663, 4294901760
    %v3910 = vsub.f32 %v3663, %v3909
    %v3911 = vand.u32 %v3910, 4294901760
    %v3912 = vsub.f32 %v3910, %v3911
    %v3913 = vand.u32 %v3912, 4294901760
    %3914 = vmatpush1.msra.mxu0 %v3913
    %v3915 = vand.u32 %v3666, 4294901760
    %v3916 = vsub.f32 %v3666, %v3915
    %v3917 = vand.u32 %v3916, 4294901760
    %v3918 = vsub.f32 %v3916, %v3917
    %v3919 = vand.u32 %v3918, 4294901760
    %3920 = vmatprep.subr.mxu0 %v3919
    %v3921 = vand.u32 %v3665, 4294901760
    %v3922 = vsub.f32 %v3665, %v3921
    %v3923 = vand.u32 %v3922, 4294901760
    %v3924 = vsub.f32 %v3922, %v3923
    %v3925 = vand.u32 %v3924, 4294901760
    %3926 = vmatpush1.msra.mxu0 %v3925
    %v3927 = vand.u32 %v3668, 4294901760
    %v3928 = vsub.f32 %v3668, %v3927
    %v3929 = vand.u32 %v3928, 4294901760
    %v3930 = vsub.f32 %v3928, %v3929
    %v3931 = vand.u32 %v3930, 4294901760
    %3932 = vmatprep.subr.mxu0 %v3931
    %v3933 = vand.u32 %v3667, 4294901760
    %v3934 = vsub.f32 %v3667, %v3933
    %v3935 = vand.u32 %v3934, 4294901760
    %v3936 = vsub.f32 %v3934, %v3935
    %v3937 = vand.u32 %v3936, 4294901760
    %3938 = vmatpush1.msra.mxu0 %v3937
    %v3939 = vand.u32 %v3670, 4294901760
    %v3940 = vsub.f32 %v3670, %v3939
    %v3941 = vand.u32 %v3940, 4294901760
    %v3942 = vsub.f32 %v3940, %v3941
    %v3943 = vand.u32 %v3942, 4294901760
    %3944 = vmatprep.subr.mxu0 %v3943
    %v3945 = vand.u32 %v3669, 4294901760
    %v3946 = vsub.f32 %v3669, %v3945
    %v3947 = vand.u32 %v3946, 4294901760
    %v3948 = vsub.f32 %v3946, %v3947
    %v3949 = vand.u32 %v3948, 4294901760
    %3950 = vmatpush1.msra.mxu0 %v3949
    %v3951 = vand.u32 %v3672, 4294901760
    %v3952 = vsub.f32 %v3672, %v3951
    %v3953 = vand.u32 %v3952, 4294901760
    %v3954 = vsub.f32 %v3952, %v3953
    %v3955 = vand.u32 %v3954, 4294901760
    %3956 = vmatprep.subr.mxu0 %v3955
    %v3957 = vand.u32 %v3671, 4294901760
    %v3958 = vsub.f32 %v3671, %v3957
    %v3959 = vand.u32 %v3958, 4294901760
    %v3960 = vsub.f32 %v3958, %v3959
    %v3961 = vand.u32 %v3960, 4294901760
    %3962 = vmatpush1.msra.mxu0 %v3961
    %v3963 = vand.u32 %v3674, 4294901760
    %v3964 = vsub.f32 %v3674, %v3963
    %v3965 = vand.u32 %v3964, 4294901760
    %v3966 = vsub.f32 %v3964, %v3965
    %v3967 = vand.u32 %v3966, 4294901760
    %3968 = vmatprep.subr.mxu0 %v3967
    %v3969 = vand.u32 %v3673, 4294901760
    %v3970 = vsub.f32 %v3673, %v3969
    %v3971 = vand.u32 %v3970, 4294901760
    %v3972 = vsub.f32 %v3970, %v3971
    %v3973 = vand.u32 %v3972, 4294901760
    %3974 = vmatpush1.msra.mxu0 %v3973
    %3975 = vmatprep.subr.mxu0 0.0
    %3976 = vmatpush1.msra.mxu0 0.0
    %3977 = vmatprep.subr.mxu0 0.0
    %3978 = vmatpush1.msra.mxu0 0.0
    %3979 = vmatprep.subr.mxu0 0.0
    %3980 = vmatpush1.msra.mxu0 0.0
    %3981 = vmatprep.subr.mxu0 0.0
    %3982 = vmatpush1.msra.mxu0 0.0
    %3983 = vmatprep.subr.mxu0 0.0
    %3984 = vmatpush1.msra.mxu0 0.0
    %3985 = vmatprep.subr.mxu0 0.0
    %3986 = vmatpush1.msra.mxu0 0.0
    %3987 = vmatprep.subr.mxu0 0.0
    %3988 = vmatpush1.msra.mxu0 0.0
    %3989 = vmatprep.subr.mxu0 0.0
    %3990 = vmatpush1.msra.mxu0 0.0
    %3991 = vmatprep.subr.mxu0 0.0
    %3992 = vmatpush1.msra.mxu0 0.0
    %3993 = vmatprep.subr.mxu0 0.0
    %3994 = vmatpush1.msra.mxu0 0.0
    %3995 = vmatprep.subr.mxu0 0.0
    %3996 = vmatpush1.msra.mxu0 0.0
    %3997 = vmatprep.subr.mxu0 0.0
    %3998 = vmatpush1.msra.mxu0 0.0
    %3999 = vmatprep.subr.mxu0 0.0
    %4000 = vmatpush1.msra.mxu0 0.0
    %4001 = vmatprep.subr.mxu0 0.0
    %4002 = vmatpush1.msra.mxu0 0.0
    %4003 = vmatprep.subr.mxu0 0.0
    %4004 = vmatpush1.msra.mxu0 0.0
    %4005 = vmatprep.subr.mxu0 0.0
    %4006 = vmatpush1.msra.mxu0 0.0
    %4007 = vmatprep.mubr.f32.mxu0 0.0
    %v4008 = vand.u32 %v3641, 4294901760
    %4009 = vmatmul.mubr.f32.gmra.mrb[0].mxu0 %v4008
    %v4010 = vpop.f32.mrb[0].mxu0
    %v4011 = vadd.f32 %v3779, %v4010
    %v4012 = vpop.f32.mrb[0].mxu0
    %v4013 = vadd.f32 %v3781, %v4012
    %4014 = vdwg.mxu0
    %v4015 = vand.u32 %v3644, 4294901760
    %v4016 = vsub.f32 %v3644, %v4015
    %4017 = vmatprep.subr.mxu0 %v4016
    %v4018 = vand.u32 %v3643, 4294901760
    %v4019 = vsub.f32 %v3643, %v4018
    %4020 = vmatpush1.msra.mxu0 %v4019
    %v4021 = vand.u32 %v3646, 4294901760
    %v4022 = vsub.f32 %v3646, %v4021
    %4023 = vmatprep.subr.mxu0 %v4022
    %v4024 = vand.u32 %v3645, 4294901760
    %v4025 = vsub.f32 %v3645, %v4024
    %4026 = vmatpush1.msra.mxu0 %v4025
    %v4027 = vand.u32 %v3648, 4294901760
    %v4028 = vsub.f32 %v3648, %v4027
    %4029 = vmatprep.subr.mxu0 %v4028
    %v4030 = vand.u32 %v3647, 4294901760
    %v4031 = vsub.f32 %v3647, %v4030
    %4032 = vmatpush1.msra.mxu0 %v4031
    %v4033 = vand.u32 %v3650, 4294901760
    %v4034 = vsub.f32 %v3650, %v4033
    %4035 = vmatprep.subr.mxu0 %v4034
    %v4036 = vand.u32 %v3649, 4294901760
    %v4037 = vsub.f32 %v3649, %v4036
    %4038 = vmatpush1.msra.mxu0 %v4037
    %v4039 = vand.u32 %v3652, 4294901760
    %v4040 = vsub.f32 %v3652, %v4039
    %4041 = vmatprep.subr.mxu0 %v4040
    %v4042 = vand.u32 %v3651, 4294901760
    %v4043 = vsub.f32 %v3651, %v4042
    %4044 = vmatpush1.msra.mxu0 %v4043
    %v4045 = vand.u32 %v3654, 4294901760
    %v4046 = vsub.f32 %v3654, %v4045
    %4047 = vmatprep.subr.mxu0 %v4046
    %v4048 = vand.u32 %v3653, 4294901760
    %v4049 = vsub.f32 %v3653, %v4048
    %4050 = vmatpush1.msra.mxu0 %v4049
    %v4051 = vand.u32 %v3656, 4294901760
    %v4052 = vsub.f32 %v3656, %v4051
    %4053 = vmatprep.subr.mxu0 %v4052
    %v4054 = vand.u32 %v3655, 4294901760
    %v4055 = vsub.f32 %v3655, %v4054
    %4056 = vmatpush1.msra.mxu0 %v4055
    %v4057 = vand.u32 %v3658, 4294901760
    %v4058 = vsub.f32 %v3658, %v4057
    %4059 = vmatprep.subr.mxu0 %v4058
    %v4060 = vand.u32 %v3657, 4294901760
    %v4061 = vsub.f32 %v3657, %v4060
    %4062 = vmatpush1.msra.mxu0 %v4061
    %v4063 = vand.u32 %v3660, 4294901760
    %v4064 = vsub.f32 %v3660, %v4063
    %4065 = vmatprep.subr.mxu0 %v4064
    %v4066 = vand.u32 %v3659, 4294901760
    %v4067 = vsub.f32 %v3659, %v4066
    %4068 = vmatpush1.msra.mxu0 %v4067
    %v4069 = vand.u32 %v3662, 4294901760
    %v4070 = vsub.f32 %v3662, %v4069
    %4071 = vmatprep.subr.mxu0 %v4070
    %v4072 = vand.u32 %v3661, 4294901760
    %v4073 = vsub.f32 %v3661, %v4072
    %4074 = vmatpush1.msra.mxu0 %v4073
    %v4075 = vand.u32 %v3664, 4294901760
    %v4076 = vsub.f32 %v3664, %v4075
    %4077 = vmatprep.subr.mxu0 %v4076
    %v4078 = vand.u32 %v3663, 4294901760
    %v4079 = vsub.f32 %v3663, %v4078
    %4080 = vmatpush1.msra.mxu0 %v4079
    %v4081 = vand.u32 %v3666, 4294901760
    %v4082 = vsub.f32 %v3666, %v4081
    %4083 = vmatprep.subr.mxu0 %v4082
    %v4084 = vand.u32 %v3665, 4294901760
    %v4085 = vsub.f32 %v3665, %v4084
    %4086 = vmatpush1.msra.mxu0 %v4085
    %v4087 = vand.u32 %v3668, 4294901760
    %v4088 = vsub.f32 %v3668, %v4087
    %4089 = vmatprep.subr.mxu0 %v4088
    %v4090 = vand.u32 %v3667, 4294901760
    %v4091 = vsub.f32 %v3667, %v4090
    %4092 = vmatpush1.msra.mxu0 %v4091
    %v4093 = vand.u32 %v3670, 4294901760
    %v4094 = vsub.f32 %v3670, %v4093
    %4095 = vmatprep.subr.mxu0 %v4094
    %v4096 = vand.u32 %v3669, 4294901760
    %v4097 = vsub.f32 %v3669, %v4096
    %4098 = vmatpush1.msra.mxu0 %v4097
    %v4099 = vand.u32 %v3672, 4294901760
    %v4100 = vsub.f32 %v3672, %v4099
    %4101 = vmatprep.subr.mxu0 %v4100
    %v4102 = vand.u32 %v3671, 4294901760
    %v4103 = vsub.f32 %v3671, %v4102
    %4104 = vmatpush1.msra.mxu0 %v4103
    %v4105 = vand.u32 %v3674, 4294901760
    %v4106 = vsub.f32 %v3674, %v4105
    %4107 = vmatprep.subr.mxu0 %v4106
    %v4108 = vand.u32 %v3673, 4294901760
    %v4109 = vsub.f32 %v3673, %v4108
    %4110 = vmatpush1.msra.mxu0 %v4109
    %4111 = vmatprep.subr.mxu0 0.0
    %4112 = vmatpush1.msra.mxu0 0.0
    %4113 = vmatprep.subr.mxu0 0.0
    %4114 = vmatpush1.msra.mxu0 0.0
    %4115 = vmatprep.subr.mxu0 0.0
    %4116 = vmatpush1.msra.mxu0 0.0
    %4117 = vmatprep.subr.mxu0 0.0
    %4118 = vmatpush1.msra.mxu0 0.0
    %4119 = vmatprep.subr.mxu0 0.0
    %4120 = vmatpush1.msra.mxu0 0.0
    %4121 = vmatprep.subr.mxu0 0.0
    %4122 = vmatpush1.msra.mxu0 0.0
    %4123 = vmatprep.subr.mxu0 0.0
    %4124 = vmatpush1.msra.mxu0 0.0
    %4125 = vmatprep.subr.mxu0 0.0
    %4126 = vmatpush1.msra.mxu0 0.0
    %4127 = vmatprep.subr.mxu0 0.0
    %4128 = vmatpush1.msra.mxu0 0.0
    %4129 = vmatprep.subr.mxu0 0.0
    %4130 = vmatpush1.msra.mxu0 0.0
    %4131 = vmatprep.subr.mxu0 0.0
    %4132 = vmatpush1.msra.mxu0 0.0
    %4133 = vmatprep.subr.mxu0 0.0
    %4134 = vmatpush1.msra.mxu0 0.0
    %4135 = vmatprep.subr.mxu0 0.0
    %4136 = vmatpush1.msra.mxu0 0.0
    %4137 = vmatprep.subr.mxu0 0.0
    %4138 = vmatpush1.msra.mxu0 0.0
    %4139 = vmatprep.subr.mxu0 0.0
    %4140 = vmatpush1.msra.mxu0 0.0
    %4141 = vmatprep.subr.mxu0 0.0
    %4142 = vmatpush1.msra.mxu0 0.0
    %4143 = vmatprep.mubr.f32.mxu0 0.0
    %v4144 = vand.u32 %v3641, 4294901760
    %v4145 = vsub.f32 %v3641, %v4144
    %4146 = vmatmul.mubr.f32.gmra.mrb[0].mxu0 %v4145
    %v4147 = vpop.f32.mrb[0].mxu0
    %v4148 = vadd.f32 %v4011, %v4147
    %v4149 = vpop.f32.mrb[0].mxu0
    %v4150 = vadd.f32 %v4013, %v4149
    %4151 = vdwg.mxu0
    %v4152 = vand.u32 %v3644, 4294901760
    %4153 = vmatprep.subr.mxu0 %v4152
    %v4154 = vand.u32 %v3643, 4294901760
    %4155 = vmatpush1.msra.mxu0 %v4154
    %v4156 = vand.u32 %v3646, 4294901760
    %4157 = vmatprep.subr.mxu0 %v4156
    %v4158 = vand.u32 %v3645, 4294901760
    %4159 = vmatpush1.msra.mxu0 %v4158
    %v4160 = vand.u32 %v3648, 4294901760
    %4161 = vmatprep.subr.mxu0 %v4160
    %v4162 = vand.u32 %v3647, 4294901760
    %4163 = vmatpush1.msra.mxu0 %v4162
    %v4164 = vand.u32 %v3650, 4294901760
    %4165 = vmatprep.subr.mxu0 %v4164
    %v4166 = vand.u32 %v3649, 4294901760
    %4167 = vmatpush1.msra.mxu0 %v4166
    %v4168 = vand.u32 %v3652, 4294901760
    %4169 = vmatprep.subr.mxu0 %v4168
    %v4170 = vand.u32 %v3651, 4294901760
    %4171 = vmatpush1.msra.mxu0 %v4170
    %v4172 = vand.u32 %v3654, 4294901760
    %4173 = vmatprep.subr.mxu0 %v4172
    %v4174 = vand.u32 %v3653, 4294901760
    %4175 = vmatpush1.msra.mxu0 %v4174
    %v4176 = vand.u32 %v3656, 4294901760
    %4177 = vmatprep.subr.mxu0 %v4176
    %v4178 = vand.u32 %v3655, 4294901760
    %4179 = vmatpush1.msra.mxu0 %v4178
    %v4180 = vand.u32 %v3658, 4294901760
    %4181 = vmatprep.subr.mxu0 %v4180
    %v4182 = vand.u32 %v3657, 4294901760
    %4183 = vmatpush1.msra.mxu0 %v4182
    %v4184 = vand.u32 %v3660, 4294901760
    %4185 = vmatprep.subr.mxu0 %v4184
    %v4186 = vand.u32 %v3659, 4294901760
    %4187 = vmatpush1.msra.mxu0 %v4186
    %v4188 = vand.u32 %v3662, 4294901760
    %4189 = vmatprep.subr.mxu0 %v4188
    %v4190 = vand.u32 %v3661, 4294901760
    %4191 = vmatpush1.msra.mxu0 %v4190
    %v4192 = vand.u32 %v3664, 4294901760
    %4193 = vmatprep.subr.mxu0 %v4192
    %v4194 = vand.u32 %v3663, 4294901760
    %4195 = vmatpush1.msra.mxu0 %v4194
    %v4196 = vand.u32 %v3666, 4294901760
    %4197 = vmatprep.subr.mxu0 %v4196
    %v4198 = vand.u32 %v3665, 4294901760
    %4199 = vmatpush1.msra.mxu0 %v4198
    %v4200 = vand.u32 %v3668, 4294901760
    %4201 = vmatprep.subr.mxu0 %v4200
    %v4202 = vand.u32 %v3667, 4294901760
    %4203 = vmatpush1.msra.mxu0 %v4202
    %v4204 = vand.u32 %v3670, 4294901760
    %4205 = vmatprep.subr.mxu0 %v4204
    %v4206 = vand.u32 %v3669, 4294901760
    %4207 = vmatpush1.msra.mxu0 %v4206
    %v4208 = vand.u32 %v3672, 4294901760
    %4209 = vmatprep.subr.mxu0 %v4208
    %v4210 = vand.u32 %v3671, 4294901760
    %4211 = vmatpush1.msra.mxu0 %v4210
    %v4212 = vand.u32 %v3674, 4294901760
    %4213 = vmatprep.subr.mxu0 %v4212
    %v4214 = vand.u32 %v3673, 4294901760
    %4215 = vmatpush1.msra.mxu0 %v4214
    %4216 = vmatprep.subr.mxu0 0.0
    %4217 = vmatpush1.msra.mxu0 0.0
    %4218 = vmatprep.subr.mxu0 0.0
    %4219 = vmatpush1.msra.mxu0 0.0
    %4220 = vmatprep.subr.mxu0 0.0
    %4221 = vmatpush1.msra.mxu0 0.0
    %4222 = vmatprep.subr.mxu0 0.0
    %4223 = vmatpush1.msra.mxu0 0.0
    %4224 = vmatprep.subr.mxu0 0.0
    %4225 = vmatpush1.msra.mxu0 0.0
    %4226 = vmatprep.subr.mxu0 0.0
    %4227 = vmatpush1.msra.mxu0 0.0
    %4228 = vmatprep.subr.mxu0 0.0
    %4229 = vmatpush1.msra.mxu0 0.0
    %4230 = vmatprep.subr.mxu0 0.0
    %4231 = vmatpush1.msra.mxu0 0.0
    %4232 = vmatprep.subr.mxu0 0.0
    %4233 = vmatpush1.msra.mxu0 0.0
    %4234 = vmatprep.subr.mxu0 0.0
    %4235 = vmatpush1.msra.mxu0 0.0
    %4236 = vmatprep.subr.mxu0 0.0
    %4237 = vmatpush1.msra.mxu0 0.0
    %4238 = vmatprep.subr.mxu0 0.0
    %4239 = vmatpush1.msra.mxu0 0.0
    %4240 = vmatprep.subr.mxu0 0.0
    %4241 = vmatpush1.msra.mxu0 0.0
    %4242 = vmatprep.subr.mxu0 0.0
    %4243 = vmatpush1.msra.mxu0 0.0
    %4244 = vmatprep.subr.mxu0 0.0
    %4245 = vmatpush1.msra.mxu0 0.0
    %4246 = vmatprep.subr.mxu0 0.0
    %4247 = vmatpush1.msra.mxu0 0.0
    %4248 = vmatprep.mubr.f32.mxu0 0.0
    %v4249 = vand.u32 %v3641, 4294901760
    %v4250 = vsub.f32 %v3641, %v4249
    %v4251 = vand.u32 %v4250, 4294901760
    %4252 = vmatmul.mubr.f32.gmra.mrb[0].mxu0 %v4251
    %v4253 = vpop.f32.mrb[0].mxu0
    %v4254 = vadd.f32 %v4148, %v4253
    %v4255 = vpop.f32.mrb[0].mxu0
    %v4256 = vadd.f32 %v4150, %v4255
    %4257 = vdwg.mxu0
    %v4258 = vand.u32 %v3644, 4294901760
    %v4259 = vsub.f32 %v3644, %v4258
    %v4260 = vand.u32 %v4259, 4294901760
    %4261 = vmatprep.subr.mxu0 %v4260
    %v4262 = vand.u32 %v3643, 4294901760
    %v4263 = vsub.f32 %v3643, %v4262
    %v4264 = vand.u32 %v4263, 4294901760
    %4265 = vmatpush1.msra.mxu0 %v4264
    %v4266 = vand.u32 %v3646, 4294901760
    %v4267 = vsub.f32 %v3646, %v4266
    %v4268 = vand.u32 %v4267, 4294901760
    %4269 = vmatprep.subr.mxu0 %v4268
    %v4270 = vand.u32 %v3645, 4294901760
    %v4271 = vsub.f32 %v3645, %v4270
    %v4272 = vand.u32 %v4271, 4294901760
    %4273 = vmatpush1.msra.mxu0 %v4272
    %v4274 = vand.u32 %v3648, 4294901760
    %v4275 = vsub.f32 %v3648, %v4274
    %v4276 = vand.u32 %v4275, 4294901760
    %4277 = vmatprep.subr.mxu0 %v4276
    %v4278 = vand.u32 %v3647, 4294901760
    %v4279 = vsub.f32 %v3647, %v4278
    %v4280 = vand.u32 %v4279, 4294901760
    %4281 = vmatpush1.msra.mxu0 %v4280
    %v4282 = vand.u32 %v3650, 4294901760
    %v4283 = vsub.f32 %v3650, %v4282
    %v4284 = vand.u32 %v4283, 4294901760
    %4285 = vmatprep.subr.mxu0 %v4284
    %v4286 = vand.u32 %v3649, 4294901760
    %v4287 = vsub.f32 %v3649, %v4286
    %v4288 = vand.u32 %v4287, 4294901760
    %4289 = vmatpush1.msra.mxu0 %v4288
    %v4290 = vand.u32 %v3652, 4294901760
    %v4291 = vsub.f32 %v3652, %v4290
    %v4292 = vand.u32 %v4291, 4294901760
    %4293 = vmatprep.subr.mxu0 %v4292
    %v4294 = vand.u32 %v3651, 4294901760
    %v4295 = vsub.f32 %v3651, %v4294
    %v4296 = vand.u32 %v4295, 4294901760
    %4297 = vmatpush1.msra.mxu0 %v4296
    %v4298 = vand.u32 %v3654, 4294901760
    %v4299 = vsub.f32 %v3654, %v4298
    %v4300 = vand.u32 %v4299, 4294901760
    %4301 = vmatprep.subr.mxu0 %v4300
    %v4302 = vand.u32 %v3653, 4294901760
    %v4303 = vsub.f32 %v3653, %v4302
    %v4304 = vand.u32 %v4303, 4294901760
    %4305 = vmatpush1.msra.mxu0 %v4304
    %v4306 = vand.u32 %v3656, 4294901760
    %v4307 = vsub.f32 %v3656, %v4306
    %v4308 = vand.u32 %v4307, 4294901760
    %4309 = vmatprep.subr.mxu0 %v4308
    %v4310 = vand.u32 %v3655, 4294901760
    %v4311 = vsub.f32 %v3655, %v4310
    %v4312 = vand.u32 %v4311, 4294901760
    %4313 = vmatpush1.msra.mxu0 %v4312
    %v4314 = vand.u32 %v3658, 4294901760
    %v4315 = vsub.f32 %v3658, %v4314
    %v4316 = vand.u32 %v4315, 4294901760
    %4317 = vmatprep.subr.mxu0 %v4316
    %v4318 = vand.u32 %v3657, 4294901760
    %v4319 = vsub.f32 %v3657, %v4318
    %v4320 = vand.u32 %v4319, 4294901760
    %4321 = vmatpush1.msra.mxu0 %v4320
    %v4322 = vand.u32 %v3660, 4294901760
    %v4323 = vsub.f32 %v3660, %v4322
    %v4324 = vand.u32 %v4323, 4294901760
    %4325 = vmatprep.subr.mxu0 %v4324
    %v4326 = vand.u32 %v3659, 4294901760
    %v4327 = vsub.f32 %v3659, %v4326
    %v4328 = vand.u32 %v4327, 4294901760
    %4329 = vmatpush1.msra.mxu0 %v4328
    %v4330 = vand.u32 %v3662, 4294901760
    %v4331 = vsub.f32 %v3662, %v4330
    %v4332 = vand.u32 %v4331, 4294901760
    %4333 = vmatprep.subr.mxu0 %v4332
    %v4334 = vand.u32 %v3661, 4294901760
    %v4335 = vsub.f32 %v3661, %v4334
    %v4336 = vand.u32 %v4335, 4294901760
    %4337 = vmatpush1.msra.mxu0 %v4336
    %v4338 = vand.u32 %v3664, 4294901760
    %v4339 = vsub.f32 %v3664, %v4338
    %v4340 = vand.u32 %v4339, 4294901760
    %4341 = vmatprep.subr.mxu0 %v4340
    %v4342 = vand.u32 %v3663, 4294901760
    %v4343 = vsub.f32 %v3663, %v4342
    %v4344 = vand.u32 %v4343, 4294901760
    %4345 = vmatpush1.msra.mxu0 %v4344
    %v4346 = vand.u32 %v3666, 4294901760
    %v4347 = vsub.f32 %v3666, %v4346
    %v4348 = vand.u32 %v4347, 4294901760
    %4349 = vmatprep.subr.mxu0 %v4348
    %v4350 = vand.u32 %v3665, 4294901760
    %v4351 = vsub.f32 %v3665, %v4350
    %v4352 = vand.u32 %v4351, 4294901760
    %4353 = vmatpush1.msra.mxu0 %v4352
    %v4354 = vand.u32 %v3668, 4294901760
    %v4355 = vsub.f32 %v3668, %v4354
    %v4356 = vand.u32 %v4355, 4294901760
    %4357 = vmatprep.subr.mxu0 %v4356
    %v4358 = vand.u32 %v3667, 4294901760
    %v4359 = vsub.f32 %v3667, %v4358
    %v4360 = vand.u32 %v4359, 4294901760
    %4361 = vmatpush1.msra.mxu0 %v4360
    %v4362 = vand.u32 %v3670, 4294901760
    %v4363 = vsub.f32 %v3670, %v4362
    %v4364 = vand.u32 %v4363, 4294901760
    %4365 = vmatprep.subr.mxu0 %v4364
    %v4366 = vand.u32 %v3669, 4294901760
    %v4367 = vsub.f32 %v3669, %v4366
    %v4368 = vand.u32 %v4367, 4294901760
    %4369 = vmatpush1.msra.mxu0 %v4368
    %v4370 = vand.u32 %v3672, 4294901760
    %v4371 = vsub.f32 %v3672, %v4370
    %v4372 = vand.u32 %v4371, 4294901760
    %4373 = vmatprep.subr.mxu0 %v4372
    %v4374 = vand.u32 %v3671, 4294901760
    %v4375 = vsub.f32 %v3671, %v4374
    %v4376 = vand.u32 %v4375, 4294901760
    %4377 = vmatpush1.msra.mxu0 %v4376
    %v4378 = vand.u32 %v3674, 4294901760
    %v4379 = vsub.f32 %v3674, %v4378
    %v4380 = vand.u32 %v4379, 4294901760
    %4381 = vmatprep.subr.mxu0 %v4380
    %v4382 = vand.u32 %v3673, 4294901760
    %v4383 = vsub.f32 %v3673, %v4382
    %v4384 = vand.u32 %v4383, 4294901760
    %4385 = vmatpush1.msra.mxu0 %v4384
    %4386 = vmatprep.subr.mxu0 0.0
    %4387 = vmatpush1.msra.mxu0 0.0
    %4388 = vmatprep.subr.mxu0 0.0
    %4389 = vmatpush1.msra.mxu0 0.0
    %4390 = vmatprep.subr.mxu0 0.0
    %4391 = vmatpush1.msra.mxu0 0.0
    %4392 = vmatprep.subr.mxu0 0.0
    %4393 = vmatpush1.msra.mxu0 0.0
    %4394 = vmatprep.subr.mxu0 0.0
    %4395 = vmatpush1.msra.mxu0 0.0
    %4396 = vmatprep.subr.mxu0 0.0
    %4397 = vmatpush1.msra.mxu0 0.0
    %4398 = vmatprep.subr.mxu0 0.0
    %4399 = vmatpush1.msra.mxu0 0.0
    %4400 = vmatprep.subr.mxu0 0.0
    %4401 = vmatpush1.msra.mxu0 0.0
    %4402 = vmatprep.subr.mxu0 0.0
    %4403 = vmatpush1.msra.mxu0 0.0
    %4404 = vmatprep.subr.mxu0 0.0
    %4405 = vmatpush1.msra.mxu0 0.0
    %4406 = vmatprep.subr.mxu0 0.0
    %4407 = vmatpush1.msra.mxu0 0.0
    %4408 = vmatprep.subr.mxu0 0.0
    %4409 = vmatpush1.msra.mxu0 0.0
    %4410 = vmatprep.subr.mxu0 0.0
    %4411 = vmatpush1.msra.mxu0 0.0
    %4412 = vmatprep.subr.mxu0 0.0
    %4413 = vmatpush1.msra.mxu0 0.0
    %4414 = vmatprep.subr.mxu0 0.0
    %4415 = vmatpush1.msra.mxu0 0.0
    %4416 = vmatprep.subr.mxu0 0.0
    %4417 = vmatpush1.msra.mxu0 0.0
    %4418 = vmatprep.mubr.f32.mxu0 0.0
    %v4419 = vand.u32 %v3641, 4294901760
    %4420 = vmatmul.mubr.f32.gmra.mrb[0].mxu0 %v4419
    %v4421 = vpop.f32.mrb[0].mxu0
    %v4422 = vadd.f32 %v4254, %v4421
    %v4423 = vpop.f32.mrb[0].mxu0
    %v4424 = vadd.f32 %v4256, %v4423
    %4425 = vdwg.mxu0
    %v4426 = vand.u32 %v3644, 4294901760
    %4427 = vmatprep.subr.mxu0 %v4426
    %v4428 = vand.u32 %v3643, 4294901760
    %4429 = vmatpush1.msra.mxu0 %v4428
    %v4430 = vand.u32 %v3646, 4294901760
    %4431 = vmatprep.subr.mxu0 %v4430
    %v4432 = vand.u32 %v3645, 4294901760
    %4433 = vmatpush1.msra.mxu0 %v4432
    %v4434 = vand.u32 %v3648, 4294901760
    %4435 = vmatprep.subr.mxu0 %v4434
    %v4436 = vand.u32 %v3647, 4294901760
    %4437 = vmatpush1.msra.mxu0 %v4436
    %v4438 = vand.u32 %v3650, 4294901760
    %4439 = vmatprep.subr.mxu0 %v4438
    %v4440 = vand.u32 %v3649, 4294901760
    %4441 = vmatpush1.msra.mxu0 %v4440
    %v4442 = vand.u32 %v3652, 4294901760
    %4443 = vmatprep.subr.mxu0 %v4442
    %v4444 = vand.u32 %v3651, 4294901760
    %4445 = vmatpush1.msra.mxu0 %v4444
    %v4446 = vand.u32 %v3654, 4294901760
    %4447 = vmatprep.subr.mxu0 %v4446
    %v4448 = vand.u32 %v3653, 4294901760
    %4449 = vmatpush1.msra.mxu0 %v4448
    %v4450 = vand.u32 %v3656, 4294901760
    %4451 = vmatprep.subr.mxu0 %v4450
    %v4452 = vand.u32 %v3655, 4294901760
    %4453 = vmatpush1.msra.mxu0 %v4452
    %v4454 = vand.u32 %v3658, 4294901760
    %4455 = vmatprep.subr.mxu0 %v4454
    %v4456 = vand.u32 %v3657, 4294901760
    %4457 = vmatpush1.msra.mxu0 %v4456
    %v4458 = vand.u32 %v3660, 4294901760
    %4459 = vmatprep.subr.mxu0 %v4458
    %v4460 = vand.u32 %v3659, 4294901760
    %4461 = vmatpush1.msra.mxu0 %v4460
    %v4462 = vand.u32 %v3662, 4294901760
    %4463 = vmatprep.subr.mxu0 %v4462
    %v4464 = vand.u32 %v3661, 4294901760
    %4465 = vmatpush1.msra.mxu0 %v4464
    %v4466 = vand.u32 %v3664, 4294901760
    %4467 = vmatprep.subr.mxu0 %v4466
    %v4468 = vand.u32 %v3663, 4294901760
    %4469 = vmatpush1.msra.mxu0 %v4468
    %v4470 = vand.u32 %v3666, 4294901760
    %4471 = vmatprep.subr.mxu0 %v4470
    %v4472 = vand.u32 %v3665, 4294901760
    %4473 = vmatpush1.msra.mxu0 %v4472
    %v4474 = vand.u32 %v3668, 4294901760
    %4475 = vmatprep.subr.mxu0 %v4474
    %v4476 = vand.u32 %v3667, 4294901760
    %4477 = vmatpush1.msra.mxu0 %v4476
    %v4478 = vand.u32 %v3670, 4294901760
    %4479 = vmatprep.subr.mxu0 %v4478
    %v4480 = vand.u32 %v3669, 4294901760
    %4481 = vmatpush1.msra.mxu0 %v4480
    %v4482 = vand.u32 %v3672, 4294901760
    %4483 = vmatprep.subr.mxu0 %v4482
    %v4484 = vand.u32 %v3671, 4294901760
    %4485 = vmatpush1.msra.mxu0 %v4484
    %v4486 = vand.u32 %v3674, 4294901760
    %4487 = vmatprep.subr.mxu0 %v4486
    %v4488 = vand.u32 %v3673, 4294901760
    %4489 = vmatpush1.msra.mxu0 %v4488
    %4490 = vmatprep.subr.mxu0 0.0
    %4491 = vmatpush1.msra.mxu0 0.0
    %4492 = vmatprep.subr.mxu0 0.0
    %4493 = vmatpush1.msra.mxu0 0.0
    %4494 = vmatprep.subr.mxu0 0.0
    %4495 = vmatpush1.msra.mxu0 0.0
    %4496 = vmatprep.subr.mxu0 0.0
    %4497 = vmatpush1.msra.mxu0 0.0
    %4498 = vmatprep.subr.mxu0 0.0
    %4499 = vmatpush1.msra.mxu0 0.0
    %4500 = vmatprep.subr.mxu0 0.0
    %4501 = vmatpush1.msra.mxu0 0.0
    %4502 = vmatprep.subr.mxu0 0.0
    %4503 = vmatpush1.msra.mxu0 0.0
    %4504 = vmatprep.subr.mxu0 0.0
    %4505 = vmatpush1.msra.mxu0 0.0
    %4506 = vmatprep.subr.mxu0 0.0
    %4507 = vmatpush1.msra.mxu0 0.0
    %4508 = vmatprep.subr.mxu0 0.0
    %4509 = vmatpush1.msra.mxu0 0.0
    %4510 = vmatprep.subr.mxu0 0.0
    %4511 = vmatpush1.msra.mxu0 0.0
    %4512 = vmatprep.subr.mxu0 0.0
    %4513 = vmatpush1.msra.mxu0 0.0
    %4514 = vmatprep.subr.mxu0 0.0
    %4515 = vmatpush1.msra.mxu0 0.0
    %4516 = vmatprep.subr.mxu0 0.0
    %4517 = vmatpush1.msra.mxu0 0.0
    %4518 = vmatprep.subr.mxu0 0.0
    %4519 = vmatpush1.msra.mxu0 0.0
    %4520 = vmatprep.subr.mxu0 0.0
    %4521 = vmatpush1.msra.mxu0 0.0
    %4522 = vmatprep.mubr.f32.mxu0 0.0
    %v4523 = vand.u32 %v3641, 4294901760
    %4524 = vmatmul.mubr.f32.gmra.mrb[0].mxu0 %v4523
    %v4525 = vpop.f32.mrb[0].mxu0
    %v4526 = vadd.f32 %v4422, %v4525
    %v4527 = vpop.f32.mrb[0].mxu0
    %v4528 = vadd.f32 %v4424, %v4527
    %4529 = vdwg.mxu0
    %v4530 = vtanh.pop %v4528
    %v4531 = vxor.u32 %v4526, 2147483648
    %v4532 = vmul.f32 %v4531, 1.442695
    %v4533 = vpow.pop %v4532
    %v4534 = vadd.f32 %v4533, 1.0
    %v4535 = vrcp.pop %v4534
    %v4536 = vmul.f32 1.0, %v4535
    %v4537 = vmul.f32 %v4536, %v3641
    %v4538 = vadd.f32 %v4530, %v4537
    %s4539 = scalar_lea.vmem [#allocation2], 512
    %v4540 = vld [vmem:[%s4539] sm:$0xff]
    %v4541 = vld [vmem:[%s4539 + $0x8] sm:$0xff]
    %v4542 = vld [vmem:[%s4539 + $0x10] sm:$0xff]
    %v4543 = vld [vmem:[%s4539 + $0x18] sm:$0xff]
    %v4544 = vld [vmem:[%s4539 + $0x20] sm:$0xff]
    %v4545 = vld [vmem:[%s4539 + $0x28] sm:$0xff]
    %v4546 = vld [vmem:[%s4539 + $0x30] sm:$0xff]
    %v4547 = vld [vmem:[%s4539 + $0x38] sm:$0xff]
    %v4548 = vld [vmem:[%s4539 + $0x40] sm:$0xff]
    %v4549 = vld [vmem:[%s4539 + $0x48] sm:$0xff]
    %v4550 = vld [vmem:[%s4539 + $0x50] sm:$0xff]
    %v4551 = vld [vmem:[%s4539 + $0x58] sm:$0xff]
    %v4552 = vld [vmem:[%s4539 + $0x60] sm:$0xff]
    %v4553 = vld [vmem:[%s4539 + $0x68] sm:$0xff]
    %v4554 = vld [vmem:[%s4539 + $0x70] sm:$0xff]
    %v4555 = vld [vmem:[%s4539 + $0x78] sm:$0xff]
    %v4556 = vld [vmem:[%s4539 + $0x80] sm:$0xff]
    %v4557 = vld [vmem:[%s4539 + $0x88] sm:$0xff]
    %v4558 = vld [vmem:[%s4539 + $0x90] sm:$0xff]
    %v4559 = vld [vmem:[%s4539 + $0x98] sm:$0xff]
    %v4560 = vld [vmem:[%s4539 + $0xa0] sm:$0xff]
    %v4561 = vld [vmem:[%s4539 + $0xa8] sm:$0xff]
    %v4562 = vld [vmem:[%s4539 + $0xb0] sm:$0xff]
    %v4563 = vld [vmem:[%s4539 + $0xb8] sm:$0xff]
    %v4564 = vld [vmem:[%s4539 + $0xc0] sm:$0xff]
    %v4565 = vld [vmem:[%s4539 + $0xc8] sm:$0xff]
    %v4566 = vld [vmem:[%s4539 + $0xd0] sm:$0xff]
    %v4567 = vld [vmem:[%s4539 + $0xd8] sm:$0xff]
    %v4568 = vld [vmem:[%s4539 + $0xe0] sm:$0xff]
    %v4569 = vld [vmem:[%s4539 + $0xe8] sm:$0xff]
    %v4570 = vld [vmem:[%s4539 + $0xf0] sm:$0xff]
    %v4571 = vld [vmem:[%s4539 + $0xf8] sm:$0xff]
    %v4572 = vand.u32 %v4541, 4294901760
    %4573 = vmatprep.subr.mxu0 %v4572
    %v4574 = vand.u32 %v4540, 4294901760
    %4575 = vmatpush1.msra.mxu0 %v4574
    %v4576 = vand.u32 %v4543, 4294901760
    %4577 = vmatprep.subr.mxu0 %v4576
    %v4578 = vand.u32 %v4542, 4294901760
    %4579 = vmatpush1.msra.mxu0 %v4578
    %v4580 = vand.u32 %v4545, 4294901760
    %4581 = vmatprep.subr.mxu0 %v4580
    %v4582 = vand.u32 %v4544, 4294901760
    %4583 = vmatpush1.msra.mxu0 %v4582
    %v4584 = vand.u32 %v4547, 4294901760
    %4585 = vmatprep.subr.mxu0 %v4584
    %v4586 = vand.u32 %v4546, 4294901760
    %4587 = vmatpush1.msra.mxu0 %v4586
    %v4588 = vand.u32 %v4549, 4294901760
    %4589 = vmatprep.subr.mxu0 %v4588
    %v4590 = vand.u32 %v4548, 4294901760
    %4591 = vmatpush1.msra.mxu0 %v4590
    %v4592 = vand.u32 %v4551, 4294901760
    %4593 = vmatprep.subr.mxu0 %v4592
    %v4594 = vand.u32 %v4550, 4294901760
    %4595 = vmatpush1.msra.mxu0 %v4594
    %v4596 = vand.u32 %v4553, 4294901760
    %4597 = vmatprep.subr.mxu0 %v4596
    %v4598 = vand.u32 %v4552, 4294901760
    %4599 = vmatpush1.msra.mxu0 %v4598
    %v4600 = vand.u32 %v4555, 4294901760
    %4601 = vmatprep.subr.mxu0 %v4600
    %v4602 = vand.u32 %v4554, 4294901760
    %4603 = vmatpush1.msra.mxu0 %v4602
    %v4604 = vand.u32 %v4557, 4294901760
    %4605 = vmatprep.subr.mxu0 %v4604
    %v4606 = vand.u32 %v4556, 4294901760
    %4607 = vmatpush1.msra.mxu0 %v4606
    %v4608 = vand.u32 %v4559, 4294901760
    %4609 = vmatprep.subr.mxu0 %v4608
    %v4610 = vand.u32 %v4558, 4294901760
    %4611 = vmatpush1.msra.mxu0 %v4610
    %v4612 = vand.u32 %v4561, 4294901760
    %4613 = vmatprep.subr.mxu0 %v4612
    %v4614 = vand.u32 %v4560, 4294901760
    %4615 = vmatpush1.msra.mxu0 %v4614
    %v4616 = vand.u32 %v4563, 4294901760
    %4617 = vmatprep.subr.mxu0 %v4616
    %v4618 = vand.u32 %v4562, 4294901760
    %4619 = vmatpush1.msra.mxu0 %v4618
    %v4620 = vand.u32 %v4565, 4294901760
    %4621 = vmatprep.subr.mxu0 %v4620
    %v4622 = vand.u32 %v4564, 4294901760
    %4623 = vmatpush1.msra.mxu0 %v4622
    %v4624 = vand.u32 %v4567, 4294901760
    %4625 = vmatprep.subr.mxu0 %v4624
    %v4626 = vand.u32 %v4566, 4294901760
    %4627 = vmatpush1.msra.mxu0 %v4626
    %v4628 = vand.u32 %v4569, 4294901760
    %4629 = vmatprep.subr.mxu0 %v4628
    %v4630 = vand.u32 %v4568, 4294901760
    %4631 = vmatpush1.msra.mxu0 %v4630
    %v4632 = vand.u32 %v4571, 4294901760
    %4633 = vmatprep.subr.mxu0 %v4632
    %v4634 = vand.u32 %v4570, 4294901760
    %4635 = vmatpush1.msra.mxu0 %v4634
    %4636 = vmatprep.subr.mxu0 0.0
    %4637 = vmatpush1.msra.mxu0 0.0
    %4638 = vmatprep.subr.mxu0 0.0
    %4639 = vmatpush1.msra.mxu0 0.0
    %4640 = vmatprep.subr.mxu0 0.0
    %4641 = vmatpush1.msra.mxu0 0.0
    %4642 = vmatprep.subr.mxu0 0.0
    %4643 = vmatpush1.msra.mxu0 0.0
    %4644 = vmatprep.subr.mxu0 0.0
    %4645 = vmatpush1.msra.mxu0 0.0
    %4646 = vmatprep.subr.mxu0 0.0
    %4647 = vmatpush1.msra.mxu0 0.0
    %4648 = vmatprep.subr.mxu0 0.0
    %4649 = vmatpush1.msra.mxu0 0.0
    %4650 = vmatprep.subr.mxu0 0.0
    %4651 = vmatpush1.msra.mxu0 0.0
    %4652 = vmatprep.subr.mxu0 0.0
    %4653 = vmatpush1.msra.mxu0 0.0
    %4654 = vmatprep.subr.mxu0 0.0
    %4655 = vmatpush1.msra.mxu0 0.0
    %4656 = vmatprep.subr.mxu0 0.0
    %4657 = vmatpush1.msra.mxu0 0.0
    %4658 = vmatprep.subr.mxu0 0.0
    %4659 = vmatpush1.msra.mxu0 0.0
    %4660 = vmatprep.subr.mxu0 0.0
    %4661 = vmatpush1.msra.mxu0 0.0
    %4662 = vmatprep.subr.mxu0 0.0
    %4663 = vmatpush1.msra.mxu0 0.0
    %4664 = vmatprep.subr.mxu0 0.0
    %4665 = vmatpush1.msra.mxu0 0.0
    %4666 = vmatprep.subr.mxu0 0.0
    %4667 = vmatpush1.msra.mxu0 0.0
    %4668 = vmatprep.mubr.f32.mxu0 0.0
    %v4669 = vand.u32 %v4538, 4294901760
    %v4670 = vsub.f32 %v4538, %v4669
    %v4671 = vand.u32 %v4670, 4294901760
    %v4672 = vsub.f32 %v4670, %v4671
    %v4673 = vand.u32 %v4672, 4294901760
    %4674 = vmatmul.mubr.f32.gmra.mrb[0].mxu0 %v4673
    %v4675 = vpop.f32.mrb[0].mxu0
    %v4676 = vadd.f32 %v2742, %v4675
    %v4677 = vpop.f32.mrb[0].mxu0
    %v4678 = vadd.f32 %v2744, %v4677
    %4679 = vdwg.mxu0
    %v4680 = vand.u32 %v4541, 4294901760
    %v4681 = vsub.f32 %v4541, %v4680
    %v4682 = vand.u32 %v4681, 4294901760
    %v4683 = vsub.f32 %v4681, %v4682
    %v4684 = vand.u32 %v4683, 4294901760
    %4685 = vmatprep.subr.mxu0 %v4684
    %v4686 = vand.u32 %v4540, 4294901760
    %v4687 = vsub.f32 %v4540, %v4686
    %v4688 = vand.u32 %v4687, 4294901760
    %v4689 = vsub.f32 %v4687, %v4688
    %v4690 = vand.u32 %v4689, 4294901760
    %4691 = vmatpush1.msra.mxu0 %v4690
    %v4692 = vand.u32 %v4543, 4294901760
    %v4693 = vsub.f32 %v4543, %v4692
    %v4694 = vand.u32 %v4693, 4294901760
    %v4695 = vsub.f32 %v4693, %v4694
    %v4696 = vand.u32 %v4695, 4294901760
    %4697 = vmatprep.subr.mxu0 %v4696
    %v4698 = vand.u32 %v4542, 4294901760
    %v4699 = vsub.f32 %v4542, %v4698
    %v4700 = vand.u32 %v4699, 4294901760
    %v4701 = vsub.f32 %v4699, %v4700
    %v4702 = vand.u32 %v4701, 4294901760
    %4703 = vmatpush1.msra.mxu0 %v4702
    %v4704 = vand.u32 %v4545, 4294901760
    %v4705 = vsub.f32 %v4545, %v4704
    %v4706 = vand.u32 %v4705, 4294901760
    %v4707 = vsub.f32 %v4705, %v4706
    %v4708 = vand.u32 %v4707, 4294901760
    %4709 = vmatprep.subr.mxu0 %v4708
    %v4710 = vand.u32 %v4544, 4294901760
    %v4711 = vsub.f32 %v4544, %v4710
    %v4712 = vand.u32 %v4711, 4294901760
    %v4713 = vsub.f32 %v4711, %v4712
    %v4714 = vand.u32 %v4713, 4294901760
    %4715 = vmatpush1.msra.mxu0 %v4714
    %v4716 = vand.u32 %v4547, 4294901760
    %v4717 = vsub.f32 %v4547, %v4716
    %v4718 = vand.u32 %v4717, 4294901760
    %v4719 = vsub.f32 %v4717, %v4718
    %v4720 = vand.u32 %v4719, 4294901760
    %4721 = vmatprep.subr.mxu0 %v4720
    %v4722 = vand.u32 %v4546, 4294901760
    %v4723 = vsub.f32 %v4546, %v4722
    %v4724 = vand.u32 %v4723, 4294901760
    %v4725 = vsub.f32 %v4723, %v4724
    %v4726 = vand.u32 %v4725, 4294901760
    %4727 = vmatpush1.msra.mxu0 %v4726
    %v4728 = vand.u32 %v4549, 4294901760
    %v4729 = vsub.f32 %v4549, %v4728
    %v4730 = vand.u32 %v4729, 4294901760
    %v4731 = vsub.f32 %v4729, %v4730
    %v4732 = vand.u32 %v4731, 4294901760
    %4733 = vmatprep.subr.mxu0 %v4732
    %v4734 = vand.u32 %v4548, 4294901760
    %v4735 = vsub.f32 %v4548, %v4734
    %v4736 = vand.u32 %v4735, 4294901760
    %v4737 = vsub.f32 %v4735, %v4736
    %v4738 = vand.u32 %v4737, 4294901760
    %4739 = vmatpush1.msra.mxu0 %v4738
    %v4740 = vand.u32 %v4551, 4294901760
    %v4741 = vsub.f32 %v4551, %v4740
    %v4742 = vand.u32 %v4741, 4294901760
    %v4743 = vsub.f32 %v4741, %v4742
    %v4744 = vand.u32 %v4743, 4294901760
    %4745 = vmatprep.subr.mxu0 %v4744
    %v4746 = vand.u32 %v4550, 4294901760
    %v4747 = vsub.f32 %v4550, %v4746
    %v4748 = vand.u32 %v4747, 4294901760
    %v4749 = vsub.f32 %v4747, %v4748
    %v4750 = vand.u32 %v4749, 4294901760
    %4751 = vmatpush1.msra.mxu0 %v4750
    %v4752 = vand.u32 %v4553, 4294901760
    %v4753 = vsub.f32 %v4553, %v4752
    %v4754 = vand.u32 %v4753, 4294901760
    %v4755 = vsub.f32 %v4753, %v4754
    %v4756 = vand.u32 %v4755, 4294901760
    %4757 = vmatprep.subr.mxu0 %v4756
    %v4758 = vand.u32 %v4552, 4294901760
    %v4759 = vsub.f32 %v4552, %v4758
    %v4760 = vand.u32 %v4759, 4294901760
    %v4761 = vsub.f32 %v4759, %v4760
    %v4762 = vand.u32 %v4761, 4294901760
    %4763 = vmatpush1.msra.mxu0 %v4762
    %v4764 = vand.u32 %v4555, 4294901760
    %v4765 = vsub.f32 %v4555, %v4764
    %v4766 = vand.u32 %v4765, 4294901760
    %v4767 = vsub.f32 %v4765, %v4766
    %v4768 = vand.u32 %v4767, 4294901760
    %4769 = vmatprep.subr.mxu0 %v4768
    %v4770 = vand.u32 %v4554, 4294901760
    %v4771 = vsub.f32 %v4554, %v4770
    %v4772 = vand.u32 %v4771, 4294901760
    %v4773 = vsub.f32 %v4771, %v4772
    %v4774 = vand.u32 %v4773, 4294901760
    %4775 = vmatpush1.msra.mxu0 %v4774
    %v4776 = vand.u32 %v4557, 4294901760
    %v4777 = vsub.f32 %v4557, %v4776
    %v4778 = vand.u32 %v4777, 4294901760
    %v4779 = vsub.f32 %v4777, %v4778
    %v4780 = vand.u32 %v4779, 4294901760
    %4781 = vmatprep.subr.mxu0 %v4780
    %v4782 = vand.u32 %v4556, 4294901760
    %v4783 = vsub.f32 %v4556, %v4782
    %v4784 = vand.u32 %v4783, 4294901760
    %v4785 = vsub.f32 %v4783, %v4784
    %v4786 = vand.u32 %v4785, 4294901760
    %4787 = vmatpush1.msra.mxu0 %v4786
    %v4788 = vand.u32 %v4559, 4294901760
    %v4789 = vsub.f32 %v4559, %v4788
    %v4790 = vand.u32 %v4789, 4294901760
    %v4791 = vsub.f32 %v4789, %v4790
    %v4792 = vand.u32 %v4791, 4294901760
    %4793 = vmatprep.subr.mxu0 %v4792
    %v4794 = vand.u32 %v4558, 4294901760
    %v4795 = vsub.f32 %v4558, %v4794
    %v4796 = vand.u32 %v4795, 4294901760
    %v4797 = vsub.f32 %v4795, %v4796
    %v4798 = vand.u32 %v4797, 4294901760
    %4799 = vmatpush1.msra.mxu0 %v4798
    %v4800 = vand.u32 %v4561, 4294901760
    %v4801 = vsub.f32 %v4561, %v4800
    %v4802 = vand.u32 %v4801, 4294901760
    %v4803 = vsub.f32 %v4801, %v4802
    %v4804 = vand.u32 %v4803, 4294901760
    %4805 = vmatprep.subr.mxu0 %v4804
    %v4806 = vand.u32 %v4560, 4294901760
    %v4807 = vsub.f32 %v4560, %v4806
    %v4808 = vand.u32 %v4807, 4294901760
    %v4809 = vsub.f32 %v4807, %v4808
    %v4810 = vand.u32 %v4809, 4294901760
    %4811 = vmatpush1.msra.mxu0 %v4810
    %v4812 = vand.u32 %v4563, 4294901760
    %v4813 = vsub.f32 %v4563, %v4812
    %v4814 = vand.u32 %v4813, 4294901760
    %v4815 = vsub.f32 %v4813, %v4814
    %v4816 = vand.u32 %v4815, 4294901760
    %4817 = vmatprep.subr.mxu0 %v4816
    %v4818 = vand.u32 %v4562, 4294901760
    %v4819 = vsub.f32 %v4562, %v4818
    %v4820 = vand.u32 %v4819, 4294901760
    %v4821 = vsub.f32 %v4819, %v4820
    %v4822 = vand.u32 %v4821, 4294901760
    %4823 = vmatpush1.msra.mxu0 %v4822
    %v4824 = vand.u32 %v4565, 4294901760
    %v4825 = vsub.f32 %v4565, %v4824
    %v4826 = vand.u32 %v4825, 4294901760
    %v4827 = vsub.f32 %v4825, %v4826
    %v4828 = vand.u32 %v4827, 4294901760
    %4829 = vmatprep.subr.mxu0 %v4828
    %v4830 = vand.u32 %v4564, 4294901760
    %v4831 = vsub.f32 %v4564, %v4830
    %v4832 = vand.u32 %v4831, 4294901760
    %v4833 = vsub.f32 %v4831, %v4832
    %v4834 = vand.u32 %v4833, 4294901760
    %4835 = vmatpush1.msra.mxu0 %v4834
    %v4836 = vand.u32 %v4567, 4294901760
    %v4837 = vsub.f32 %v4567, %v4836
    %v4838 = vand.u32 %v4837, 4294901760
    %v4839 = vsub.f32 %v4837, %v4838
    %v4840 = vand.u32 %v4839, 4294901760
    %4841 = vmatprep.subr.mxu0 %v4840
    %v4842 = vand.u32 %v4566, 4294901760
    %v4843 = vsub.f32 %v4566, %v4842
    %v4844 = vand.u32 %v4843, 4294901760
    %v4845 = vsub.f32 %v4843, %v4844
    %v4846 = vand.u32 %v4845, 4294901760
    %4847 = vmatpush1.msra.mxu0 %v4846
    %v4848 = vand.u32 %v4569, 4294901760
    %v4849 = vsub.f32 %v4569, %v4848
    %v4850 = vand.u32 %v4849, 4294901760
    %v4851 = vsub.f32 %v4849, %v4850
    %v4852 = vand.u32 %v4851, 4294901760
    %4853 = vmatprep.subr.mxu0 %v4852
    %v4854 = vand.u32 %v4568, 4294901760
    %v4855 = vsub.f32 %v4568, %v4854
    %v4856 = vand.u32 %v4855, 4294901760
    %v4857 = vsub.f32 %v4855, %v4856
    %v4858 = vand.u32 %v4857, 4294901760
    %4859 = vmatpush1.msra.mxu0 %v4858
    %v4860 = vand.u32 %v4571, 4294901760
    %v4861 = vsub.f32 %v4571, %v4860
    %v4862 = vand.u32 %v4861, 4294901760
    %v4863 = vsub.f32 %v4861, %v4862
    %v4864 = vand.u32 %v4863, 4294901760
    %4865 = vmatprep.subr.mxu0 %v4864
    %v4866 = vand.u32 %v4570, 4294901760
    %v4867 = vsub.f32 %v4570, %v4866
    %v4868 = vand.u32 %v4867, 4294901760
    %v4869 = vsub.f32 %v4867, %v4868
    %v4870 = vand.u32 %v4869, 4294901760
    %4871 = vmatpush1.msra.mxu0 %v4870
    %4872 = vmatprep.subr.mxu0 0.0
    %4873 = vmatpush1.msra.mxu0 0.0
    %4874 = vmatprep.subr.mxu0 0.0
    %4875 = vmatpush1.msra.mxu0 0.0
    %4876 = vmatprep.subr.mxu0 0.0
    %4877 = vmatpush1.msra.mxu0 0.0
    %4878 = vmatprep.subr.mxu0 0.0
    %4879 = vmatpush1.msra.mxu0 0.0
    %4880 = vmatprep.subr.mxu0 0.0
    %4881 = vmatpush1.msra.mxu0 0.0
    %4882 = vmatprep.subr.mxu0 0.0
    %4883 = vmatpush1.msra.mxu0 0.0
    %4884 = vmatprep.subr.mxu0 0.0
    %4885 = vmatpush1.msra.mxu0 0.0
    %4886 = vmatprep.subr.mxu0 0.0
    %4887 = vmatpush1.msra.mxu0 0.0
    %4888 = vmatprep.subr.mxu0 0.0
    %4889 = vmatpush1.msra.mxu0 0.0
    %4890 = vmatprep.subr.mxu0 0.0
    %4891 = vmatpush1.msra.mxu0 0.0
    %4892 = vmatprep.subr.mxu0 0.0
    %4893 = vmatpush1.msra.mxu0 0.0
    %4894 = vmatprep.subr.mxu0 0.0
    %4895 = vmatpush1.msra.mxu0 0.0
    %4896 = vmatprep.subr.mxu0 0.0
    %4897 = vmatpush1.msra.mxu0 0.0
    %4898 = vmatprep.subr.mxu0 0.0
    %4899 = vmatpush1.msra.mxu0 0.0
    %4900 = vmatprep.subr.mxu0 0.0
    %4901 = vmatpush1.msra.mxu0 0.0
    %4902 = vmatprep.subr.mxu0 0.0
    %4903 = vmatpush1.msra.mxu0 0.0
    %4904 = vmatprep.mubr.f32.mxu0 0.0
    %v4905 = vand.u32 %v4538, 4294901760
    %4906 = vmatmul.mubr.f32.gmra.mrb[0].mxu0 %v4905
    %v4907 = vpop.f32.mrb[0].mxu0
    %v4908 = vadd.f32 %v4676, %v4907
    %v4909 = vpop.f32.mrb[0].mxu0
    %v4910 = vadd.f32 %v4678, %v4909
    %4911 = vdwg.mxu0
    %v4912 = vand.u32 %v4541, 4294901760
    %v4913 = vsub.f32 %v4541, %v4912
    %4914 = vmatprep.subr.mxu0 %v4913
    %v4915 = vand.u32 %v4540, 4294901760
    %v4916 = vsub.f32 %v4540, %v4915
    %4917 = vmatpush1.msra.mxu0 %v4916
    %v4918 = vand.u32 %v4543, 4294901760
    %v4919 = vsub.f32 %v4543, %v4918
    %4920 = vmatprep.subr.mxu0 %v4919
    %v4921 = vand.u32 %v4542, 4294901760
    %v4922 = vsub.f32 %v4542, %v4921
    %4923 = vmatpush1.msra.mxu0 %v4922
    %v4924 = vand.u32 %v4545, 4294901760
    %v4925 = vsub.f32 %v4545, %v4924
    %4926 = vmatprep.subr.mxu0 %v4925
    %v4927 = vand.u32 %v4544, 4294901760
    %v4928 = vsub.f32 %v4544, %v4927
    %4929 = vmatpush1.msra.mxu0 %v4928
    %v4930 = vand.u32 %v4547, 4294901760
    %v4931 = vsub.f32 %v4547, %v4930
    %4932 = vmatprep.subr.mxu0 %v4931
    %v4933 = vand.u32 %v4546, 4294901760
    %v4934 = vsub.f32 %v4546, %v4933
    %4935 = vmatpush1.msra.mxu0 %v4934
    %v4936 = vand.u32 %v4549, 4294901760
    %v4937 = vsub.f32 %v4549, %v4936
    %4938 = vmatprep.subr.mxu0 %v4937
    %v4939 = vand.u32 %v4548, 4294901760
    %v4940 = vsub.f32 %v4548, %v4939
    %4941 = vmatpush1.msra.mxu0 %v4940
    %v4942 = vand.u32 %v4551, 4294901760
    %v4943 = vsub.f32 %v4551, %v4942
    %4944 = vmatprep.subr.mxu0 %v4943
    %v4945 = vand.u32 %v4550, 4294901760
    %v4946 = vsub.f32 %v4550, %v4945
    %4947 = vmatpush1.msra.mxu0 %v4946
    %v4948 = vand.u32 %v4553, 4294901760
    %v4949 = vsub.f32 %v4553, %v4948
    %4950 = vmatprep.subr.mxu0 %v4949
    %v4951 = vand.u32 %v4552, 4294901760
    %v4952 = vsub.f32 %v4552, %v4951
    %4953 = vmatpush1.msra.mxu0 %v4952
    %v4954 = vand.u32 %v4555, 4294901760
    %v4955 = vsub.f32 %v4555, %v4954
    %4956 = vmatprep.subr.mxu0 %v4955
    %v4957 = vand.u32 %v4554, 4294901760
    %v4958 = vsub.f32 %v4554, %v4957
    %4959 = vmatpush1.msra.mxu0 %v4958
    %v4960 = vand.u32 %v4557, 4294901760
    %v4961 = vsub.f32 %v4557, %v4960
    %4962 = vmatprep.subr.mxu0 %v4961
    %v4963 = vand.u32 %v4556, 4294901760
    %v4964 = vsub.f32 %v4556, %v4963
    %4965 = vmatpush1.msra.mxu0 %v4964
    %v4966 = vand.u32 %v4559, 4294901760
    %v4967 = vsub.f32 %v4559, %v4966
    %4968 = vmatprep.subr.mxu0 %v4967
    %v4969 = vand.u32 %v4558, 4294901760
    %v4970 = vsub.f32 %v4558, %v4969
    %4971 = vmatpush1.msra.mxu0 %v4970
    %v4972 = vand.u32 %v4561, 4294901760
    %v4973 = vsub.f32 %v4561, %v4972
    %4974 = vmatprep.subr.mxu0 %v4973
    %v4975 = vand.u32 %v4560, 4294901760
    %v4976 = vsub.f32 %v4560, %v4975
    %4977 = vmatpush1.msra.mxu0 %v4976
    %v4978 = vand.u32 %v4563, 4294901760
    %v4979 = vsub.f32 %v4563, %v4978
    %4980 = vmatprep.subr.mxu0 %v4979
    %v4981 = vand.u32 %v4562, 4294901760
    %v4982 = vsub.f32 %v4562, %v4981
    %4983 = vmatpush1.msra.mxu0 %v4982
    %v4984 = vand.u32 %v4565, 4294901760
    %v4985 = vsub.f32 %v4565, %v4984
    %4986 = vmatprep.subr.mxu0 %v4985
    %v4987 = vand.u32 %v4564, 4294901760
    %v4988 = vsub.f32 %v4564, %v4987
    %4989 = vmatpush1.msra.mxu0 %v4988
    %v4990 = vand.u32 %v4567, 4294901760
    %v4991 = vsub.f32 %v4567, %v4990
    %4992 = vmatprep.subr.mxu0 %v4991
    %v4993 = vand.u32 %v4566, 4294901760
    %v4994 = vsub.f32 %v4566, %v4993
    %4995 = vmatpush1.msra.mxu0 %v4994
    %v4996 = vand.u32 %v4569, 4294901760
    %v4997 = vsub.f32 %v4569, %v4996
    %4998 = vmatprep.subr.mxu0 %v4997
    %v4999 = vand.u32 %v4568, 4294901760
    %v5000 = vsub.f32 %v4568, %v4999
    %5001 = vmatpush1.msra.mxu0 %v5000
    %v5002 = vand.u32 %v4571, 4294901760
    %v5003 = vsub.f32 %v4571, %v5002
    %5004 = vmatprep.subr.mxu0 %v5003
    %v5005 = vand.u32 %v4570, 4294901760
    %v5006 = vsub.f32 %v4570, %v5005
    %5007 = vmatpush1.msra.mxu0 %v5006
    %5008 = vmatprep.subr.mxu0 0.0
    %5009 = vmatpush1.msra.mxu0 0.0
    %5010 = vmatprep.subr.mxu0 0.0
    %5011 = vmatpush1.msra.mxu0 0.0
    %5012 = vmatprep.subr.mxu0 0.0
    %5013 = vmatpush1.msra.mxu0 0.0
    %5014 = vmatprep.subr.mxu0 0.0
    %5015 = vmatpush1.msra.mxu0 0.0
    %5016 = vmatprep.subr.mxu0 0.0
    %5017 = vmatpush1.msra.mxu0 0.0
    %5018 = vmatprep.subr.mxu0 0.0
    %5019 = vmatpush1.msra.mxu0 0.0
    %5020 = vmatprep.subr.mxu0 0.0
    %5021 = vmatpush1.msra.mxu0 0.0
    %5022 = vmatprep.subr.mxu0 0.0
    %5023 = vmatpush1.msra.mxu0 0.0
    %5024 = vmatprep.subr.mxu0 0.0
    %5025 = vmatpush1.msra.mxu0 0.0
    %5026 = vmatprep.subr.mxu0 0.0
    %5027 = vmatpush1.msra.mxu0 0.0
    %5028 = vmatprep.subr.mxu0 0.0
    %5029 = vmatpush1.msra.mxu0 0.0
    %5030 = vmatprep.subr.mxu0 0.0
    %5031 = vmatpush1.msra.mxu0 0.0
    %5032 = vmatprep.subr.mxu0 0.0
    %5033 = vmatpush1.msra.mxu0 0.0
    %5034 = vmatprep.subr.mxu0 0.0
    %5035 = vmatpush1.msra.mxu0 0.0
    %5036 = vmatprep.subr.mxu0 0.0
    %5037 = vmatpush1.msra.mxu0 0.0
    %5038 = vmatprep.subr.mxu0 0.0
    %5039 = vmatpush1.msra.mxu0 0.0
    %5040 = vmatprep.mubr.f32.mxu0 0.0
    %v5041 = vand.u32 %v4538, 4294901760
    %v5042 = vsub.f32 %v4538, %v5041
    %5043 = vmatmul.mubr.f32.gmra.mrb[0].mxu0 %v5042
    %v5044 = vpop.f32.mrb[0].mxu0
    %v5045 = vadd.f32 %v4908, %v5044
    %v5046 = vpop.f32.mrb[0].mxu0
    %v5047 = vadd.f32 %v4910, %v5046
    %5048 = vdwg.mxu0
    %v5049 = vand.u32 %v4541, 4294901760
    %5050 = vmatprep.subr.mxu0 %v5049
    %v5051 = vand.u32 %v4540, 4294901760
    %5052 = vmatpush1.msra.mxu0 %v5051
    %v5053 = vand.u32 %v4543, 4294901760
    %5054 = vmatprep.subr.mxu0 %v5053
    %v5055 = vand.u32 %v4542, 4294901760
    %5056 = vmatpush1.msra.mxu0 %v5055
    %v5057 = vand.u32 %v4545, 4294901760
    %5058 = vmatprep.subr.mxu0 %v5057
    %v5059 = vand.u32 %v4544, 4294901760
    %5060 = vmatpush1.msra.mxu0 %v5059
    %v5061 = vand.u32 %v4547, 4294901760
    %5062 = vmatprep.subr.mxu0 %v5061
    %v5063 = vand.u32 %v4546, 4294901760
    %5064 = vmatpush1.msra.mxu0 %v5063
    %v5065 = vand.u32 %v4549, 4294901760
    %5066 = vmatprep.subr.mxu0 %v5065
    %v5067 = vand.u32 %v4548, 4294901760
    %5068 = vmatpush1.msra.mxu0 %v5067
    %v5069 = vand.u32 %v4551, 4294901760
    %5070 = vmatprep.subr.mxu0 %v5069
    %v5071 = vand.u32 %v4550, 4294901760
    %5072 = vmatpush1.msra.mxu0 %v5071
    %v5073 = vand.u32 %v4553, 4294901760
    %5074 = vmatprep.subr.mxu0 %v5073
    %v5075 = vand.u32 %v4552, 4294901760
    %5076 = vmatpush1.msra.mxu0 %v5075
    %v5077 = vand.u32 %v4555, 4294901760
    %5078 = vmatprep.subr.mxu0 %v5077
    %v5079 = vand.u32 %v4554, 4294901760
    %5080 = vmatpush1.msra.mxu0 %v5079
    %v5081 = vand.u32 %v4557, 4294901760
    %5082 = vmatprep.subr.mxu0 %v5081
    %v5083 = vand.u32 %v4556, 4294901760
    %5084 = vmatpush1.msra.mxu0 %v5083
    %v5085 = vand.u32 %v4559, 4294901760
    %5086 = vmatprep.subr.mxu0 %v5085
    %v5087 = vand.u32 %v4558, 4294901760
    %5088 = vmatpush1.msra.mxu0 %v5087
    %v5089 = vand.u32 %v4561, 4294901760
    %5090 = vmatprep.subr.mxu0 %v5089
    %v5091 = vand.u32 %v4560, 4294901760
    %5092 = vmatpush1.msra.mxu0 %v5091
    %v5093 = vand.u32 %v4563, 4294901760
    %5094 = vmatprep.subr.mxu0 %v5093
    %v5095 = vand.u32 %v4562, 4294901760
    %5096 = vmatpush1.msra.mxu0 %v5095
    %v5097 = vand.u32 %v4565, 4294901760
    %5098 = vmatprep.subr.mxu0 %v5097
    %v5099 = vand.u32 %v4564, 4294901760
    %5100 = vmatpush1.msra.mxu0 %v5099
    %v5101 = vand.u32 %v4567, 4294901760
    %5102 = vmatprep.subr.mxu0 %v5101
    %v5103 = vand.u32 %v4566, 4294901760
    %5104 = vmatpush1.msra.mxu0 %v5103
    %v5105 = vand.u32 %v4569, 4294901760
    %5106 = vmatprep.subr.mxu0 %v5105
    %v5107 = vand.u32 %v4568, 4294901760
    %5108 = vmatpush1.msra.mxu0 %v5107
    %v5109 = vand.u32 %v4571, 4294901760
    %5110 = vmatprep.subr.mxu0 %v5109
    %v5111 = vand.u32 %v4570, 4294901760
    %5112 = vmatpush1.msra.mxu0 %v5111
    %5113 = vmatprep.subr.mxu0 0.0
    %5114 = vmatpush1.msra.mxu0 0.0
    %5115 = vmatprep.subr.mxu0 0.0
    %5116 = vmatpush1.msra.mxu0 0.0
    %5117 = vmatprep.subr.mxu0 0.0
    %5118 = vmatpush1.msra.mxu0 0.0
    %5119 = vmatprep.subr.mxu0 0.0
    %5120 = vmatpush1.msra.mxu0 0.0
    %5121 = vmatprep.subr.mxu0 0.0
    %5122 = vmatpush1.msra.mxu0 0.0
    %5123 = vmatprep.subr.mxu0 0.0
    %5124 = vmatpush1.msra.mxu0 0.0
    %5125 = vmatprep.subr.mxu0 0.0
    %5126 = vmatpush1.msra.mxu0 0.0
    %5127 = vmatprep.subr.mxu0 0.0
    %5128 = vmatpush1.msra.mxu0 0.0
    %5129 = vmatprep.subr.mxu0 0.0
    %5130 = vmatpush1.msra.mxu0 0.0
    %5131 = vmatprep.subr.mxu0 0.0
    %5132 = vmatpush1.msra.mxu0 0.0
    %5133 = vmatprep.subr.mxu0 0.0
    %5134 = vmatpush1.msra.mxu0 0.0
    %5135 = vmatprep.subr.mxu0 0.0
    %5136 = vmatpush1.msra.mxu0 0.0
    %5137 = vmatprep.subr.mxu0 0.0
    %5138 = vmatpush1.msra.mxu0 0.0
    %5139 = vmatprep.subr.mxu0 0.0
    %5140 = vmatpush1.msra.mxu0 0.0
    %5141 = vmatprep.subr.mxu0 0.0
    %5142 = vmatpush1.msra.mxu0 0.0
    %5143 = vmatprep.subr.mxu0 0.0
    %5144 = vmatpush1.msra.mxu0 0.0
    %5145 = vmatprep.mubr.f32.mxu0 0.0
    %v5146 = vand.u32 %v4538, 4294901760
    %v5147 = vsub.f32 %v4538, %v5146
    %v5148 = vand.u32 %v5147, 4294901760
    %5149 = vmatmul.mubr.f32.gmra.mrb[0].mxu0 %v5148
    %v5150 = vpop.f32.mrb[0].mxu0
    %v5151 = vadd.f32 %v5045, %v5150
    %v5152 = vpop.f32.mrb[0].mxu0
    %v5153 = vadd.f32 %v5047, %v5152
    %5154 = vdwg.mxu0
    %v5155 = vand.u32 %v4541, 4294901760
    %v5156 = vsub.f32 %v4541, %v5155
    %v5157 = vand.u32 %v5156, 4294901760
    %5158 = vmatprep.subr.mxu0 %v5157
    %v5159 = vand.u32 %v4540, 4294901760
    %v5160 = vsub.f32 %v4540, %v5159
    %v5161 = vand.u32 %v5160, 4294901760
    %5162 = vmatpush1.msra.mxu0 %v5161
    %v5163 = vand.u32 %v4543, 4294901760
    %v5164 = vsub.f32 %v4543, %v5163
    %v5165 = vand.u32 %v5164, 4294901760
    %5166 = vmatprep.subr.mxu0 %v5165
    %v5167 = vand.u32 %v4542, 4294901760
    %v5168 = vsub.f32 %v4542, %v5167
    %v5169 = vand.u32 %v5168, 4294901760
    %5170 = vmatpush1.msra.mxu0 %v5169
    %v5171 = vand.u32 %v4545, 4294901760
    %v5172 = vsub.f32 %v4545, %v5171
    %v5173 = vand.u32 %v5172, 4294901760
    %5174 = vmatprep.subr.mxu0 %v5173
    %v5175 = vand.u32 %v4544, 4294901760
    %v5176 = vsub.f32 %v4544, %v5175
    %v5177 = vand.u32 %v5176, 4294901760
    %5178 = vmatpush1.msra.mxu0 %v5177
    %v5179 = vand.u32 %v4547, 4294901760
    %v5180 = vsub.f32 %v4547, %v5179
    %v5181 = vand.u32 %v5180, 4294901760
    %5182 = vmatprep.subr.mxu0 %v5181
    %v5183 = vand.u32 %v4546, 4294901760
    %v5184 = vsub.f32 %v4546, %v5183
    %v5185 = vand.u32 %v5184, 4294901760
    %5186 = vmatpush1.msra.mxu0 %v5185
    %v5187 = vand.u32 %v4549, 4294901760
    %v5188 = vsub.f32 %v4549, %v5187
    %v5189 = vand.u32 %v5188, 4294901760
    %5190 = vmatprep.subr.mxu0 %v5189
    %v5191 = vand.u32 %v4548, 4294901760
    %v5192 = vsub.f32 %v4548, %v5191
    %v5193 = vand.u32 %v5192, 4294901760
    %5194 = vmatpush1.msra.mxu0 %v5193
    %v5195 = vand.u32 %v4551, 4294901760
    %v5196 = vsub.f32 %v4551, %v5195
    %v5197 = vand.u32 %v5196, 4294901760
    %5198 = vmatprep.subr.mxu0 %v5197
    %v5199 = vand.u32 %v4550, 4294901760
    %v5200 = vsub.f32 %v4550, %v5199
    %v5201 = vand.u32 %v5200, 4294901760
    %5202 = vmatpush1.msra.mxu0 %v5201
    %v5203 = vand.u32 %v4553, 4294901760
    %v5204 = vsub.f32 %v4553, %v5203
    %v5205 = vand.u32 %v5204, 4294901760
    %5206 = vmatprep.subr.mxu0 %v5205
    %v5207 = vand.u32 %v4552, 4294901760
    %v5208 = vsub.f32 %v4552, %v5207
    %v5209 = vand.u32 %v5208, 4294901760
    %5210 = vmatpush1.msra.mxu0 %v5209
    %v5211 = vand.u32 %v4555, 4294901760
    %v5212 = vsub.f32 %v4555, %v5211
    %v5213 = vand.u32 %v5212, 4294901760
    %5214 = vmatprep.subr.mxu0 %v5213
    %v5215 = vand.u32 %v4554, 4294901760
    %v5216 = vsub.f32 %v4554, %v5215
    %v5217 = vand.u32 %v5216, 4294901760
    %5218 = vmatpush1.msra.mxu0 %v5217
    %v5219 = vand.u32 %v4557, 4294901760
    %v5220 = vsub.f32 %v4557, %v5219
    %v5221 = vand.u32 %v5220, 4294901760
    %5222 = vmatprep.subr.mxu0 %v5221
    %v5223 = vand.u32 %v4556, 4294901760
    %v5224 = vsub.f32 %v4556, %v5223
    %v5225 = vand.u32 %v5224, 4294901760
    %5226 = vmatpush1.msra.mxu0 %v5225
    %v5227 = vand.u32 %v4559, 4294901760
    %v5228 = vsub.f32 %v4559, %v5227
    %v5229 = vand.u32 %v5228, 4294901760
    %5230 = vmatprep.subr.mxu0 %v5229
    %v5231 = vand.u32 %v4558, 4294901760
    %v5232 = vsub.f32 %v4558, %v5231
    %v5233 = vand.u32 %v5232, 4294901760
    %5234 = vmatpush1.msra.mxu0 %v5233
    %v5235 = vand.u32 %v4561, 4294901760
    %v5236 = vsub.f32 %v4561, %v5235
    %v5237 = vand.u32 %v5236, 4294901760
    %5238 = vmatprep.subr.mxu0 %v5237
    %v5239 = vand.u32 %v4560, 4294901760
    %v5240 = vsub.f32 %v4560, %v5239
    %v5241 = vand.u32 %v5240, 4294901760
    %5242 = vmatpush1.msra.mxu0 %v5241
    %v5243 = vand.u32 %v4563, 4294901760
    %v5244 = vsub.f32 %v4563, %v5243
    %v5245 = vand.u32 %v5244, 4294901760
    %5246 = vmatprep.subr.mxu0 %v5245
    %v5247 = vand.u32 %v4562, 4294901760
    %v5248 = vsub.f32 %v4562, %v5247
    %v5249 = vand.u32 %v5248, 4294901760
    %5250 = vmatpush1.msra.mxu0 %v5249
    %v5251 = vand.u32 %v4565, 4294901760
    %v5252 = vsub.f32 %v4565, %v5251
    %v5253 = vand.u32 %v5252, 4294901760
    %5254 = vmatprep.subr.mxu0 %v5253
    %v5255 = vand.u32 %v4564, 4294901760
    %v5256 = vsub.f32 %v4564, %v5255
    %v5257 = vand.u32 %v5256, 4294901760
    %5258 = vmatpush1.msra.mxu0 %v5257
    %v5259 = vand.u32 %v4567, 4294901760
    %v5260 = vsub.f32 %v4567, %v5259
    %v5261 = vand.u32 %v5260, 4294901760
    %5262 = vmatprep.subr.mxu0 %v5261
    %v5263 = vand.u32 %v4566, 4294901760
    %v5264 = vsub.f32 %v4566, %v5263
    %v5265 = vand.u32 %v5264, 4294901760
    %5266 = vmatpush1.msra.mxu0 %v5265
    %v5267 = vand.u32 %v4569, 4294901760
    %v5268 = vsub.f32 %v4569, %v5267
    %v5269 = vand.u32 %v5268, 4294901760
    %5270 = vmatprep.subr.mxu0 %v5269
    %v5271 = vand.u32 %v4568, 4294901760
    %v5272 = vsub.f32 %v4568, %v5271
    %v5273 = vand.u32 %v5272, 4294901760
    %5274 = vmatpush1.msra.mxu0 %v5273
    %v5275 = vand.u32 %v4571, 4294901760
    %v5276 = vsub.f32 %v4571, %v5275
    %v5277 = vand.u32 %v5276, 4294901760
    %5278 = vmatprep.subr.mxu0 %v5277
    %v5279 = vand.u32 %v4570, 4294901760
    %v5280 = vsub.f32 %v4570, %v5279
    %v5281 = vand.u32 %v5280, 4294901760
    %5282 = vmatpush1.msra.mxu0 %v5281
    %5283 = vmatprep.subr.mxu0 0.0
    %5284 = vmatpush1.msra.mxu0 0.0
    %5285 = vmatprep.subr.mxu0 0.0
    %5286 = vmatpush1.msra.mxu0 0.0
    %5287 = vmatprep.subr.mxu0 0.0
    %5288 = vmatpush1.msra.mxu0 0.0
    %5289 = vmatprep.subr.mxu0 0.0
    %5290 = vmatpush1.msra.mxu0 0.0
    %5291 = vmatprep.subr.mxu0 0.0
    %5292 = vmatpush1.msra.mxu0 0.0
    %5293 = vmatprep.subr.mxu0 0.0
    %5294 = vmatpush1.msra.mxu0 0.0
    %5295 = vmatprep.subr.mxu0 0.0
    %5296 = vmatpush1.msra.mxu0 0.0
    %5297 = vmatprep.subr.mxu0 0.0
    %5298 = vmatpush1.msra.mxu0 0.0
    %5299 = vmatprep.subr.mxu0 0.0
    %5300 = vmatpush1.msra.mxu0 0.0
    %5301 = vmatprep.subr.mxu0 0.0
    %5302 = vmatpush1.msra.mxu0 0.0
    %5303 = vmatprep.subr.mxu0 0.0
    %5304 = vmatpush1.msra.mxu0 0.0
    %5305 = vmatprep.subr.mxu0 0.0
    %5306 = vmatpush1.msra.mxu0 0.0
    %5307 = vmatprep.subr.mxu0 0.0
    %5308 = vmatpush1.msra.mxu0 0.0
    %5309 = vmatprep.subr.mxu0 0.0
    %5310 = vmatpush1.msra.mxu0 0.0
    %5311 = vmatprep.subr.mxu0 0.0
    %5312 = vmatpush1.msra.mxu0 0.0
    %5313 = vmatprep.subr.mxu0 0.0
    %5314 = vmatpush1.msra.mxu0 0.0
    %5315 = vmatprep.mubr.f32.mxu0 0.0
    %v5316 = vand.u32 %v4538, 4294901760
    %5317 = vmatmul.mubr.f32.gmra.mrb[0].mxu0 %v5316
    %v5318 = vpop.f32.mrb[0].mxu0
    %v5319 = vadd.f32 %v5151, %v5318
    %v5320 = vpop.f32.mrb[0].mxu0
    %v5321 = vadd.f32 %v5153, %v5320
    %5322 = vdwg.mxu0
    %v5323 = vand.u32 %v4541, 4294901760
    %5324 = vmatprep.subr.mxu0 %v5323
    %v5325 = vand.u32 %v4540, 4294901760
    %5326 = vmatpush1.msra.mxu0 %v5325
    %v5327 = vand.u32 %v4543, 4294901760
    %5328 = vmatprep.subr.mxu0 %v5327
    %v5329 = vand.u32 %v4542, 4294901760
    %5330 = vmatpush1.msra.mxu0 %v5329
    %v5331 = vand.u32 %v4545, 4294901760
    %5332 = vmatprep.subr.mxu0 %v5331
    %v5333 = vand.u32 %v4544, 4294901760
    %5334 = vmatpush1.msra.mxu0 %v5333
    %v5335 = vand.u32 %v4547, 4294901760
    %5336 = vmatprep.subr.mxu0 %v5335
    %v5337 = vand.u32 %v4546, 4294901760
    %5338 = vmatpush1.msra.mxu0 %v5337
    %v5339 = vand.u32 %v4549, 4294901760
    %5340 = vmatprep.subr.mxu0 %v5339
    %v5341 = vand.u32 %v4548, 4294901760
    %5342 = vmatpush1.msra.mxu0 %v5341
    %v5343 = vand.u32 %v4551, 4294901760
    %5344 = vmatprep.subr.mxu0 %v5343
    %v5345 = vand.u32 %v4550, 4294901760
    %5346 = vmatpush1.msra.mxu0 %v5345
    %v5347 = vand.u32 %v4553, 4294901760
    %5348 = vmatprep.subr.mxu0 %v5347
    %v5349 = vand.u32 %v4552, 4294901760
    %5350 = vmatpush1.msra.mxu0 %v5349
    %v5351 = vand.u32 %v4555, 4294901760
    %5352 = vmatprep.subr.mxu0 %v5351
    %v5353 = vand.u32 %v4554, 4294901760
    %5354 = vmatpush1.msra.mxu0 %v5353
    %v5355 = vand.u32 %v4557, 4294901760
    %5356 = vmatprep.subr.mxu0 %v5355
    %v5357 = vand.u32 %v4556, 4294901760
    %5358 = vmatpush1.msra.mxu0 %v5357
    %v5359 = vand.u32 %v4559, 4294901760
    %5360 = vmatprep.subr.mxu0 %v5359
    %v5361 = vand.u32 %v4558, 4294901760
    %5362 = vmatpush1.msra.mxu0 %v5361
    %v5363 = vand.u32 %v4561, 4294901760
    %5364 = vmatprep.subr.mxu0 %v5363
    %v5365 = vand.u32 %v4560, 4294901760
    %5366 = vmatpush1.msra.mxu0 %v5365
    %v5367 = vand.u32 %v4563, 4294901760
    %5368 = vmatprep.subr.mxu0 %v5367
    %v5369 = vand.u32 %v4562, 4294901760
    %5370 = vmatpush1.msra.mxu0 %v5369
    %v5371 = vand.u32 %v4565, 4294901760
    %5372 = vmatprep.subr.mxu0 %v5371
    %v5373 = vand.u32 %v4564, 4294901760
    %5374 = vmatpush1.msra.mxu0 %v5373
    %v5375 = vand.u32 %v4567, 4294901760
    %5376 = vmatprep.subr.mxu0 %v5375
    %v5377 = vand.u32 %v4566, 4294901760
    %5378 = vmatpush1.msra.mxu0 %v5377
    %v5379 = vand.u32 %v4569, 4294901760
    %5380 = vmatprep.subr.mxu0 %v5379
    %v5381 = vand.u32 %v4568, 4294901760
    %5382 = vmatpush1.msra.mxu0 %v5381
    %v5383 = vand.u32 %v4571, 4294901760
    %5384 = vmatprep.subr.mxu0 %v5383
    %v5385 = vand.u32 %v4570, 4294901760
    %5386 = vmatpush1.msra.mxu0 %v5385
    %5387 = vmatprep.subr.mxu0 0.0
    %5388 = vmatpush1.msra.mxu0 0.0
    %5389 = vmatprep.subr.mxu0 0.0
    %5390 = vmatpush1.msra.mxu0 0.0
    %5391 = vmatprep.subr.mxu0 0.0
    %5392 = vmatpush1.msra.mxu0 0.0
    %5393 = vmatprep.subr.mxu0 0.0
    %5394 = vmatpush1.msra.mxu0 0.0
    %5395 = vmatprep.subr.mxu0 0.0
    %5396 = vmatpush1.msra.mxu0 0.0
    %5397 = vmatprep.subr.mxu0 0.0
    %5398 = vmatpush1.msra.mxu0 0.0
    %5399 = vmatprep.subr.mxu0 0.0
    %5400 = vmatpush1.msra.mxu0 0.0
    %5401 = vmatprep.subr.mxu0 0.0
    %5402 = vmatpush1.msra.mxu0 0.0
    %5403 = vmatprep.subr.mxu0 0.0
    %5404 = vmatpush1.msra.mxu0 0.0
    %5405 = vmatprep.subr.mxu0 0.0
    %5406 = vmatpush1.msra.mxu0 0.0
    %5407 = vmatprep.subr.mxu0 0.0
    %5408 = vmatpush1.msra.mxu0 0.0
    %5409 = vmatprep.subr.mxu0 0.0
    %5410 = vmatpush1.msra.mxu0 0.0
    %5411 = vmatprep.subr.mxu0 0.0
    %5412 = vmatpush1.msra.mxu0 0.0
    %5413 = vmatprep.subr.mxu0 0.0
    %5414 = vmatpush1.msra.mxu0 0.0
    %5415 = vmatprep.subr.mxu0 0.0
    %5416 = vmatpush1.msra.mxu0 0.0
    %5417 = vmatprep.subr.mxu0 0.0
    %5418 = vmatpush1.msra.mxu0 0.0
    %5419 = vmatprep.mubr.f32.mxu0 0.0
    %v5420 = vand.u32 %v4538, 4294901760
    %5421 = vmatmul.mubr.f32.gmra.mrb[0].mxu0 %v5420
    %v5422 = vpop.f32.mrb[0].mxu0
    %v5423 = vadd.f32 %v5319, %v5422
    %v5424 = vpop.f32.mrb[0].mxu0
    %v5425 = vadd.f32 %v5321, %v5424
    %5426 = vdwg.mxu0
    %v5427 = vtanh.pop %v5425
    %v5428 = vxor.u32 %v5423, 2147483648
    %v5429 = vmul.f32 %v5428, 1.442695
    %v5430 = vpow.pop %v5429
    %v5431 = vadd.f32 %v5430, 1.0
    %v5432 = vrcp.pop %v5431
    %v5433 = vmul.f32 1.0, %v5432
    %v5434 = vmul.f32 %v5433, %v4538
    %v5435 = vadd.f32 %v5427, %v5434
    %v5436 = vld [vmem:[%s5] sm:$0x1]
    %v5437 = vxor.u32 %v5436, 2147483648
    %v5438 = vmul.f32 %v5437, 1.442695
    %v5439 = vpow.pop %v5438
    %v5440 = vadd.f32 %v5439, 1.0
    %v5441 = vrcp.pop %v5440
    %v5442 = vmul.f32 1.0, %v5441
    %v5444 = vlaneseq
    %v5445 = vshrl.u32 %v5444, 7
    %v5446 = vsub.s32 0, %v5445
    %v5447 = vrot.slane %v5442, %v5446
    %v5449 = vmul.f32 %v5447, %v5435
    %v5450 = vsub.f32 1.0, %v5442
    %v5452 = vlaneseq
    %v5453 = vshrl.u32 %v5452, 7
    %v5454 = vsub.s32 0, %v5453
    %v5455 = vrot.slane %v5450, %v5454
    %v5457 = vmul.f32 %v5455, %v51
    %v5458 = vadd.f32 %v5449, %v5457
    %5459 = vst [vmem:[%s6] sm:$0xf] %v5458
    // Predicated region
    $region34: #{face_transfer_forward.1} parent=1 // pred_check
      _
    $region35: #{face_transfer_forward.1} parent=1 // pred_check_branch
      %5461 = sbr.rel (0) target = $region37
    $region36: #{face_transfer_forward.1} parent=1 // pred_region
      _
    $region37: #{face_transfer_forward.1} parent=1 // pred_fallthru
      _
    // Predicated region
    $region38: #{face_transfer_forward.1} parent=1 // pred_check
      _
    $region39: #{face_transfer_forward.1} parent=1 // pred_check_branch
      %5463 = sbr.rel (0) target = $region41
    $region40: #{face_transfer_forward.1} parent=1 // pred_region
      _
    $region41: #{face_transfer_forward.1} parent=1 // pred_fallthru
      _
    %5464 = vsyncpa [#allocation3], 1
    %5465 = vsyncpa [#allocation5], 1

</llo_original>
